<compile_context>
chip_gen: v6e
topology: v6e:2x2x1
jax: 0.10.0
libtpu: 0.0.40
codegen_flags: <defaults>
</compile_context>

<pallas_src>
import functools
import math

import numpy as np
import jax
import jax.numpy as jnp
from jax.experimental import pallas as pl
from jax.experimental.pallas import tpu as pltpu


# ----------------------------------------------------------------------------
# Fused Pallas kernel: backbone -> encoder -> heads -> sigmoid -> apply_deltas
# ----------------------------------------------------------------------------
def _yolof_fused_kernel(patch_ref, ctr_ref, bbw_ref, bbb_ref, encw_ref,
                        encb_ref, headw_ref, headb_ref, consts_ref,
                        logits_ref, scores_ref, deltas_ref, boxes_ref,
                        *, num_anchors, num_classes, scale_clamp,
                        add_ctr_clamp, ctr_clamp):
    ak = num_anchors * num_classes
    a4 = num_anchors * 4

    # backbone 3x3 conv (im2col patches) + bias + ReLU  -- normalization is
    # already folded into bbw/bbb.
    feat = jnp.dot(patch_ref[...], bbw_ref[...],
                   preferred_element_type=jnp.float32)
    feat = jnp.maximum(feat + bbb_ref[...], 0.0)

    # encoder 1x1 conv + bias + ReLU (stays in VMEM / registers)
    enc = jnp.dot(feat.astype(jnp.bfloat16), encw_ref[...],
                  preferred_element_type=jnp.float32)
    enc = jnp.maximum(enc + encb_ref[...], 0.0)

    # merged decoder heads: columns = [cls (A*K) | reg (A*4)]
    head = jnp.dot(enc.astype(jnp.bfloat16), headw_ref[...],
                   preferred_element_type=jnp.float32)
    head = head + headb_ref[...]
    logits = head[:, :ak]
    reg = head[:, ak:ak + a4]

    logits_ref[...] = logits
    scores_ref[...] = jax.nn.sigmoid(logits)        # EUP, essentially free
    deltas_ref[...] = reg

    # ---- Box2BoxTransform.apply_deltas, fused epilogue --------------------
    # per-column constants (columns ordered anchor-major: a0:[dx,dy,dw,dh],...)
    size_v = consts_ref[0:1, :]   # anchor size (square anchors: w == h)
    inv_w = consts_ref[1:2, :]    # 1/wx, 1/wy, 1/ww, 1/wh
    sign_v = consts_ref[2:3, :]   # -0.5 for (x1,y1) columns, +0.5 for (x2,y2)
    is_xy = consts_ref[3:4, :]    # 1.0 where the column carries dx/dy
    is_x = consts_ref[4:5, :]     # 1.0 where the column is an x coordinate

    d = reg * inv_w               # weighted deltas
    # lane shifts by +/-2 bring each anchor's (dw,dh) under its (dx,dy)
    # columns and vice versa; wrapped lanes are masked out by the blends.
    d_p2 = jnp.concatenate([d[:, -2:], d[:, :-2]], axis=1)   # col c <- d[c-2]
    d_m2 = jnp.concatenate([d[:, 2:], d[:, :2]], axis=1)     # col c <- d[c+2]
    dxy = is_xy * d + (1.0 - is_xy) * d_p2    # every column: its anchor dx/dy
    dwh = is_xy * d_m2 + (1.0 - is_xy) * d    # every column: its anchor dw/dh

    ctr_x = ctr_ref[:, 0:1]
    ctr_y = ctr_ref[:, 1:2]
    ctr_full = is_x * ctr_x + (1.0 - is_x) * ctr_y

    move = dxy * size_v
    if add_ctr_clamp:
        move = jnp.clip(move, -ctr_clamp, ctr_clamp)
    pred_ctr = ctr_full + move
    pred_sz = jnp.exp(jnp.minimum(dwh, scale_clamp)) * size_v
    boxes_ref[...] = pred_ctr + sign_v * pred_sz


# ----------------------------------------------------------------------------
# Wrapper
# ----------------------------------------------------------------------------
def yolof_forward(params, images_nchw, *, num_anchors=4, num_classes=8,
                  anchor_sizes=(2.0, 4.0, 8.0, 16.0), stride=1.0,
                  bbox_reg_weights=(1.0, 1.0, 1.0, 1.0),
                  scale_clamp=math.log(1000.0 / 16.0),
                  add_ctr_clamp=True, ctr_clamp=32.0, tm=512):
    x = jnp.transpose(images_nchw, (0, 2, 3, 1)).astype(jnp.float32)  # NHWC
    N, H, W, C = x.shape
    M = N * H * W
    ak = num_anchors * num_classes
    a4 = num_anchors * 4

    mean = params["pixel_mean"].astype(jnp.float32)
    std = params["pixel_std"].astype(jnp.float32)
    feat_ch = params["bb_w"].shape[-1]

    # ---- fold (x - mean) / std into the backbone conv weights + bias ------
    bb_w = params["bb_w"].reshape(9, C, feat_ch)
    bb_w_fold = bb_w / std.reshape(1, C, 1)
    bb_b_fold = params["bb_b"] - jnp.einsum("tcf,c->f", bb_w_fold, mean)
    # conv zero-pads the *normalized* image <=> pad the raw image with mean
    xp = jnp.pad(x - mean.reshape(1, 1, 1, C),
                 ((0, 0), (1, 1), (1, 1), (0, 0))) + mean.reshape(1, 1, 1, C)

    # ---- im2col (plain JAX glue) -------------------------------------------
    # TODO(synk): construct patches in VMEM from a haloed row tile instead.
    cols = []
    for dy in range(3):
        for dx in range(3):
            cols.append(xp[:, dy:dy + H, dx:dx + W, :])
    patches = jnp.concatenate(cols, axis=-1).reshape(M, 9 * C)

    k_pad = max(32, ((9 * C + 15) // 16) * 16)   # pad contraction 27 -> 32
    patches = jnp.pad(patches, ((0, 0), (0, k_pad - 9 * C))).astype(jnp.bfloat16)
    bb_w2 = jnp.pad(bb_w_fold.reshape(9 * C, feat_ch),
                    ((0, k_pad - 9 * C), (0, 0))).astype(jnp.bfloat16)
    bb_b2 = bb_b_fold.reshape(1, feat_ch).astype(jnp.float32)

    enc_w = params["enc_w"].astype(jnp.bfloat16)
    enc_b = params["enc_b"].reshape(1, feat_ch).astype(jnp.float32)

    head_w = jnp.concatenate([params["cls_w"], params["reg_w"]],
                             axis=1).astype(jnp.bfloat16)          # (F, AK+A4)
    head_b = jnp.concatenate([params["cls_b"], params["reg_b"]]
                             ).reshape(1, ak + a4).astype(jnp.float32)

    # ---- anchor centers (replaces the dense anchors array) ----------------
    ys = (jnp.arange(H, dtype=jnp.float32) + 0.5) * stride
    xs = (jnp.arange(W, dtype=jnp.float32) + 0.5) * stride
    cy, cx = jnp.meshgrid(ys, xs, indexing="ij")
    ctr = jnp.stack([cx, cy], axis=-1).reshape(1, H * W, 2)
    ctr = jnp.broadcast_to(ctr, (N, H * W, 2)).reshape(M, 2)

    # ---- per-column box-transform constants --------------------------------
    comp = np.arange(a4) % 4
    grp = np.arange(a4) // 4
    consts = np.zeros((8, a4), dtype=np.float32)
    consts[0] = np.asarray(anchor_sizes, dtype=np.float32)[grp]
    consts[1] = 1.0 / np.asarray(bbox_reg_weights, dtype=np.float32)[comp]
    consts[2] = np.where(comp < 2, -0.5, 0.5)
    consts[3] = (comp < 2).astype(np.float32)
    consts[4] = (comp % 2 == 0).astype(np.float32)
    consts = jnp.asarray(consts)

    # ---- pad rows to a multiple of the tile and launch ---------------------
    grid_m = pl.cdiv(M, tm)
    m_pad = grid_m * tm
    if m_pad != M:
        patches = jnp.pad(patches, ((0, m_pad - M), (0, 0)))
        ctr = jnp.pad(ctr, ((0, m_pad - M), (0, 0)))

    kernel = functools.partial(
        _yolof_fused_kernel, num_anchors=num_anchors, num_classes=num_classes,
        scale_clamp=scale_clamp, add_ctr_clamp=add_ctr_clamp,
        ctr_clamp=ctr_clamp)

    logits, scores, deltas, boxes = pl.pallas_call(
        kernel,
        grid=(grid_m,),
        in_specs=[
            pl.BlockSpec((tm, k_pad), lambda i: (i, 0)),            # patches
            pl.BlockSpec((tm, 2), lambda i: (i, 0)),                # centers
            pl.BlockSpec((k_pad, feat_ch), lambda i: (0, 0)),       # bb_w
            pl.BlockSpec((1, feat_ch), lambda i: (0, 0)),           # bb_b
            pl.BlockSpec((feat_ch, feat_ch), lambda i: (0, 0)),     # enc_w
            pl.BlockSpec((1, feat_ch), lambda i: (0, 0)),           # enc_b
            pl.BlockSpec((feat_ch, ak + a4), lambda i: (0, 0)),     # head_w
            pl.BlockSpec((1, ak + a4), lambda i: (0, 0)),           # head_b
            pl.BlockSpec((8, a4), lambda i: (0, 0)),                # box consts
        ],
        out_specs=(
            pl.BlockSpec((tm, ak), lambda i: (i, 0)),
            pl.BlockSpec((tm, ak), lambda i: (i, 0)),
            pl.BlockSpec((tm, a4), lambda i: (i, 0)),
            pl.BlockSpec((tm, a4), lambda i: (i, 0)),
        ),
        out_shape=(
            jax.ShapeDtypeStruct((m_pad, ak), jnp.float32),
            jax.ShapeDtypeStruct((m_pad, ak), jnp.float32),
            jax.ShapeDtypeStruct((m_pad, a4), jnp.float32),
            jax.ShapeDtypeStruct((m_pad, a4), jnp.float32),
        ),
        compiler_params=pltpu.CompilerParams(
            dimension_semantics=("parallel",)),
    )(patches, ctr, bb_w2, bb_b2, enc_w, enc_b, head_w, head_b, consts)

    hwa = H * W * num_anchors
    pred_logits = logits[:M].reshape(N, hwa, num_classes)
    scores = scores[:M].reshape(N, hwa, num_classes)
    pred_deltas = deltas[:M].reshape(N, hwa, 4)
    pred_boxes = boxes[:M].reshape(N, hwa, 4)
    return pred_logits, pred_deltas, pred_boxes, scores


# ----------------------------------------------------------------------------
# Pure-JAX reference (original, unfolded semantics) for a sanity check
# ----------------------------------------------------------------------------
def yolof_reference(params, images_nchw, *, num_anchors, num_classes,
                    anchor_sizes, stride, bbox_reg_weights, scale_clamp,
                    add_ctr_clamp, ctr_clamp):
    x = jnp.transpose(images_nchw, (0, 2, 3, 1)).astype(jnp.float32)
    N, H, W, C = x.shape
    mean = params["pixel_mean"].reshape(1, 1, 1, C)
    std = params["pixel_std"].reshape(1, 1, 1, C)
    xn = (x - mean) / std
    xp = jnp.pad(xn, ((0, 0), (1, 1), (1, 1), (0, 0)))
    cols = [xp[:, dy:dy + H, dx:dx + W, :] for dy in range(3) for dx in range(3)]
    patches = jnp.concatenate(cols, axis=-1).reshape(N * H * W, 9 * C)
    feat = jnp.maximum(patches @ params["bb_w"] + params["bb_b"], 0.0)
    enc = jnp.maximum(feat @ params["enc_w"] + params["enc_b"], 0.0)
    logits = enc @ params["cls_w"] + params["cls_b"]
    deltas = enc @ params["reg_w"] + params["reg_b"]
    scores = jax.nn.sigmoid(logits)

    ys = (jnp.arange(H, dtype=jnp.float32) + 0.5) * stride
    xs = (jnp.arange(W, dtype=jnp.float32) + 0.5) * stride
    cy, cx = jnp.meshgrid(ys, xs, indexing="ij")
    sizes = jnp.asarray(anchor_sizes, dtype=jnp.float32)
    half = sizes / 2.0
    cx = cx[:, :, None]
    cy = cy[:, :, None]
    anchors = jnp.stack([cx - half, cy - half, cx + half, cy + half],
                        axis=-1).reshape(-1, 4)
    all_anchors = jnp.tile(anchors, (N, 1))

    d = deltas.reshape(-1, 4)
    wx, wy, ww, wh = bbox_reg_weights
    widths = all_anchors[:, 2] - all_anchors[:, 0]
    heights = all_anchors[:, 3] - all_anchors[:, 1]
    ctr_x = all_anchors[:, 0] + 0.5 * widths
    ctr_y = all_anchors[:, 1] + 0.5 * heights
    dx = d[:, 0] / wx
    dy = d[:, 1] / wy
    dw = d[:, 2] / ww
    dh = d[:, 3] / wh
    dxw = dx * widths
    dyh = dy * heights
    if add_ctr_clamp:
        dxw = jnp.clip(dxw, -ctr_clamp, ctr_clamp)
        dyh = jnp.clip(dyh, -ctr_clamp, ctr_clamp)
    dw = jnp.minimum(dw, scale_clamp)
    dh = jnp.minimum(dh, scale_clamp)
    pcx = dxw + ctr_x
    pcy = dyh + ctr_y
    pw = jnp.exp(dw) * widths
    ph = jnp.exp(dh) * heights
    boxes = jnp.stack([pcx - 0.5 * pw, pcy - 0.5 * ph,
                       pcx + 0.5 * pw, pcy + 0.5 * ph], axis=-1)
    hwa = H * W * num_anchors
    return (logits.reshape(N, hwa, num_classes),
            deltas.reshape(N, hwa, 4),
            boxes.reshape(N, hwa, 4),
            scores.reshape(N, hwa, num_classes))


# ----------------------------------------------------------------------------
# Params
# ----------------------------------------------------------------------------
def init_params(key, in_ch=3, feat_ch=32, num_anchors=4, num_classes=8):
    keys = jax.random.split(key, 8)
    s = 0.1
    return {
        "pixel_mean": jnp.array([0.45, 0.45, 0.40], dtype=jnp.float32),
        "pixel_std": jnp.array([0.22, 0.22, 0.25], dtype=jnp.float32),
        "bb_w": s * jax.random.normal(keys[0], (9 * in_ch, feat_ch), jnp.float32),
        "bb_b": s * jax.random.normal(keys[1], (feat_ch,), jnp.float32),
        "enc_w": s * jax.random.normal(keys[2], (feat_ch, feat_ch), jnp.float32),
        "enc_b": s * jax.random.normal(keys[3], (feat_ch,), jnp.float32),
        "cls_w": s * jax.random.normal(keys[4], (feat_ch, num_anchors * num_classes), jnp.float32),
        "cls_b": s * jax.random.normal(keys[5], (num_anchors * num_classes,), jnp.float32),
        "reg_w": s * jax.random.normal(keys[6], (feat_ch, num_anchors * 4), jnp.float32),
        "reg_b": s * jax.random.normal(keys[7], (num_anchors * 4,), jnp.float32),
    }


if __name__ == "__main__":
    key = jax.random.PRNGKey(0)
    k_param, k_img = jax.random.split(key)

    N, C, H, W = 2, 3, 16, 16
    num_anchors, num_classes = 4, 8
    cfg = dict(num_anchors=num_anchors, num_classes=num_classes,
               anchor_sizes=(2.0, 4.0, 8.0, 16.0), stride=1.0,
               bbox_reg_weights=(1.0, 1.0, 1.0, 1.0),
               scale_clamp=math.log(1000.0 / 16.0),
               add_ctr_clamp=True, ctr_clamp=32.0)

    params = init_params(k_param, in_ch=C, feat_ch=32,
                         num_anchors=num_anchors, num_classes=num_classes)
    images = jax.random.uniform(k_img, (N, C, H, W), jnp.float32)

    fwd = jax.jit(functools.partial(yolof_forward, **cfg))
    outs = jax.block_until_ready(fwd(params, images))
    pred_logits, pred_deltas, boxes, scores = outs

    hwa = H * W * num_anchors
    assert pred_logits.shape == (N, hwa, num_classes)
    assert pred_deltas.shape == (N, hwa, 4)
    assert boxes.shape == (N, hwa, 4)
    assert scores.shape == (N, hwa, num_classes)
    assert all(bool(jnp.all(jnp.isfinite(o))) for o in outs)

    # loose check vs. the f32 pure-JAX reference (kernel uses bf16 matmul inputs)
    ref = yolof_reference(params, images, **cfg)
    tols = (0.05, 0.05, 0.5, 0.02)
    for got, want, atol in zip(outs, ref, tols):
        assert bool(jnp.allclose(got, want, atol=atol)), float(
            jnp.max(jnp.abs(got - want)))

    print("KERNEL_OK")
</pallas_src>

<mosaic_0001>
module attributes {stable_mosaic.version = 11 : i64} {
  func.func @_yolof_fused_kernel(%arg0: i32, %arg1: memref<512x32xbf16, #tpu.memory_space<vmem>>, %arg2: memref<512x2xf32, #tpu.memory_space<vmem>>, %arg3: memref<32x32xbf16, #tpu.memory_space<vmem>>, %arg4: memref<1x32xf32, #tpu.memory_space<vmem>>, %arg5: memref<32x32xbf16, #tpu.memory_space<vmem>>, %arg6: memref<1x32xf32, #tpu.memory_space<vmem>>, %arg7: memref<32x48xbf16, #tpu.memory_space<vmem>>, %arg8: memref<1x48xf32, #tpu.memory_space<vmem>>, %arg9: memref<8x16xf32, #tpu.memory_space<vmem>>, %arg10: memref<512x32xf32, #tpu.memory_space<vmem>>, %arg11: memref<512x32xf32, #tpu.memory_space<vmem>>, %arg12: memref<512x16xf32, #tpu.memory_space<vmem>>, %arg13: memref<512x16xf32, #tpu.memory_space<vmem>>) attributes {dimension_semantics = [#tpu.dimension_semantics<parallel>], iteration_bounds = array<i64: 1>, scalar_prefetch = 0 : i64, scratch_operands = 0 : i64, tpu.core_type = #tpu.core_type<tc>, window_params = [{transform_indices = @transform_0, window_bounds = array<i64: 512, 32>}, {transform_indices = @transform_1, window_bounds = array<i64: 512, 2>}, {pipeline_mode = #tpu.pipeline_mode<synchronous>, transform_indices = @transform_2, window_bounds = array<i64: 32, 32>}, {pipeline_mode = #tpu.pipeline_mode<synchronous>, transform_indices = @transform_3, window_bounds = array<i64: 1, 32>}, {pipeline_mode = #tpu.pipeline_mode<synchronous>, transform_indices = @transform_4, window_bounds = array<i64: 32, 32>}, {pipeline_mode = #tpu.pipeline_mode<synchronous>, transform_indices = @transform_5, window_bounds = array<i64: 1, 32>}, {pipeline_mode = #tpu.pipeline_mode<synchronous>, transform_indices = @transform_6, window_bounds = array<i64: 32, 48>}, {pipeline_mode = #tpu.pipeline_mode<synchronous>, transform_indices = @transform_7, window_bounds = array<i64: 1, 48>}, {pipeline_mode = #tpu.pipeline_mode<synchronous>, transform_indices = @transform_8, window_bounds = array<i64: 8, 16>}, {transform_indices = @transform_9, window_bounds = array<i64: 512, 32>}, {transform_indices = @transform_10, window_bounds = array<i64: 512, 32>}, {transform_indices = @transform_11, window_bounds = array<i64: 512, 16>}, {transform_indices = @transform_12, window_bounds = array<i64: 512, 16>}]} {
    %c0 = arith.constant 0 : index
    %c0_0 = arith.constant 0 : index
    %0 = vector.load %arg1[%c0, %c0_0] : memref<512x32xbf16, #tpu.memory_space<vmem>>, vector<512x32xbf16>
    %c0_1 = arith.constant 0 : index
    %c0_2 = arith.constant 0 : index
    %1 = vector.load %arg3[%c0_1, %c0_2] : memref<32x32xbf16, #tpu.memory_space<vmem>>, vector<32x32xbf16>
    %cst = arith.constant dense<0.000000e+00> : vector<512x32xf32>
    %2 = tpu.matmul %0, %1, %cst {dimension_numbers = #tpu.dot_dimension_numbers<[1], [0], [0], [1], [0, 0, 1, 1], [], []>} : vector<512x32xbf16>, vector<32x32xbf16>, vector<512x32xf32> -> vector<512x32xf32>
    %c0_3 = arith.constant 0 : index
    %c0_4 = arith.constant 0 : index
    %3 = vector.load %arg4[%c0_3, %c0_4] : memref<1x32xf32, #tpu.memory_space<vmem>>, vector<1x32xf32>
    %4 = vector.broadcast %3 : vector<1x32xf32> to vector<512x32xf32>
    %5 = arith.addf %2, %4 : vector<512x32xf32>
    %cst_5 = arith.constant 0.000000e+00 : f32
    %6 = vector.broadcast %cst_5 : f32 to vector<512x32xf32>
    %7 = arith.maximumf %5, %6 : vector<512x32xf32>
    %8 = arith.truncf %7 : vector<512x32xf32> to vector<512x32xbf16>
    %c0_6 = arith.constant 0 : index
    %c0_7 = arith.constant 0 : index
    %9 = vector.load %arg5[%c0_6, %c0_7] : memref<32x32xbf16, #tpu.memory_space<vmem>>, vector<32x32xbf16>
    %cst_8 = arith.constant dense<0.000000e+00> : vector<512x32xf32>
    %10 = tpu.matmul %8, %9, %cst_8 {dimension_numbers = #tpu.dot_dimension_numbers<[1], [0], [0], [1], [0, 0, 1, 1], [], []>} : vector<512x32xbf16>, vector<32x32xbf16>, vector<512x32xf32> -> vector<512x32xf32>
    %c0_9 = arith.constant 0 : index
    %c0_10 = arith.constant 0 : index
    %11 = vector.load %arg6[%c0_9, %c0_10] : memref<1x32xf32, #tpu.memory_space<vmem>>, vector<1x32xf32>
    %12 = vector.broadcast %11 : vector<1x32xf32> to vector<512x32xf32>
    %13 = arith.addf %10, %12 : vector<512x32xf32>
    %cst_11 = arith.constant 0.000000e+00 : f32
    %14 = vector.broadcast %cst_11 : f32 to vector<512x32xf32>
    %15 = arith.maximumf %13, %14 : vector<512x32xf32>
    %16 = arith.truncf %15 : vector<512x32xf32> to vector<512x32xbf16>
    %c0_12 = arith.constant 0 : index
    %c0_13 = arith.constant 0 : index
    %17 = vector.load %arg7[%c0_12, %c0_13] : memref<32x48xbf16, #tpu.memory_space<vmem>>, vector<32x48xbf16>
    %cst_14 = arith.constant dense<0.000000e+00> : vector<512x48xf32>
    %18 = tpu.matmul %16, %17, %cst_14 {dimension_numbers = #tpu.dot_dimension_numbers<[1], [0], [0], [1], [0, 0, 1, 1], [], []>} : vector<512x32xbf16>, vector<32x48xbf16>, vector<512x48xf32> -> vector<512x48xf32>
    %c0_15 = arith.constant 0 : index
    %c0_16 = arith.constant 0 : index
    %19 = vector.load %arg8[%c0_15, %c0_16] : memref<1x48xf32, #tpu.memory_space<vmem>>, vector<1x48xf32>
    %20 = vector.broadcast %19 : vector<1x48xf32> to vector<512x48xf32>
    %21 = arith.addf %18, %20 : vector<512x48xf32>
    %22 = vector.extract_strided_slice %21 {offsets = [0, 0], sizes = [512, 32], strides = [1, 1]} : vector<512x48xf32> to vector<512x32xf32>
    %23 = vector.extract_strided_slice %21 {offsets = [0, 32], sizes = [512, 16], strides = [1, 1]} : vector<512x48xf32> to vector<512x16xf32>
    %c0_17 = arith.constant 0 : index
    %c0_18 = arith.constant 0 : index
    %24 = vector.load %arg10[%c0_17, %c0_18] : memref<512x32xf32, #tpu.memory_space<vmem>>, vector<512x32xf32>
    tpu.vector_store %arg10[%c0_17, %c0_18], %22 {strides = array<i32>} : memref<512x32xf32, #tpu.memory_space<vmem>>, vector<512x32xf32>,
    %25 = arith.negf %22 : vector<512x32xf32>
    %26 = math.exp %25 : vector<512x32xf32>
    %cst_19 = arith.constant 1.000000e+00 : f32
    %27 = vector.broadcast %cst_19 : f32 to vector<512x32xf32>
    %28 = arith.addf %27, %26 : vector<512x32xf32>
    %29 = arith.divf %27, %28 : vector<512x32xf32>
    %c0_20 = arith.constant 0 : index
    %c0_21 = arith.constant 0 : index
    %30 = vector.load %arg11[%c0_20, %c0_21] : memref<512x32xf32, #tpu.memory_space<vmem>>, vector<512x32xf32>
    tpu.vector_store %arg11[%c0_20, %c0_21], %29 {strides = array<i32>} : memref<512x32xf32, #tpu.memory_space<vmem>>, vector<512x32xf32>,
    %c0_22 = arith.constant 0 : index
    %c0_23 = arith.constant 0 : index
    %31 = vector.load %arg12[%c0_22, %c0_23] : memref<512x16xf32, #tpu.memory_space<vmem>>, vector<512x16xf32>
    tpu.vector_store %arg12[%c0_22, %c0_23], %23 {strides = array<i32>} : memref<512x16xf32, #tpu.memory_space<vmem>>, vector<512x16xf32>,
    %c0_24 = arith.constant 0 : index
    %c0_25 = arith.constant 0 : index
    %32 = vector.load %arg9[%c0_24, %c0_25] : memref<8x16xf32, #tpu.memory_space<vmem>>, vector<1x16xf32>
    %c1 = arith.constant 1 : index
    %c0_26 = arith.constant 0 : index
    %33 = vector.load %arg9[%c1, %c0_26] : memref<8x16xf32, #tpu.memory_space<vmem>>, vector<1x16xf32>
    %c2 = arith.constant 2 : index
    %c0_27 = arith.constant 0 : index
    %34 = vector.load %arg9[%c2, %c0_27] : memref<8x16xf32, #tpu.memory_space<vmem>>, vector<1x16xf32>
    %c3 = arith.constant 3 : index
    %c0_28 = arith.constant 0 : index
    %35 = vector.load %arg9[%c3, %c0_28] : memref<8x16xf32, #tpu.memory_space<vmem>>, vector<1x16xf32>
    %c4 = arith.constant 4 : index
    %c0_29 = arith.constant 0 : index
    %36 = vector.load %arg9[%c4, %c0_29] : memref<8x16xf32, #tpu.memory_space<vmem>>, vector<1x16xf32>
    %37 = vector.broadcast %33 : vector<1x16xf32> to vector<512x16xf32>
    %38 = arith.mulf %23, %37 : vector<512x16xf32>
    %39 = vector.extract_strided_slice %38 {offsets = [0, 14], sizes = [512, 2], strides = [1, 1]} : vector<512x16xf32> to vector<512x2xf32>
    %40 = vector.extract_strided_slice %38 {offsets = [0, 0], sizes = [512, 14], strides = [1, 1]} : vector<512x16xf32> to vector<512x14xf32>
    %41 = tpu.concatenate %39, %40 in 1 : vector<512x2xf32>, vector<512x14xf32> -> vector<512x16xf32>
    %42 = vector.extract_strided_slice %38 {offsets = [0, 2], sizes = [512, 14], strides = [1, 1]} : vector<512x16xf32> to vector<512x14xf32>
    %43 = vector.extract_strided_slice %38 {offsets = [0, 0], sizes = [512, 2], strides = [1, 1]} : vector<512x16xf32> to vector<512x2xf32>
    %44 = tpu.concatenate %42, %43 in 1 : vector<512x14xf32>, vector<512x2xf32> -> vector<512x16xf32>
    %45 = vector.broadcast %35 : vector<1x16xf32> to vector<512x16xf32>
    %46 = arith.mulf %45, %38 : vector<512x16xf32>
    %cst_30 = arith.constant 1.000000e+00 : f32
    %47 = vector.broadcast %cst_30 : f32 to vector<1x16xf32>
    %48 = arith.subf %47, %35 : vector<1x16xf32>
    %49 = vector.broadcast %48 : vector<1x16xf32> to vector<512x16xf32>
    %50 = arith.mulf %49, %41 : vector<512x16xf32>
    %51 = arith.addf %46, %50 : vector<512x16xf32>
    %52 = vector.broadcast %35 : vector<1x16xf32> to vector<512x16xf32>
    %53 = arith.mulf %52, %44 : vector<512x16xf32>
    %cst_31 = arith.constant 1.000000e+00 : f32
    %54 = vector.broadcast %cst_31 : f32 to vector<1x16xf32>
    %55 = arith.subf %54, %35 : vector<1x16xf32>
    %56 = vector.broadcast %55 : vector<1x16xf32> to vector<512x16xf32>
    %57 = arith.mulf %56, %38 : vector<512x16xf32>
    %58 = arith.addf %53, %57 : vector<512x16xf32>
    %c0_32 = arith.constant 0 : index
    %c0_33 = arith.constant 0 : index
    %59 = vector.load %arg2[%c0_32, %c0_33] : memref<512x2xf32, #tpu.memory_space<vmem>>, vector<512x1xf32>
    %c0_34 = arith.constant 0 : index
    %c1_35 = arith.constant 1 : index
    %60 = vector.load %arg2[%c0_34, %c1_35] : memref<512x2xf32, #tpu.memory_space<vmem>>, vector<512x1xf32>
    %61 = vector.broadcast %36 : vector<1x16xf32> to vector<512x16xf32>
    %62 = vector.broadcast %59 : vector<512x1xf32> to vector<512x16xf32>
    %63 = arith.mulf %61, %62 : vector<512x16xf32>
    %cst_36 = arith.constant 1.000000e+00 : f32
    %64 = vector.broadcast %cst_36 : f32 to vector<1x16xf32>
    %65 = arith.subf %64, %36 : vector<1x16xf32>
    %66 = vector.broadcast %65 : vector<1x16xf32> to vector<512x16xf32>
    %67 = vector.broadcast %60 : vector<512x1xf32> to vector<512x16xf32>
    %68 = arith.mulf %66, %67 : vector<512x16xf32>
    %69 = arith.addf %63, %68 : vector<512x16xf32>
    %70 = vector.broadcast %32 : vector<1x16xf32> to vector<512x16xf32>
    %71 = arith.mulf %51, %70 : vector<512x16xf32>
    %cst_37 = arith.constant -3.200000e+01 : f32
    %cst_38 = arith.constant 3.200000e+01 : f32
    %72 = vector.broadcast %cst_37 : f32 to vector<512x16xf32>
    %73 = arith.maximumf %72, %71 : vector<512x16xf32>
    %74 = vector.broadcast %cst_38 : f32 to vector<512x16xf32>
    %75 = arith.minimumf %74, %73 : vector<512x16xf32>
    %76 = arith.addf %69, %75 : vector<512x16xf32>
    %cst_39 = arith.constant 4.13516665 : f32
    %77 = vector.broadcast %cst_39 : f32 to vector<512x16xf32>
    %78 = arith.minimumf %58, %77 : vector<512x16xf32>
    %79 = math.exp %78 : vector<512x16xf32>
    %80 = vector.broadcast %32 : vector<1x16xf32> to vector<512x16xf32>
    %81 = arith.mulf %79, %80 : vector<512x16xf32>
    %82 = vector.broadcast %34 : vector<1x16xf32> to vector<512x16xf32>
    %83 = arith.mulf %82, %81 : vector<512x16xf32>
    %84 = arith.addf %76, %83 : vector<512x16xf32>
    %c0_40 = arith.constant 0 : index
    %c0_41 = arith.constant 0 : index
    %85 = vector.load %arg13[%c0_40, %c0_41] : memref<512x16xf32, #tpu.memory_space<vmem>>, vector<512x16xf32>
    tpu.vector_store %arg13[%c0_40, %c0_41], %84 {strides = array<i32>} : memref<512x16xf32, #tpu.memory_space<vmem>>, vector<512x16xf32>,
    return
  }
  func.func @transform_0(%arg0: i32) -> (i32, i32) {
    %c0_i32 = arith.constant 0 : i32
    %c0_i32_0 = arith.constant 0 : i32
    return %arg0, %c0_i32 : i32, i32
  }
  func.func @transform_1(%arg0: i32) -> (i32, i32) {
    %c0_i32 = arith.constant 0 : i32
    %c0_i32_0 = arith.constant 0 : i32
    return %arg0, %c0_i32 : i32, i32
  }
  func.func @transform_2(%arg0: i32) -> (i32, i32) {
    %c0_i32 = arith.constant 0 : i32
    %c0_i32_0 = arith.constant 0 : i32
    %c0_i32_1 = arith.constant 0 : i32
    return %c0_i32, %c0_i32_0 : i32, i32
  }
  func.func @transform_3(%arg0: i32) -> (i32, i32) {
    %c0_i32 = arith.constant 0 : i32
    %c0_i32_0 = arith.constant 0 : i32
    %c0_i32_1 = arith.constant 0 : i32
    return %c0_i32, %c0_i32_0 : i32, i32
  }
  func.func @transform_4(%arg0: i32) -> (i32, i32) {
    %c0_i32 = arith.constant 0 : i32
    %c0_i32_0 = arith.constant 0 : i32
    %c0_i32_1 = arith.constant 0 : i32
    return %c0_i32, %c0_i32_0 : i32, i32
  }
  func.func @transform_5(%arg0: i32) -> (i32, i32) {
    %c0_i32 = arith.constant 0 : i32
    %c0_i32_0 = arith.constant 0 : i32
    %c0_i32_1 = arith.constant 0 : i32
    return %c0_i32, %c0_i32_0 : i32, i32
  }
  func.func @transform_6(%arg0: i32) -> (i32, i32) {
    %c0_i32 = arith.constant 0 : i32
    %c0_i32_0 = arith.constant 0 : i32
    %c0_i32_1 = arith.constant 0 : i32
    return %c0_i32, %c0_i32_0 : i32, i32
  }
  func.func @transform_7(%arg0: i32) -> (i32, i32) {
    %c0_i32 = arith.constant 0 : i32
    %c0_i32_0 = arith.constant 0 : i32
    %c0_i32_1 = arith.constant 0 : i32
    return %c0_i32, %c0_i32_0 : i32, i32
  }
  func.func @transform_8(%arg0: i32) -> (i32, i32) {
    %c0_i32 = arith.constant 0 : i32
    %c0_i32_0 = arith.constant 0 : i32
    %c0_i32_1 = arith.constant 0 : i32
    return %c0_i32, %c0_i32_0 : i32, i32
  }
  func.func @transform_9(%arg0: i32) -> (i32, i32) {
    %c0_i32 = arith.constant 0 : i32
    %c0_i32_0 = arith.constant 0 : i32
    return %arg0, %c0_i32 : i32, i32
  }
  func.func @transform_10(%arg0: i32) -> (i32, i32) {
    %c0_i32 = arith.constant 0 : i32
    %c0_i32_0 = arith.constant 0 : i32
    return %arg0, %c0_i32 : i32, i32
  }
  func.func @transform_11(%arg0: i32) -> (i32, i32) {
    %c0_i32 = arith.constant 0 : i32
    %c0_i32_0 = arith.constant 0 : i32
    return %arg0, %c0_i32 : i32, i32
  }
  func.func @transform_12(%arg0: i32) -> (i32, i32) {
    %c0_i32 = arith.constant 0 : i32
    %c0_i32_0 = arith.constant 0 : i32
    return %arg0, %c0_i32 : i32, i32
  }
}

</mosaic_0001>

<llo_original>
// kernel: yolof_forward.1
$region0: #{yolof_forward.1}
  #allocation0 [shape = 'u32[]', space=smem, size = 0x4, offset = 0x4, fixed_abs, tag = 'smem constant byte address 0x4 - core index']
  #allocation1 [shape = 'u32[144,128]{1,0:T(1,128)}', space=vmem, size = 0x12000, scoped, tag = 'internal scratch']
  %s0 = inlined_call_operand.vmem [shape: bf16[512,32], index: 0, kind: input, shape index: {}]
  %s1 = inlined_call_operand.vmem [shape: f32[512,2], index: 1, kind: input, shape index: {}]
  %s2 = inlined_call_operand.vmem [shape: bf16[32,32], index: 2, kind: input, shape index: {}]
  %s3 = inlined_call_operand.vmem [shape: f32[1,32], index: 3, kind: input, shape index: {}]
  %s4 = inlined_call_operand.vmem [shape: bf16[32,32], index: 4, kind: input, shape index: {}]
  %s5 = inlined_call_operand.vmem [shape: f32[1,32], index: 5, kind: input, shape index: {}]
  %s6 = inlined_call_operand.vmem [shape: bf16[32,48], index: 6, kind: input, shape index: {}]
  %s7 = inlined_call_operand.vmem [shape: f32[1,48], index: 7, kind: input, shape index: {}]
  %s8 = inlined_call_operand.vmem [shape: f32[8,16], index: 8, kind: input, shape index: {}]
  %s9 = inlined_call_operand.vmem [shape: f32[512,32], index: 9, kind: output, shape index: {0}]
  %s10 = inlined_call_operand.vmem [shape: f32[512,32], index: 10, kind: output, shape index: {1}]
  %s11 = inlined_call_operand.vmem [shape: f32[512,16], index: 11, kind: output, shape index: {2}]
  %s12 = inlined_call_operand.vmem [shape: f32[512,16], index: 12, kind: output, shape index: {3}]
  %13 = xla_tuple %s9, %s10, %s11, %s12
  %s14 = sld [smem:[#allocation0]]
  $region70: #{yolof_forward.1} parent=0
    _
  %s16 = ssub.s32 1, %s14
  %s17 = scalar_select 0, %s16, %s14
  // Predicated region
  $region2: #{yolof_forward.1} parent=0 // pred_check
    _
  $region3: #{yolof_forward.1} parent=0 // pred_check_branch
    %19 = sbr.rel (0) target = $region5
  $region4: #{yolof_forward.1} parent=0 // pred_region
    _
  $region5: #{yolof_forward.1} parent=0 // pred_fallthru
    _
  // Predicated region
  $region6: #{yolof_forward.1} parent=0 // pred_check
    _
  $region7: #{yolof_forward.1} parent=0 // pred_check_branch
    %21 = sbr.rel (0) target = $region9
  $region8: #{yolof_forward.1} parent=0 // pred_region
    _
  $region9: #{yolof_forward.1} parent=0 // pred_fallthru
    _
  // Predicated region
  $region10: #{yolof_forward.1} parent=0 // pred_check
    _
  $region11: #{yolof_forward.1} parent=0 // pred_check_branch
    %23 = sbr.rel (0) target = $region13
  $region12: #{yolof_forward.1} parent=0 // pred_region
    _
  $region13: #{yolof_forward.1} parent=0 // pred_fallthru
    _
  // Predicated region
  $region14: #{yolof_forward.1} parent=0 // pred_check
    _
  $region15: #{yolof_forward.1} parent=0 // pred_check_branch
    %25 = sbr.rel (0) target = $region17
  $region16: #{yolof_forward.1} parent=0 // pred_region
    _
  $region17: #{yolof_forward.1} parent=0 // pred_fallthru
    _
  // Predicated region
  $region18: #{yolof_forward.1} parent=0 // pred_check
    _
  $region19: #{yolof_forward.1} parent=0 // pred_check_branch
    %27 = sbr.rel (0) target = $region21
  $region20: #{yolof_forward.1} parent=0 // pred_region
    _
  $region21: #{yolof_forward.1} parent=0 // pred_fallthru
    _
  // Predicated region
  $region22: #{yolof_forward.1} parent=0 // pred_check
    _
  $region23: #{yolof_forward.1} parent=0 // pred_check_branch
    %29 = sbr.rel (0) target = $region25
  $region24: #{yolof_forward.1} parent=0 // pred_region
    _
  $region25: #{yolof_forward.1} parent=0 // pred_fallthru
    _
  // Predicated region
  $region26: #{yolof_forward.1} parent=0 // pred_check
    _
  $region27: #{yolof_forward.1} parent=0 // pred_check_branch
    %31 = sbr.rel (0) target = $region29
  $region28: #{yolof_forward.1} parent=0 // pred_region
    _
  $region29: #{yolof_forward.1} parent=0 // pred_fallthru
    _
  // Predicated region
  $region30: #{yolof_forward.1} parent=0 // pred_check
    _
  $region31: #{yolof_forward.1} parent=0 // pred_check_branch
    %33 = sbr.rel (0) target = $region33
  $region32: #{yolof_forward.1} parent=0 // pred_region
    _
  $region33: #{yolof_forward.1} parent=0 // pred_fallthru
    _
  // Predicated region
  $region34: #{yolof_forward.1} parent=0 // pred_check
    _
  $region35: #{yolof_forward.1} parent=0 // pred_check_branch
    %35 = sbr.rel (0) target = $region37
  $region36: #{yolof_forward.1} parent=0 // pred_region
    _
  $region37: #{yolof_forward.1} parent=0 // pred_fallthru
    _
  %v37 = vld [vmem:[%s0] sm:$0xf]
  %v38 = vld [vmem:[%s0 + $0x4] sm:$0xf]
  %v39 = vld [vmem:[%s0 + $0x8] sm:$0xf]
  %v40 = vld [vmem:[%s0 + $0xc] sm:$0xf]
  %v41 = vld [vmem:[%s0 + $0x10] sm:$0xf]
  %v42 = vld [vmem:[%s0 + $0x14] sm:$0xf]
  %v43 = vld [vmem:[%s0 + $0x18] sm:$0xf]
  %v44 = vld [vmem:[%s0 + $0x1c] sm:$0xf]
  %v45 = vld [vmem:[%s0 + $0x20] sm:$0xf]
  %v46 = vld [vmem:[%s0 + $0x24] sm:$0xf]
  %v47 = vld [vmem:[%s0 + $0x28] sm:$0xf]
  %v48 = vld [vmem:[%s0 + $0x2c] sm:$0xf]
  %v49 = vld [vmem:[%s0 + $0x30] sm:$0xf]
  %v50 = vld [vmem:[%s0 + $0x34] sm:$0xf]
  %v51 = vld [vmem:[%s0 + $0x38] sm:$0xf]
  %v52 = vld [vmem:[%s0 + $0x3c] sm:$0xf]
  %v53 = vld [vmem:[%s0 + $0x40] sm:$0xf]
  %v54 = vld [vmem:[%s0 + $0x44] sm:$0xf]
  %v55 = vld [vmem:[%s0 + $0x48] sm:$0xf]
  %v56 = vld [vmem:[%s0 + $0x4c] sm:$0xf]
  %v57 = vld [vmem:[%s0 + $0x50] sm:$0xf]
  %v58 = vld [vmem:[%s0 + $0x54] sm:$0xf]
  %v59 = vld [vmem:[%s0 + $0x58] sm:$0xf]
  %v60 = vld [vmem:[%s0 + $0x5c] sm:$0xf]
  %v61 = vld [vmem:[%s0 + $0x60] sm:$0xf]
  %v62 = vld [vmem:[%s0 + $0x64] sm:$0xf]
  %v63 = vld [vmem:[%s0 + $0x68] sm:$0xf]
  %v64 = vld [vmem:[%s0 + $0x6c] sm:$0xf]
  %v65 = vld [vmem:[%s0 + $0x70] sm:$0xf]
  %v66 = vld [vmem:[%s0 + $0x74] sm:$0xf]
  %v67 = vld [vmem:[%s0 + $0x78] sm:$0xf]
  %v68 = vld [vmem:[%s0 + $0x7c] sm:$0xf]
  %v69 = vld [vmem:[%s0 + $0x80] sm:$0xf]
  %v70 = vld [vmem:[%s0 + $0x84] sm:$0xf]
  %v71 = vld [vmem:[%s0 + $0x88] sm:$0xf]
  %v72 = vld [vmem:[%s0 + $0x8c] sm:$0xf]
  %v73 = vld [vmem:[%s0 + $0x90] sm:$0xf]
  %v74 = vld [vmem:[%s0 + $0x94] sm:$0xf]
  %v75 = vld [vmem:[%s0 + $0x98] sm:$0xf]
  %v76 = vld [vmem:[%s0 + $0x9c] sm:$0xf]
  %v77 = vld [vmem:[%s0 + $0xa0] sm:$0xf]
  %v78 = vld [vmem:[%s0 + $0xa4] sm:$0xf]
  %v79 = vld [vmem:[%s0 + $0xa8] sm:$0xf]
  %v80 = vld [vmem:[%s0 + $0xac] sm:$0xf]
  %v81 = vld [vmem:[%s0 + $0xb0] sm:$0xf]
  %v82 = vld [vmem:[%s0 + $0xb4] sm:$0xf]
  %v83 = vld [vmem:[%s0 + $0xb8] sm:$0xf]
  %v84 = vld [vmem:[%s0 + $0xbc] sm:$0xf]
  %v85 = vld [vmem:[%s0 + $0xc0] sm:$0xf]
  %v86 = vld [vmem:[%s0 + $0xc4] sm:$0xf]
  %v87 = vld [vmem:[%s0 + $0xc8] sm:$0xf]
  %v88 = vld [vmem:[%s0 + $0xcc] sm:$0xf]
  %v89 = vld [vmem:[%s0 + $0xd0] sm:$0xf]
  %v90 = vld [vmem:[%s0 + $0xd4] sm:$0xf]
  %v91 = vld [vmem:[%s0 + $0xd8] sm:$0xf]
  %v92 = vld [vmem:[%s0 + $0xdc] sm:$0xf]
  %v93 = vld [vmem:[%s0 + $0xe0] sm:$0xf]
  %v94 = vld [vmem:[%s0 + $0xe4] sm:$0xf]
  %v95 = vld [vmem:[%s0 + $0xe8] sm:$0xf]
  %v96 = vld [vmem:[%s0 + $0xec] sm:$0xf]
  %v97 = vld [vmem:[%s0 + $0xf0] sm:$0xf]
  %v98 = vld [vmem:[%s0 + $0xf4] sm:$0xf]
  %v99 = vld [vmem:[%s0 + $0xf8] sm:$0xf]
  %v100 = vld [vmem:[%s0 + $0xfc] sm:$0xf]
  %v101 = vld [vmem:[%s2] sm:$0xf]
  %v102 = vld [vmem:[%s2 + $0x4] sm:$0xf]
  %v103 = vld [vmem:[%s2 + $0x8] sm:$0xf]
  %v104 = vld [vmem:[%s2 + $0xc] sm:$0xf]
  %v105 = vld [vmem:[%s3] sm:$0x1]
  %v107 = vlaneseq
  %v108 = vshrl.u32 %v107, 7
  %v109 = vsub.s32 0, %v108
  %v110 = vrot.slane %v105, %v109
  %v176 = vunpack.c.l.b16 %v37
  %v177 = vunpack.c.l.b16 %v38
  %v178 = vunpack.c.l.b16 %v39
  %v179 = vunpack.c.l.b16 %v40
  %v180 = vunpack.c.l.b16 %v41
  %v181 = vunpack.c.l.b16 %v42
  %v182 = vunpack.c.l.b16 %v43
  %v183 = vunpack.c.l.b16 %v44
  %v184 = vunpack.c.l.b16 %v45
  %v185 = vunpack.c.l.b16 %v46
  %v186 = vunpack.c.l.b16 %v47
  %v187 = vunpack.c.l.b16 %v48
  %v188 = vunpack.c.l.b16 %v49
  %v189 = vunpack.c.l.b16 %v50
  %v190 = vunpack.c.l.b16 %v51
  %v191 = vunpack.c.l.b16 %v52
  %v192 = vunpack.c.l.b16 %v53
  %v193 = vunpack.c.l.b16 %v54
  %v194 = vunpack.c.l.b16 %v55
  %v195 = vunpack.c.l.b16 %v56
  %v196 = vunpack.c.l.b16 %v57
  %v197 = vunpack.c.l.b16 %v58
  %v198 = vunpack.c.l.b16 %v59
  %v199 = vunpack.c.l.b16 %v60
  %v200 = vunpack.c.l.b16 %v61
  %v201 = vunpack.c.l.b16 %v62
  %v202 = vunpack.c.l.b16 %v63
  %v203 = vunpack.c.l.b16 %v64
  %v204 = vunpack.c.l.b16 %v65
  %v205 = vunpack.c.l.b16 %v66
  %v206 = vunpack.c.l.b16 %v67
  %v207 = vunpack.c.l.b16 %v68
  %v208 = vunpack.c.l.b16 %v69
  %v209 = vunpack.c.l.b16 %v70
  %v210 = vunpack.c.l.b16 %v71
  %v211 = vunpack.c.l.b16 %v72
  %v212 = vunpack.c.l.b16 %v73
  %v213 = vunpack.c.l.b16 %v74
  %v214 = vunpack.c.l.b16 %v75
  %v215 = vunpack.c.l.b16 %v76
  %v216 = vunpack.c.l.b16 %v77
  %v217 = vunpack.c.l.b16 %v78
  %v218 = vunpack.c.l.b16 %v79
  %v219 = vunpack.c.l.b16 %v80
  %v220 = vunpack.c.l.b16 %v81
  %v221 = vunpack.c.l.b16 %v82
  %v222 = vunpack.c.l.b16 %v83
  %v223 = vunpack.c.l.b16 %v84
  %v224 = vunpack.c.l.b16 %v85
  %v225 = vunpack.c.l.b16 %v86
  %v226 = vunpack.c.l.b16 %v87
  %v227 = vunpack.c.l.b16 %v88
  %v228 = vunpack.c.l.b16 %v89
  %v229 = vunpack.c.l.b16 %v90
  %v230 = vunpack.c.l.b16 %v91
  %v231 = vunpack.c.l.b16 %v92
  %v232 = vunpack.c.l.b16 %v93
  %v233 = vunpack.c.l.b16 %v94
  %v234 = vunpack.c.l.b16 %v95
  %v235 = vunpack.c.l.b16 %v96
  %v236 = vunpack.c.l.b16 %v97
  %v237 = vunpack.c.l.b16 %v98
  %v238 = vunpack.c.l.b16 %v99
  %v239 = vunpack.c.l.b16 %v100
  %v240 = vpack.c.b16 %v177, %v176
  %v241 = vpack.c.b16 %v179, %v178
  %v242 = vpack.c.b16 %v181, %v180
  %v243 = vpack.c.b16 %v183, %v182
  %v244 = vpack.c.b16 %v185, %v184
  %v245 = vpack.c.b16 %v187, %v186
  %v246 = vpack.c.b16 %v189, %v188
  %v247 = vpack.c.b16 %v191, %v190
  %v248 = vpack.c.b16 %v193, %v192
  %v249 = vpack.c.b16 %v195, %v194
  %v250 = vpack.c.b16 %v197, %v196
  %v251 = vpack.c.b16 %v199, %v198
  %v252 = vpack.c.b16 %v201, %v200
  %v253 = vpack.c.b16 %v203, %v202
  %v254 = vpack.c.b16 %v205, %v204
  %v255 = vpack.c.b16 %v207, %v206
  %v256 = vpack.c.b16 %v209, %v208
  %v257 = vpack.c.b16 %v211, %v210
  %v258 = vpack.c.b16 %v213, %v212
  %v259 = vpack.c.b16 %v215, %v214
  %v260 = vpack.c.b16 %v217, %v216
  %v261 = vpack.c.b16 %v219, %v218
  %v262 = vpack.c.b16 %v221, %v220
  %v263 = vpack.c.b16 %v223, %v222
  %v264 = vpack.c.b16 %v225, %v224
  %v265 = vpack.c.b16 %v227, %v226
  %v266 = vpack.c.b16 %v229, %v228
  %v267 = vpack.c.b16 %v231, %v230
  %v268 = vpack.c.b16 %v233, %v232
  %v269 = vpack.c.b16 %v235, %v234
  %v270 = vpack.c.b16 %v237, %v236
  %v271 = vpack.c.b16 %v239, %v238
  %v276 = vunpack.c.l.b16 %v101
  %v277 = vunpack.c.l.b16 %v102
  %v278 = vunpack.c.l.b16 %v103
  %v279 = vunpack.c.l.b16 %v104
  %v280 = vpack.c.b16 %v277, %v276
  %v281 = vpack.c.b16 %v279, %v278
  %vm284 = vcmask 261120
  %v286 = vsel %vm284, %v240, 0
  %v289 = vsel %vm284, %v241, 0
  %v292 = vsel %vm284, %v242, 0
  %v295 = vsel %vm284, %v243, 0
  %v298 = vsel %vm284, %v244, 0
  %v301 = vsel %vm284, %v245, 0
  %v304 = vsel %vm284, %v246, 0
  %v307 = vsel %vm284, %v247, 0
  %v310 = vsel %vm284, %v248, 0
  %v313 = vsel %vm284, %v249, 0
  %v316 = vsel %vm284, %v250, 0
  %v319 = vsel %vm284, %v251, 0
  %v322 = vsel %vm284, %v252, 0
  %v325 = vsel %vm284, %v253, 0
  %v328 = vsel %vm284, %v254, 0
  %v331 = vsel %vm284, %v255, 0
  %v334 = vsel %vm284, %v256, 0
  %v337 = vsel %vm284, %v257, 0
  %v340 = vsel %vm284, %v258, 0
  %v343 = vsel %vm284, %v259, 0
  %v346 = vsel %vm284, %v260, 0
  %v349 = vsel %vm284, %v261, 0
  %v352 = vsel %vm284, %v262, 0
  %v355 = vsel %vm284, %v263, 0
  %v358 = vsel %vm284, %v264, 0
  %v361 = vsel %vm284, %v265, 0
  %v364 = vsel %vm284, %v266, 0
  %v367 = vsel %vm284, %v267, 0
  %v370 = vsel %vm284, %v268, 0
  %v373 = vsel %vm284, %v269, 0
  %v376 = vsel %vm284, %v270, 0
  %v379 = vsel %vm284, %v271, 0
  %381 = vmatprep.subr.bf16.mxu0 0
  %382 = vmatpush1.bf16.msra.mxu0 0
  %383 = vmatprep.subr.bf16.mxu0 0
  %384 = vmatpush1.bf16.msra.mxu0 0
  %385 = vmatprep.subr.bf16.mxu0 0
  %386 = vmatpush1.bf16.msra.mxu0 0
  %387 = vmatprep.subr.bf16.mxu0 0
  %388 = vmatpush1.bf16.msra.mxu0 0
  %389 = vmatprep.subr.bf16.mxu0 0
  %390 = vmatpush1.bf16.msra.mxu0 0
  %391 = vmatprep.subr.bf16.mxu0 0
  %392 = vmatpush1.bf16.msra.mxu0 0
  %393 = vmatprep.subr.bf16.mxu0 0
  %394 = vmatpush1.bf16.msra.mxu0 %v281
  %395 = vmatprep.subr.bf16.mxu0 0
  %396 = vmatpush1.bf16.msra.mxu0 %v280
  %397 = vmatprep.subr.bf16.mxu0 0
  %398 = vmatpush2.bf16.msra.mxu0 0
  %399 = vmatprep.subr.bf16.mxu0 0
  %400 = vmatpush2.bf16.msra.mxu0 0
  %401 = vmatprep.subr.bf16.mxu0 0
  %402 = vmatpush2.bf16.msra.mxu0 0
  %403 = vmatprep.subr.bf16.mxu0 0
  %404 = vmatpush2.bf16.msra.mxu0 0
  %405 = vmatprep.subr.bf16.mxu0 0
  %406 = vmatpush2.bf16.msra.mxu0 0
  %407 = vmatprep.subr.bf16.mxu0 0
  %408 = vmatpush2.bf16.msra.mxu0 0
  %409 = vmatprep.subr.bf16.mxu0 0
  %410 = vmatpush2.bf16.msra.mxu0 0
  %411 = vmatprep.subr.bf16.mxu0 0
  %412 = vmatpush2.bf16.msra.mxu0 0
  %413 = vmatprep.mubr.bf16.mxu0 0
  %414 = vmatmul.mubr.bf16.gmra.mxu0 %v286
  %v415 = vpop.f32.mrf.mxu0
  %v416 = vadd.f32 %v110, %v415
  %v417 = vpop.f32.mrf.mxu0
  %v418 = vpop.f32.mrf.mxu0
  %v419 = vadd.f32 %v110, %v418
  %v420 = vpop.f32.mrf.mxu0
  %421 = vmatprep.mubr.bf16.mxu0 0
  %422 = vmatmul.mubr.bf16.gmra.mxu0 %v289
  %v423 = vpop.f32.mrf.mxu0
  %v424 = vadd.f32 %v110, %v423
  %v425 = vpop.f32.mrf.mxu0
  %v426 = vpop.f32.mrf.mxu0
  %v427 = vadd.f32 %v110, %v426
  %v428 = vpop.f32.mrf.mxu0
  %429 = vmatprep.mubr.bf16.mxu0 0
  %430 = vmatmul.mubr.bf16.gmra.mxu0 %v292
  %v431 = vpop.f32.mrf.mxu0
  %v432 = vadd.f32 %v110, %v431
  %v433 = vpop.f32.mrf.mxu0
  %v434 = vpop.f32.mrf.mxu0
  %v435 = vadd.f32 %v110, %v434
  %v436 = vpop.f32.mrf.mxu0
  %437 = vmatprep.mubr.bf16.mxu0 0
  %438 = vmatmul.mubr.bf16.gmra.mxu0 %v295
  %v439 = vpop.f32.mrf.mxu0
  %v440 = vadd.f32 %v110, %v439
  %v441 = vpop.f32.mrf.mxu0
  %v442 = vpop.f32.mrf.mxu0
  %v443 = vadd.f32 %v110, %v442
  %v444 = vpop.f32.mrf.mxu0
  %445 = vmatprep.mubr.bf16.mxu0 0
  %446 = vmatmul.mubr.bf16.gmra.mxu0 %v298
  %v447 = vpop.f32.mrf.mxu0
  %v448 = vadd.f32 %v110, %v447
  %v449 = vpop.f32.mrf.mxu0
  %v450 = vpop.f32.mrf.mxu0
  %v451 = vadd.f32 %v110, %v450
  %v452 = vpop.f32.mrf.mxu0
  %453 = vmatprep.mubr.bf16.mxu0 0
  %454 = vmatmul.mubr.bf16.gmra.mxu0 %v301
  %v455 = vpop.f32.mrf.mxu0
  %v456 = vadd.f32 %v110, %v455
  %v457 = vpop.f32.mrf.mxu0
  %v458 = vpop.f32.mrf.mxu0
  %v459 = vadd.f32 %v110, %v458
  %v460 = vpop.f32.mrf.mxu0
  %461 = vmatprep.mubr.bf16.mxu0 0
  %462 = vmatmul.mubr.bf16.gmra.mxu0 %v304
  %v463 = vpop.f32.mrf.mxu0
  %v464 = vadd.f32 %v110, %v463
  %v465 = vpop.f32.mrf.mxu0
  %v466 = vpop.f32.mrf.mxu0
  %v467 = vadd.f32 %v110, %v466
  %v468 = vpop.f32.mrf.mxu0
  %469 = vmatprep.mubr.bf16.mxu0 0
  %470 = vmatmul.mubr.bf16.gmra.mxu0 %v307
  %v471 = vpop.f32.mrf.mxu0
  %v472 = vadd.f32 %v110, %v471
  %v473 = vpop.f32.mrf.mxu0
  %v474 = vpop.f32.mrf.mxu0
  %v475 = vadd.f32 %v110, %v474
  %v476 = vpop.f32.mrf.mxu0
  %477 = vmatprep.mubr.bf16.mxu0 0
  %478 = vmatmul.mubr.bf16.gmra.mxu0 %v310
  %v479 = vpop.f32.mrf.mxu0
  %v480 = vadd.f32 %v110, %v479
  %v481 = vpop.f32.mrf.mxu0
  %v482 = vpop.f32.mrf.mxu0
  %v483 = vadd.f32 %v110, %v482
  %v484 = vpop.f32.mrf.mxu0
  %485 = vmatprep.mubr.bf16.mxu0 0
  %486 = vmatmul.mubr.bf16.gmra.mxu0 %v313
  %v487 = vpop.f32.mrf.mxu0
  %v488 = vadd.f32 %v110, %v487
  %v489 = vpop.f32.mrf.mxu0
  %v490 = vpop.f32.mrf.mxu0
  %v491 = vadd.f32 %v110, %v490
  %v492 = vpop.f32.mrf.mxu0
  %493 = vmatprep.mubr.bf16.mxu0 0
  %494 = vmatmul.mubr.bf16.gmra.mxu0 %v316
  %v495 = vpop.f32.mrf.mxu0
  %v496 = vadd.f32 %v110, %v495
  %v497 = vpop.f32.mrf.mxu0
  %v498 = vpop.f32.mrf.mxu0
  %v499 = vadd.f32 %v110, %v498
  %v500 = vpop.f32.mrf.mxu0
  %501 = vmatprep.mubr.bf16.mxu0 0
  %502 = vmatmul.mubr.bf16.gmra.mxu0 %v319
  %v503 = vpop.f32.mrf.mxu0
  %v504 = vadd.f32 %v110, %v503
  %v505 = vpop.f32.mrf.mxu0
  %v506 = vpop.f32.mrf.mxu0
  %v507 = vadd.f32 %v110, %v506
  %v508 = vpop.f32.mrf.mxu0
  %509 = vmatprep.mubr.bf16.mxu0 0
  %510 = vmatmul.mubr.bf16.gmra.mxu0 %v322
  %v511 = vpop.f32.mrf.mxu0
  %v512 = vadd.f32 %v110, %v511
  %v513 = vpop.f32.mrf.mxu0
  %v514 = vpop.f32.mrf.mxu0
  %v515 = vadd.f32 %v110, %v514
  %v516 = vpop.f32.mrf.mxu0
  %517 = vmatprep.mubr.bf16.mxu0 0
  %518 = vmatmul.mubr.bf16.gmra.mxu0 %v325
  %v519 = vpop.f32.mrf.mxu0
  %v520 = vadd.f32 %v110, %v519
  %v521 = vpop.f32.mrf.mxu0
  %v522 = vpop.f32.mrf.mxu0
  %v523 = vadd.f32 %v110, %v522
  %v524 = vpop.f32.mrf.mxu0
  %525 = vmatprep.mubr.bf16.mxu0 0
  %526 = vmatmul.mubr.bf16.gmra.mxu0 %v328
  %v527 = vpop.f32.mrf.mxu0
  %v528 = vadd.f32 %v110, %v527
  %v529 = vpop.f32.mrf.mxu0
  %v530 = vpop.f32.mrf.mxu0
  %v531 = vadd.f32 %v110, %v530
  %v532 = vpop.f32.mrf.mxu0
  %533 = vmatprep.mubr.bf16.mxu0 0
  %534 = vmatmul.mubr.bf16.gmra.mxu0 %v331
  %v535 = vpop.f32.mrf.mxu0
  %v536 = vadd.f32 %v110, %v535
  %v537 = vpop.f32.mrf.mxu0
  %v538 = vpop.f32.mrf.mxu0
  %v539 = vadd.f32 %v110, %v538
  %v540 = vpop.f32.mrf.mxu0
  %541 = vmatprep.mubr.bf16.mxu0 0
  %542 = vmatmul.mubr.bf16.gmra.mxu0 %v334
  %v543 = vpop.f32.mrf.mxu0
  %v544 = vadd.f32 %v110, %v543
  %v545 = vpop.f32.mrf.mxu0
  %v546 = vpop.f32.mrf.mxu0
  %v547 = vadd.f32 %v110, %v546
  %v548 = vpop.f32.mrf.mxu0
  %549 = vmatprep.mubr.bf16.mxu0 0
  %550 = vmatmul.mubr.bf16.gmra.mxu0 %v337
  %v551 = vpop.f32.mrf.mxu0
  %v552 = vadd.f32 %v110, %v551
  %v553 = vpop.f32.mrf.mxu0
  %v554 = vpop.f32.mrf.mxu0
  %v555 = vadd.f32 %v110, %v554
  %v556 = vpop.f32.mrf.mxu0
  %557 = vmatprep.mubr.bf16.mxu0 0
  %558 = vmatmul.mubr.bf16.gmra.mxu0 %v340
  %v559 = vpop.f32.mrf.mxu0
  %v560 = vadd.f32 %v110, %v559
  %v561 = vpop.f32.mrf.mxu0
  %v562 = vpop.f32.mrf.mxu0
  %v563 = vadd.f32 %v110, %v562
  %v564 = vpop.f32.mrf.mxu0
  %565 = vmatprep.mubr.bf16.mxu0 0
  %566 = vmatmul.mubr.bf16.gmra.mxu0 %v343
  %v567 = vpop.f32.mrf.mxu0
  %v568 = vadd.f32 %v110, %v567
  %v569 = vpop.f32.mrf.mxu0
  %v570 = vpop.f32.mrf.mxu0
  %v571 = vadd.f32 %v110, %v570
  %v572 = vpop.f32.mrf.mxu0
  %573 = vmatprep.mubr.bf16.mxu0 0
  %574 = vmatmul.mubr.bf16.gmra.mxu0 %v346
  %v575 = vpop.f32.mrf.mxu0
  %v576 = vadd.f32 %v110, %v575
  %v577 = vpop.f32.mrf.mxu0
  %v578 = vpop.f32.mrf.mxu0
  %v579 = vadd.f32 %v110, %v578
  %v580 = vpop.f32.mrf.mxu0
  %581 = vmatprep.mubr.bf16.mxu0 0
  %582 = vmatmul.mubr.bf16.gmra.mxu0 %v349
  %v583 = vpop.f32.mrf.mxu0
  %v584 = vadd.f32 %v110, %v583
  %v585 = vpop.f32.mrf.mxu0
  %v586 = vpop.f32.mrf.mxu0
  %v587 = vadd.f32 %v110, %v586
  %v588 = vpop.f32.mrf.mxu0
  %589 = vmatprep.mubr.bf16.mxu0 0
  %590 = vmatmul.mubr.bf16.gmra.mxu0 %v352
  %v591 = vpop.f32.mrf.mxu0
  %v592 = vadd.f32 %v110, %v591
  %v593 = vpop.f32.mrf.mxu0
  %v594 = vpop.f32.mrf.mxu0
  %v595 = vadd.f32 %v110, %v594
  %v596 = vpop.f32.mrf.mxu0
  %597 = vmatprep.mubr.bf16.mxu0 0
  %598 = vmatmul.mubr.bf16.gmra.mxu0 %v355
  %v599 = vpop.f32.mrf.mxu0
  %v600 = vadd.f32 %v110, %v599
  %v601 = vpop.f32.mrf.mxu0
  %v602 = vpop.f32.mrf.mxu0
  %v603 = vadd.f32 %v110, %v602
  %v604 = vpop.f32.mrf.mxu0
  %605 = vmatprep.mubr.bf16.mxu0 0
  %606 = vmatmul.mubr.bf16.gmra.mxu0 %v358
  %v607 = vpop.f32.mrf.mxu0
  %v608 = vadd.f32 %v110, %v607
  %v609 = vpop.f32.mrf.mxu0
  %v610 = vpop.f32.mrf.mxu0
  %v611 = vadd.f32 %v110, %v610
  %v612 = vpop.f32.mrf.mxu0
  %613 = vmatprep.mubr.bf16.mxu0 0
  %614 = vmatmul.mubr.bf16.gmra.mxu0 %v361
  %v615 = vpop.f32.mrf.mxu0
  %v616 = vadd.f32 %v110, %v615
  %v617 = vpop.f32.mrf.mxu0
  %v618 = vpop.f32.mrf.mxu0
  %v619 = vadd.f32 %v110, %v618
  %v620 = vpop.f32.mrf.mxu0
  %621 = vmatprep.mubr.bf16.mxu0 0
  %622 = vmatmul.mubr.bf16.gmra.mxu0 %v364
  %v623 = vpop.f32.mrf.mxu0
  %v624 = vadd.f32 %v110, %v623
  %v625 = vpop.f32.mrf.mxu0
  %v626 = vpop.f32.mrf.mxu0
  %v627 = vadd.f32 %v110, %v626
  %v628 = vpop.f32.mrf.mxu0
  %629 = vmatprep.mubr.bf16.mxu0 0
  %630 = vmatmul.mubr.bf16.gmra.mxu0 %v367
  %v631 = vpop.f32.mrf.mxu0
  %v632 = vadd.f32 %v110, %v631
  %v633 = vpop.f32.mrf.mxu0
  %v634 = vpop.f32.mrf.mxu0
  %v635 = vadd.f32 %v110, %v634
  %v636 = vpop.f32.mrf.mxu0
  %637 = vmatprep.mubr.bf16.mxu0 0
  %638 = vmatmul.mubr.bf16.gmra.mxu0 %v370
  %v639 = vpop.f32.mrf.mxu0
  %v640 = vadd.f32 %v110, %v639
  %v641 = vpop.f32.mrf.mxu0
  %v642 = vpop.f32.mrf.mxu0
  %v643 = vadd.f32 %v110, %v642
  %v644 = vpop.f32.mrf.mxu0
  %645 = vmatprep.mubr.bf16.mxu0 0
  %646 = vmatmul.mubr.bf16.gmra.mxu0 %v373
  %v647 = vpop.f32.mrf.mxu0
  %v648 = vadd.f32 %v110, %v647
  %v649 = vpop.f32.mrf.mxu0
  %v650 = vpop.f32.mrf.mxu0
  %v651 = vadd.f32 %v110, %v650
  %v652 = vpop.f32.mrf.mxu0
  %653 = vmatprep.mubr.bf16.mxu0 0
  %654 = vmatmul.mubr.bf16.gmra.mxu0 %v376
  %v655 = vpop.f32.mrf.mxu0
  %v656 = vadd.f32 %v110, %v655
  %v657 = vpop.f32.mrf.mxu0
  %v658 = vpop.f32.mrf.mxu0
  %v659 = vadd.f32 %v110, %v658
  %v660 = vpop.f32.mrf.mxu0
  %661 = vmatprep.mubr.bf16.mxu0 0
  %662 = vmatmul.mubr.bf16.gmra.mxu0 %v379
  %v663 = vpop.f32.mrf.mxu0
  %v664 = vadd.f32 %v110, %v663
  %v665 = vpop.f32.mrf.mxu0
  %v666 = vpop.f32.mrf.mxu0
  %v667 = vadd.f32 %v110, %v666
  %v668 = vpop.f32.mrf.mxu0
  %669 = vdwg.mxu0
  %v670 = vmax.f32 %v416, 0.0
  %v671 = vmax.f32 %v419, 0.0
  %v672 = vmax.f32 %v424, 0.0
  %v673 = vmax.f32 %v427, 0.0
  %v674 = vmax.f32 %v432, 0.0
  %v675 = vmax.f32 %v435, 0.0
  %v676 = vmax.f32 %v440, 0.0
  %v677 = vmax.f32 %v443, 0.0
  %v678 = vmax.f32 %v448, 0.0
  %v679 = vmax.f32 %v451, 0.0
  %v680 = vmax.f32 %v456, 0.0
  %v681 = vmax.f32 %v459, 0.0
  %v682 = vmax.f32 %v464, 0.0
  %v683 = vmax.f32 %v467, 0.0
  %v684 = vmax.f32 %v472, 0.0
  %v685 = vmax.f32 %v475, 0.0
  %v686 = vmax.f32 %v480, 0.0
  %v687 = vmax.f32 %v483, 0.0
  %v688 = vmax.f32 %v488, 0.0
  %v689 = vmax.f32 %v491, 0.0
  %v690 = vmax.f32 %v496, 0.0
  %v691 = vmax.f32 %v499, 0.0
  %v692 = vmax.f32 %v504, 0.0
  %v693 = vmax.f32 %v507, 0.0
  %v694 = vmax.f32 %v512, 0.0
  %v695 = vmax.f32 %v515, 0.0
  %v696 = vmax.f32 %v520, 0.0
  %v697 = vmax.f32 %v523, 0.0
  %v698 = vmax.f32 %v528, 0.0
  %v699 = vmax.f32 %v531, 0.0
  %v700 = vmax.f32 %v536, 0.0
  %v701 = vmax.f32 %v539, 0.0
  %v702 = vmax.f32 %v544, 0.0
  %v703 = vmax.f32 %v547, 0.0
  %v704 = vmax.f32 %v552, 0.0
  %v705 = vmax.f32 %v555, 0.0
  %v706 = vmax.f32 %v560, 0.0
  %v707 = vmax.f32 %v563, 0.0
  %v708 = vmax.f32 %v568, 0.0
  %v709 = vmax.f32 %v571, 0.0
  %v710 = vmax.f32 %v576, 0.0
  %v711 = vmax.f32 %v579, 0.0
  %v712 = vmax.f32 %v584, 0.0
  %v713 = vmax.f32 %v587, 0.0
  %v714 = vmax.f32 %v592, 0.0
  %v715 = vmax.f32 %v595, 0.0
  %v716 = vmax.f32 %v600, 0.0
  %v717 = vmax.f32 %v603, 0.0
  %v718 = vmax.f32 %v608, 0.0
  %v719 = vmax.f32 %v611, 0.0
  %v720 = vmax.f32 %v616, 0.0
  %v721 = vmax.f32 %v619, 0.0
  %v722 = vmax.f32 %v624, 0.0
  %v723 = vmax.f32 %v627, 0.0
  %v724 = vmax.f32 %v632, 0.0
  %v725 = vmax.f32 %v635, 0.0
  %v726 = vmax.f32 %v640, 0.0
  %v727 = vmax.f32 %v643, 0.0
  %v728 = vmax.f32 %v648, 0.0
  %v729 = vmax.f32 %v651, 0.0
  %v730 = vmax.f32 %v656, 0.0
  %v731 = vmax.f32 %v659, 0.0
  %v732 = vmax.f32 %v664, 0.0
  %v733 = vmax.f32 %v667, 0.0
  %v734 = vpack.c.bf16 %v671, %v670
  %v735 = vpack.c.bf16 %v673, %v672
  %v736 = vpack.c.bf16 %v675, %v674
  %v737 = vpack.c.bf16 %v677, %v676
  %v738 = vpack.c.bf16 %v679, %v678
  %v739 = vpack.c.bf16 %v681, %v680
  %v740 = vpack.c.bf16 %v683, %v682
  %v741 = vpack.c.bf16 %v685, %v684
  %v742 = vpack.c.bf16 %v687, %v686
  %v743 = vpack.c.bf16 %v689, %v688
  %v744 = vpack.c.bf16 %v691, %v690
  %v745 = vpack.c.bf16 %v693, %v692
  %v746 = vpack.c.bf16 %v695, %v694
  %v747 = vpack.c.bf16 %v697, %v696
  %v748 = vpack.c.bf16 %v699, %v698
  %v749 = vpack.c.bf16 %v701, %v700
  %v750 = vpack.c.bf16 %v703, %v702
  %v751 = vpack.c.bf16 %v705, %v704
  %v752 = vpack.c.bf16 %v707, %v706
  %v753 = vpack.c.bf16 %v709, %v708
  %v754 = vpack.c.bf16 %v711, %v710
  %v755 = vpack.c.bf16 %v713, %v712
  %v756 = vpack.c.bf16 %v715, %v714
  %v757 = vpack.c.bf16 %v717, %v716
  %v758 = vpack.c.bf16 %v719, %v718
  %v759 = vpack.c.bf16 %v721, %v720
  %v760 = vpack.c.bf16 %v723, %v722
  %v761 = vpack.c.bf16 %v725, %v724
  %v762 = vpack.c.bf16 %v727, %v726
  %v763 = vpack.c.bf16 %v729, %v728
  %v764 = vpack.c.bf16 %v731, %v730
  %v765 = vpack.c.bf16 %v733, %v732
  %v766 = vld [vmem:[%s4] sm:$0xf]
  %v767 = vld [vmem:[%s4 + $0x4] sm:$0xf]
  %v768 = vld [vmem:[%s4 + $0x8] sm:$0xf]
  %v769 = vld [vmem:[%s4 + $0xc] sm:$0xf]
  %v770 = vld [vmem:[%s5] sm:$0x1]
  %v772 = vlaneseq
  %v773 = vshrl.u32 %v772, 7
  %v774 = vsub.s32 0, %v773
  %v775 = vrot.slane %v770, %v774
  %v781 = vunpack.c.l.b16 %v766
  %v782 = vunpack.c.l.b16 %v767
  %v783 = vunpack.c.l.b16 %v768
  %v784 = vunpack.c.l.b16 %v769
  %v785 = vpack.c.b16 %v782, %v781
  %v786 = vpack.c.b16 %v784, %v783
  %v790 = vsel %vm284, %v734, 0
  %v793 = vsel %vm284, %v735, 0
  %v796 = vsel %vm284, %v736, 0
  %v799 = vsel %vm284, %v737, 0
  %v802 = vsel %vm284, %v738, 0
  %v805 = vsel %vm284, %v739, 0
  %v808 = vsel %vm284, %v740, 0
  %v811 = vsel %vm284, %v741, 0
  %v814 = vsel %vm284, %v742, 0
  %v817 = vsel %vm284, %v743, 0
  %v820 = vsel %vm284, %v744, 0
  %v823 = vsel %vm284, %v745, 0
  %v826 = vsel %vm284, %v746, 0
  %v829 = vsel %vm284, %v747, 0
  %v832 = vsel %vm284, %v748, 0
  %v835 = vsel %vm284, %v749, 0
  %v838 = vsel %vm284, %v750, 0
  %v841 = vsel %vm284, %v751, 0
  %v844 = vsel %vm284, %v752, 0
  %v847 = vsel %vm284, %v753, 0
  %v850 = vsel %vm284, %v754, 0
  %v853 = vsel %vm284, %v755, 0
  %v856 = vsel %vm284, %v756, 0
  %v859 = vsel %vm284, %v757, 0
  %v862 = vsel %vm284, %v758, 0
  %v865 = vsel %vm284, %v759, 0
  %v868 = vsel %vm284, %v760, 0
  %v871 = vsel %vm284, %v761, 0
  %v874 = vsel %vm284, %v762, 0
  %v877 = vsel %vm284, %v763, 0
  %v880 = vsel %vm284, %v764, 0
  %v883 = vsel %vm284, %v765, 0
  %885 = vmatprep.subr.bf16.mxu0 0
  %886 = vmatpush1.bf16.msra.mxu0 0
  %887 = vmatprep.subr.bf16.mxu0 0
  %888 = vmatpush1.bf16.msra.mxu0 0
  %889 = vmatprep.subr.bf16.mxu0 0
  %890 = vmatpush1.bf16.msra.mxu0 0
  %891 = vmatprep.subr.bf16.mxu0 0
  %892 = vmatpush1.bf16.msra.mxu0 0
  %893 = vmatprep.subr.bf16.mxu0 0
  %894 = vmatpush1.bf16.msra.mxu0 0
  %895 = vmatprep.subr.bf16.mxu0 0
  %896 = vmatpush1.bf16.msra.mxu0 0
  %897 = vmatprep.subr.bf16.mxu0 0
  %898 = vmatpush1.bf16.msra.mxu0 %v786
  %899 = vmatprep.subr.bf16.mxu0 0
  %900 = vmatpush1.bf16.msra.mxu0 %v785
  %901 = vmatprep.subr.bf16.mxu0 0
  %902 = vmatpush2.bf16.msra.mxu0 0
  %903 = vmatprep.subr.bf16.mxu0 0
  %904 = vmatpush2.bf16.msra.mxu0 0
  %905 = vmatprep.subr.bf16.mxu0 0
  %906 = vmatpush2.bf16.msra.mxu0 0
  %907 = vmatprep.subr.bf16.mxu0 0
  %908 = vmatpush2.bf16.msra.mxu0 0
  %909 = vmatprep.subr.bf16.mxu0 0
  %910 = vmatpush2.bf16.msra.mxu0 0
  %911 = vmatprep.subr.bf16.mxu0 0
  %912 = vmatpush2.bf16.msra.mxu0 0
  %913 = vmatprep.subr.bf16.mxu0 0
  %914 = vmatpush2.bf16.msra.mxu0 0
  %915 = vmatprep.subr.bf16.mxu0 0
  %916 = vmatpush2.bf16.msra.mxu0 0
  %917 = vmatprep.mubr.bf16.mxu0 0
  %918 = vmatmul.mubr.bf16.gmra.mxu0 %v790
  %v919 = vpop.f32.mrf.mxu0
  %v920 = vadd.f32 %v775, %v919
  %v921 = vpop.f32.mrf.mxu0
  %v922 = vpop.f32.mrf.mxu0
  %v923 = vadd.f32 %v775, %v922
  %v924 = vpop.f32.mrf.mxu0
  %925 = vmatprep.mubr.bf16.mxu0 0
  %926 = vmatmul.mubr.bf16.gmra.mxu0 %v793
  %v927 = vpop.f32.mrf.mxu0
  %v928 = vadd.f32 %v775, %v927
  %v929 = vpop.f32.mrf.mxu0
  %v930 = vpop.f32.mrf.mxu0
  %v931 = vadd.f32 %v775, %v930
  %v932 = vpop.f32.mrf.mxu0
  %933 = vmatprep.mubr.bf16.mxu0 0
  %934 = vmatmul.mubr.bf16.gmra.mxu0 %v796
  %v935 = vpop.f32.mrf.mxu0
  %v936 = vadd.f32 %v775, %v935
  %v937 = vpop.f32.mrf.mxu0
  %v938 = vpop.f32.mrf.mxu0
  %v939 = vadd.f32 %v775, %v938
  %v940 = vpop.f32.mrf.mxu0
  %941 = vmatprep.mubr.bf16.mxu0 0
  %942 = vmatmul.mubr.bf16.gmra.mxu0 %v799
  %v943 = vpop.f32.mrf.mxu0
  %v944 = vadd.f32 %v775, %v943
  %v945 = vpop.f32.mrf.mxu0
  %v946 = vpop.f32.mrf.mxu0
  %v947 = vadd.f32 %v775, %v946
  %v948 = vpop.f32.mrf.mxu0
  %949 = vmatprep.mubr.bf16.mxu0 0
  %950 = vmatmul.mubr.bf16.gmra.mxu0 %v802
  %v951 = vpop.f32.mrf.mxu0
  %v952 = vadd.f32 %v775, %v951
  %v953 = vpop.f32.mrf.mxu0
  %v954 = vpop.f32.mrf.mxu0
  %v955 = vadd.f32 %v775, %v954
  %v956 = vpop.f32.mrf.mxu0
  %957 = vmatprep.mubr.bf16.mxu0 0
  %958 = vmatmul.mubr.bf16.gmra.mxu0 %v805
  %v959 = vpop.f32.mrf.mxu0
  %v960 = vadd.f32 %v775, %v959
  %v961 = vpop.f32.mrf.mxu0
  %v962 = vpop.f32.mrf.mxu0
  %v963 = vadd.f32 %v775, %v962
  %v964 = vpop.f32.mrf.mxu0
  %965 = vmatprep.mubr.bf16.mxu0 0
  %966 = vmatmul.mubr.bf16.gmra.mxu0 %v808
  %v967 = vpop.f32.mrf.mxu0
  %v968 = vadd.f32 %v775, %v967
  %v969 = vpop.f32.mrf.mxu0
  %v970 = vpop.f32.mrf.mxu0
  %v971 = vadd.f32 %v775, %v970
  %v972 = vpop.f32.mrf.mxu0
  %973 = vmatprep.mubr.bf16.mxu0 0
  %974 = vmatmul.mubr.bf16.gmra.mxu0 %v811
  %v975 = vpop.f32.mrf.mxu0
  %v976 = vadd.f32 %v775, %v975
  %v977 = vpop.f32.mrf.mxu0
  %v978 = vpop.f32.mrf.mxu0
  %v979 = vadd.f32 %v775, %v978
  %v980 = vpop.f32.mrf.mxu0
  %981 = vmatprep.mubr.bf16.mxu0 0
  %982 = vmatmul.mubr.bf16.gmra.mxu0 %v814
  %v983 = vpop.f32.mrf.mxu0
  %v984 = vadd.f32 %v775, %v983
  %v985 = vpop.f32.mrf.mxu0
  %v986 = vpop.f32.mrf.mxu0
  %v987 = vadd.f32 %v775, %v986
  %v988 = vpop.f32.mrf.mxu0
  %989 = vmatprep.mubr.bf16.mxu0 0
  %990 = vmatmul.mubr.bf16.gmra.mxu0 %v817
  %v991 = vpop.f32.mrf.mxu0
  %v992 = vadd.f32 %v775, %v991
  %v993 = vpop.f32.mrf.mxu0
  %v994 = vpop.f32.mrf.mxu0
  %v995 = vadd.f32 %v775, %v994
  %v996 = vpop.f32.mrf.mxu0
  %997 = vmatprep.mubr.bf16.mxu0 0
  %998 = vmatmul.mubr.bf16.gmra.mxu0 %v820
  %v999 = vpop.f32.mrf.mxu0
  %v1000 = vadd.f32 %v775, %v999
  %v1001 = vpop.f32.mrf.mxu0
  %v1002 = vpop.f32.mrf.mxu0
  %v1003 = vadd.f32 %v775, %v1002
  %v1004 = vpop.f32.mrf.mxu0
  %1005 = vmatprep.mubr.bf16.mxu0 0
  %1006 = vmatmul.mubr.bf16.gmra.mxu0 %v823
  %v1007 = vpop.f32.mrf.mxu0
  %v1008 = vadd.f32 %v775, %v1007
  %v1009 = vpop.f32.mrf.mxu0
  %v1010 = vpop.f32.mrf.mxu0
  %v1011 = vadd.f32 %v775, %v1010
  %v1012 = vpop.f32.mrf.mxu0
  %1013 = vmatprep.mubr.bf16.mxu0 0
  %1014 = vmatmul.mubr.bf16.gmra.mxu0 %v826
  %v1015 = vpop.f32.mrf.mxu0
  %v1016 = vadd.f32 %v775, %v1015
  %v1017 = vpop.f32.mrf.mxu0
  %v1018 = vpop.f32.mrf.mxu0
  %v1019 = vadd.f32 %v775, %v1018
  %v1020 = vpop.f32.mrf.mxu0
  %1021 = vmatprep.mubr.bf16.mxu0 0
  %1022 = vmatmul.mubr.bf16.gmra.mxu0 %v829
  %v1023 = vpop.f32.mrf.mxu0
  %v1024 = vadd.f32 %v775, %v1023
  %v1025 = vpop.f32.mrf.mxu0
  %v1026 = vpop.f32.mrf.mxu0
  %v1027 = vadd.f32 %v775, %v1026
  %v1028 = vpop.f32.mrf.mxu0
  %1029 = vmatprep.mubr.bf16.mxu0 0
  %1030 = vmatmul.mubr.bf16.gmra.mxu0 %v832
  %v1031 = vpop.f32.mrf.mxu0
  %v1032 = vadd.f32 %v775, %v1031
  %v1033 = vpop.f32.mrf.mxu0
  %v1034 = vpop.f32.mrf.mxu0
  %v1035 = vadd.f32 %v775, %v1034
  %v1036 = vpop.f32.mrf.mxu0
  %1037 = vmatprep.mubr.bf16.mxu0 0
  %1038 = vmatmul.mubr.bf16.gmra.mxu0 %v835
  %v1039 = vpop.f32.mrf.mxu0
  %v1040 = vadd.f32 %v775, %v1039
  %v1041 = vpop.f32.mrf.mxu0
  %v1042 = vpop.f32.mrf.mxu0
  %v1043 = vadd.f32 %v775, %v1042
  %v1044 = vpop.f32.mrf.mxu0
  %1045 = vmatprep.mubr.bf16.mxu0 0
  %1046 = vmatmul.mubr.bf16.gmra.mxu0 %v838
  %v1047 = vpop.f32.mrf.mxu0
  %v1048 = vadd.f32 %v775, %v1047
  %v1049 = vpop.f32.mrf.mxu0
  %v1050 = vpop.f32.mrf.mxu0
  %v1051 = vadd.f32 %v775, %v1050
  %v1052 = vpop.f32.mrf.mxu0
  %1053 = vmatprep.mubr.bf16.mxu0 0
  %1054 = vmatmul.mubr.bf16.gmra.mxu0 %v841
  %v1055 = vpop.f32.mrf.mxu0
  %v1056 = vadd.f32 %v775, %v1055
  %v1057 = vpop.f32.mrf.mxu0
  %v1058 = vpop.f32.mrf.mxu0
  %v1059 = vadd.f32 %v775, %v1058
  %v1060 = vpop.f32.mrf.mxu0
  %1061 = vmatprep.mubr.bf16.mxu0 0
  %1062 = vmatmul.mubr.bf16.gmra.mxu0 %v844
  %v1063 = vpop.f32.mrf.mxu0
  %v1064 = vadd.f32 %v775, %v1063
  %v1065 = vpop.f32.mrf.mxu0
  %v1066 = vpop.f32.mrf.mxu0
  %v1067 = vadd.f32 %v775, %v1066
  %v1068 = vpop.f32.mrf.mxu0
  %1069 = vmatprep.mubr.bf16.mxu0 0
  %1070 = vmatmul.mubr.bf16.gmra.mxu0 %v847
  %v1071 = vpop.f32.mrf.mxu0
  %v1072 = vadd.f32 %v775, %v1071
  %v1073 = vpop.f32.mrf.mxu0
  %v1074 = vpop.f32.mrf.mxu0
  %v1075 = vadd.f32 %v775, %v1074
  %v1076 = vpop.f32.mrf.mxu0
  %1077 = vmatprep.mubr.bf16.mxu0 0
  %1078 = vmatmul.mubr.bf16.gmra.mxu0 %v850
  %v1079 = vpop.f32.mrf.mxu0
  %v1080 = vadd.f32 %v775, %v1079
  %v1081 = vpop.f32.mrf.mxu0
  %v1082 = vpop.f32.mrf.mxu0
  %v1083 = vadd.f32 %v775, %v1082
  %v1084 = vpop.f32.mrf.mxu0
  %1085 = vmatprep.mubr.bf16.mxu0 0
  %1086 = vmatmul.mubr.bf16.gmra.mxu0 %v853
  %v1087 = vpop.f32.mrf.mxu0
  %v1088 = vadd.f32 %v775, %v1087
  %v1089 = vpop.f32.mrf.mxu0
  %v1090 = vpop.f32.mrf.mxu0
  %v1091 = vadd.f32 %v775, %v1090
  %v1092 = vpop.f32.mrf.mxu0
  %1093 = vmatprep.mubr.bf16.mxu0 0
  %1094 = vmatmul.mubr.bf16.gmra.mxu0 %v856
  %v1095 = vpop.f32.mrf.mxu0
  %v1096 = vadd.f32 %v775, %v1095
  %v1097 = vpop.f32.mrf.mxu0
  %v1098 = vpop.f32.mrf.mxu0
  %v1099 = vadd.f32 %v775, %v1098
  %v1100 = vpop.f32.mrf.mxu0
  %1101 = vmatprep.mubr.bf16.mxu0 0
  %1102 = vmatmul.mubr.bf16.gmra.mxu0 %v859
  %v1103 = vpop.f32.mrf.mxu0
  %v1104 = vadd.f32 %v775, %v1103
  %v1105 = vpop.f32.mrf.mxu0
  %v1106 = vpop.f32.mrf.mxu0
  %v1107 = vadd.f32 %v775, %v1106
  %v1108 = vpop.f32.mrf.mxu0
  %1109 = vmatprep.mubr.bf16.mxu0 0
  %1110 = vmatmul.mubr.bf16.gmra.mxu0 %v862
  %v1111 = vpop.f32.mrf.mxu0
  %v1112 = vadd.f32 %v775, %v1111
  %v1113 = vpop.f32.mrf.mxu0
  %v1114 = vpop.f32.mrf.mxu0
  %v1115 = vadd.f32 %v775, %v1114
  %v1116 = vpop.f32.mrf.mxu0
  %1117 = vmatprep.mubr.bf16.mxu0 0
  %1118 = vmatmul.mubr.bf16.gmra.mxu0 %v865
  %v1119 = vpop.f32.mrf.mxu0
  %v1120 = vadd.f32 %v775, %v1119
  %v1121 = vpop.f32.mrf.mxu0
  %v1122 = vpop.f32.mrf.mxu0
  %v1123 = vadd.f32 %v775, %v1122
  %v1124 = vpop.f32.mrf.mxu0
  %1125 = vmatprep.mubr.bf16.mxu0 0
  %1126 = vmatmul.mubr.bf16.gmra.mxu0 %v868
  %v1127 = vpop.f32.mrf.mxu0
  %v1128 = vadd.f32 %v775, %v1127
  %v1129 = vpop.f32.mrf.mxu0
  %v1130 = vpop.f32.mrf.mxu0
  %v1131 = vadd.f32 %v775, %v1130
  %v1132 = vpop.f32.mrf.mxu0
  %1133 = vmatprep.mubr.bf16.mxu0 0
  %1134 = vmatmul.mubr.bf16.gmra.mxu0 %v871
  %v1135 = vpop.f32.mrf.mxu0
  %v1136 = vadd.f32 %v775, %v1135
  %v1137 = vpop.f32.mrf.mxu0
  %v1138 = vpop.f32.mrf.mxu0
  %v1139 = vadd.f32 %v775, %v1138
  %v1140 = vpop.f32.mrf.mxu0
  %1141 = vmatprep.mubr.bf16.mxu0 0
  %1142 = vmatmul.mubr.bf16.gmra.mxu0 %v874
  %v1143 = vpop.f32.mrf.mxu0
  %v1144 = vadd.f32 %v775, %v1143
  %v1145 = vpop.f32.mrf.mxu0
  %v1146 = vpop.f32.mrf.mxu0
  %v1147 = vadd.f32 %v775, %v1146
  %v1148 = vpop.f32.mrf.mxu0
  %1149 = vmatprep.mubr.bf16.mxu0 0
  %1150 = vmatmul.mubr.bf16.gmra.mxu0 %v877
  %v1151 = vpop.f32.mrf.mxu0
  %v1152 = vadd.f32 %v775, %v1151
  %v1153 = vpop.f32.mrf.mxu0
  %v1154 = vpop.f32.mrf.mxu0
  %v1155 = vadd.f32 %v775, %v1154
  %v1156 = vpop.f32.mrf.mxu0
  %1157 = vmatprep.mubr.bf16.mxu0 0
  %1158 = vmatmul.mubr.bf16.gmra.mxu0 %v880
  %v1159 = vpop.f32.mrf.mxu0
  %v1160 = vadd.f32 %v775, %v1159
  %v1161 = vpop.f32.mrf.mxu0
  %v1162 = vpop.f32.mrf.mxu0
  %v1163 = vadd.f32 %v775, %v1162
  %v1164 = vpop.f32.mrf.mxu0
  %1165 = vmatprep.mubr.bf16.mxu0 0
  %1166 = vmatmul.mubr.bf16.gmra.mxu0 %v883
  %v1167 = vpop.f32.mrf.mxu0
  %v1168 = vadd.f32 %v775, %v1167
  %v1169 = vpop.f32.mrf.mxu0
  %v1170 = vpop.f32.mrf.mxu0
  %v1171 = vadd.f32 %v775, %v1170
  %v1172 = vpop.f32.mrf.mxu0
  %1173 = vdwg.mxu0
  %v1174 = vmax.f32 %v920, 0.0
  %v1175 = vmax.f32 %v923, 0.0
  %v1176 = vmax.f32 %v928, 0.0
  %v1177 = vmax.f32 %v931, 0.0
  %v1178 = vmax.f32 %v936, 0.0
  %v1179 = vmax.f32 %v939, 0.0
  %v1180 = vmax.f32 %v944, 0.0
  %v1181 = vmax.f32 %v947, 0.0
  %v1182 = vmax.f32 %v952, 0.0
  %v1183 = vmax.f32 %v955, 0.0
  %v1184 = vmax.f32 %v960, 0.0
  %v1185 = vmax.f32 %v963, 0.0
  %v1186 = vmax.f32 %v968, 0.0
  %v1187 = vmax.f32 %v971, 0.0
  %v1188 = vmax.f32 %v976, 0.0
  %v1189 = vmax.f32 %v979, 0.0
  %v1190 = vmax.f32 %v984, 0.0
  %v1191 = vmax.f32 %v987, 0.0
  %v1192 = vmax.f32 %v992, 0.0
  %v1193 = vmax.f32 %v995, 0.0
  %v1194 = vmax.f32 %v1000, 0.0
  %v1195 = vmax.f32 %v1003, 0.0
  %v1196 = vmax.f32 %v1008, 0.0
  %v1197 = vmax.f32 %v1011, 0.0
  %v1198 = vmax.f32 %v1016, 0.0
  %v1199 = vmax.f32 %v1019, 0.0
  %v1200 = vmax.f32 %v1024, 0.0
  %v1201 = vmax.f32 %v1027, 0.0
  %v1202 = vmax.f32 %v1032, 0.0
  %v1203 = vmax.f32 %v1035, 0.0
  %v1204 = vmax.f32 %v1040, 0.0
  %v1205 = vmax.f32 %v1043, 0.0
  %v1206 = vmax.f32 %v1048, 0.0
  %v1207 = vmax.f32 %v1051, 0.0
  %v1208 = vmax.f32 %v1056, 0.0
  %v1209 = vmax.f32 %v1059, 0.0
  %v1210 = vmax.f32 %v1064, 0.0
  %v1211 = vmax.f32 %v1067, 0.0
  %v1212 = vmax.f32 %v1072, 0.0
  %v1213 = vmax.f32 %v1075, 0.0
  %v1214 = vmax.f32 %v1080, 0.0
  %v1215 = vmax.f32 %v1083, 0.0
  %v1216 = vmax.f32 %v1088, 0.0
  %v1217 = vmax.f32 %v1091, 0.0
  %v1218 = vmax.f32 %v1096, 0.0
  %v1219 = vmax.f32 %v1099, 0.0
  %v1220 = vmax.f32 %v1104, 0.0
  %v1221 = vmax.f32 %v1107, 0.0
  %v1222 = vmax.f32 %v1112, 0.0
  %v1223 = vmax.f32 %v1115, 0.0
  %v1224 = vmax.f32 %v1120, 0.0
  %v1225 = vmax.f32 %v1123, 0.0
  %v1226 = vmax.f32 %v1128, 0.0
  %v1227 = vmax.f32 %v1131, 0.0
  %v1228 = vmax.f32 %v1136, 0.0
  %v1229 = vmax.f32 %v1139, 0.0
  %v1230 = vmax.f32 %v1144, 0.0
  %v1231 = vmax.f32 %v1147, 0.0
  %v1232 = vmax.f32 %v1152, 0.0
  %v1233 = vmax.f32 %v1155, 0.0
  %v1234 = vmax.f32 %v1160, 0.0
  %v1235 = vmax.f32 %v1163, 0.0
  %v1236 = vmax.f32 %v1168, 0.0
  %v1237 = vmax.f32 %v1171, 0.0
  %v1238 = vpack.c.bf16 %v1175, %v1174
  %v1239 = vpack.c.bf16 %v1177, %v1176
  %v1240 = vpack.c.bf16 %v1179, %v1178
  %v1241 = vpack.c.bf16 %v1181, %v1180
  %v1242 = vpack.c.bf16 %v1183, %v1182
  %v1243 = vpack.c.bf16 %v1185, %v1184
  %v1244 = vpack.c.bf16 %v1187, %v1186
  %v1245 = vpack.c.bf16 %v1189, %v1188
  %v1246 = vpack.c.bf16 %v1191, %v1190
  %v1247 = vpack.c.bf16 %v1193, %v1192
  %v1248 = vpack.c.bf16 %v1195, %v1194
  %v1249 = vpack.c.bf16 %v1197, %v1196
  %v1250 = vpack.c.bf16 %v1199, %v1198
  %v1251 = vpack.c.bf16 %v1201, %v1200
  %v1252 = vpack.c.bf16 %v1203, %v1202
  %v1253 = vpack.c.bf16 %v1205, %v1204
  %v1254 = vpack.c.bf16 %v1207, %v1206
  %v1255 = vpack.c.bf16 %v1209, %v1208
  %v1256 = vpack.c.bf16 %v1211, %v1210
  %v1257 = vpack.c.bf16 %v1213, %v1212
  %v1258 = vpack.c.bf16 %v1215, %v1214
  %v1259 = vpack.c.bf16 %v1217, %v1216
  %v1260 = vpack.c.bf16 %v1219, %v1218
  %v1261 = vpack.c.bf16 %v1221, %v1220
  %v1262 = vpack.c.bf16 %v1223, %v1222
  %v1263 = vpack.c.bf16 %v1225, %v1224
  %v1264 = vpack.c.bf16 %v1227, %v1226
  %v1265 = vpack.c.bf16 %v1229, %v1228
  %v1266 = vpack.c.bf16 %v1231, %v1230
  %v1267 = vpack.c.bf16 %v1233, %v1232
  %v1268 = vpack.c.bf16 %v1235, %v1234
  %v1269 = vpack.c.bf16 %v1237, %v1236
  %v1270 = vld [vmem:[%s6] sm:$0xf]
  %v1271 = vld [vmem:[%s6 + $0x4] sm:$0xf]
  %v1272 = vld [vmem:[%s6 + $0x8] sm:$0xf]
  %v1273 = vld [vmem:[%s6 + $0xc] sm:$0xf]
  %v1274 = vld [vmem:[%s7] sm:$0x1]
  %v1276 = vlaneseq
  %v1277 = vshrl.u32 %v1276, 7
  %v1278 = vsub.s32 0, %v1277
  %v1279 = vrot.slane %v1274, %v1278
  %v1285 = vunpack.c.l.b16 %v1270
  %v1286 = vunpack.c.l.b16 %v1271
  %v1287 = vunpack.c.l.b16 %v1272
  %v1288 = vunpack.c.l.b16 %v1273
  %v1289 = vpack.c.b16 %v1286, %v1285
  %v1290 = vpack.c.b16 %v1288, %v1287
  %v1294 = vsel %vm284, %v1238, 0
  %v1297 = vsel %vm284, %v1239, 0
  %v1300 = vsel %vm284, %v1240, 0
  %v1303 = vsel %vm284, %v1241, 0
  %v1306 = vsel %vm284, %v1242, 0
  %v1309 = vsel %vm284, %v1243, 0
  %v1312 = vsel %vm284, %v1244, 0
  %v1315 = vsel %vm284, %v1245, 0
  %v1318 = vsel %vm284, %v1246, 0
  %v1321 = vsel %vm284, %v1247, 0
  %v1324 = vsel %vm284, %v1248, 0
  %v1327 = vsel %vm284, %v1249, 0
  %v1330 = vsel %vm284, %v1250, 0
  %v1333 = vsel %vm284, %v1251, 0
  %v1336 = vsel %vm284, %v1252, 0
  %v1339 = vsel %vm284, %v1253, 0
  %v1342 = vsel %vm284, %v1254, 0
  %v1345 = vsel %vm284, %v1255, 0
  %v1348 = vsel %vm284, %v1256, 0
  %v1351 = vsel %vm284, %v1257, 0
  %v1354 = vsel %vm284, %v1258, 0
  %v1357 = vsel %vm284, %v1259, 0
  %v1360 = vsel %vm284, %v1260, 0
  %v1363 = vsel %vm284, %v1261, 0
  %v1366 = vsel %vm284, %v1262, 0
  %v1369 = vsel %vm284, %v1263, 0
  %v1372 = vsel %vm284, %v1264, 0
  %v1375 = vsel %vm284, %v1265, 0
  %v1378 = vsel %vm284, %v1266, 0
  %v1381 = vsel %vm284, %v1267, 0
  %v1384 = vsel %vm284, %v1268, 0
  %v1387 = vsel %vm284, %v1269, 0
  %1389 = vmatprep.subr.bf16.mxu0 0
  %1390 = vmatpush1.bf16.msra.mxu0 0
  %1391 = vmatprep.subr.bf16.mxu0 0
  %1392 = vmatpush1.bf16.msra.mxu0 0
  %1393 = vmatprep.subr.bf16.mxu0 0
  %1394 = vmatpush1.bf16.msra.mxu0 0
  %1395 = vmatprep.subr.bf16.mxu0 0
  %1396 = vmatpush1.bf16.msra.mxu0 0
  %1397 = vmatprep.subr.bf16.mxu0 0
  %1398 = vmatpush1.bf16.msra.mxu0 0
  %1399 = vmatprep.subr.bf16.mxu0 0
  %1400 = vmatpush1.bf16.msra.mxu0 0
  %1401 = vmatprep.subr.bf16.mxu0 0
  %1402 = vmatpush1.bf16.msra.mxu0 %v1290
  %1403 = vmatprep.subr.bf16.mxu0 0
  %1404 = vmatpush1.bf16.msra.mxu0 %v1289
  %1405 = vmatprep.subr.bf16.mxu0 0
  %1406 = vmatpush2.bf16.msra.mxu0 0
  %1407 = vmatprep.subr.bf16.mxu0 0
  %1408 = vmatpush2.bf16.msra.mxu0 0
  %1409 = vmatprep.subr.bf16.mxu0 0
  %1410 = vmatpush2.bf16.msra.mxu0 0
  %1411 = vmatprep.subr.bf16.mxu0 0
  %1412 = vmatpush2.bf16.msra.mxu0 0
  %1413 = vmatprep.subr.bf16.mxu0 0
  %1414 = vmatpush2.bf16.msra.mxu0 0
  %1415 = vmatprep.subr.bf16.mxu0 0
  %1416 = vmatpush2.bf16.msra.mxu0 0
  %1417 = vmatprep.subr.bf16.mxu0 0
  %1418 = vmatpush2.bf16.msra.mxu0 0
  %1419 = vmatprep.subr.bf16.mxu0 0
  %1420 = vmatpush2.bf16.msra.mxu0 0
  %1421 = vmatprep.mubr.bf16.mxu0 0
  %1422 = vmatmul.mubr.bf16.gmra.mxu0 %v1294
  %v1423 = vpop.f32.mrf.mxu0
  %v1424 = vadd.f32 %v1279, %v1423
  %v1425 = vpop.f32.mrf.mxu0
  %v1426 = vpop.f32.mrf.mxu0
  %v1427 = vadd.f32 %v1279, %v1426
  %v1428 = vpop.f32.mrf.mxu0
  %1429 = vmatprep.mubr.bf16.mxu0 0
  %1430 = vmatmul.mubr.bf16.gmra.mxu0 %v1297
  %v1431 = vpop.f32.mrf.mxu0
  %v1432 = vadd.f32 %v1279, %v1431
  %v1433 = vpop.f32.mrf.mxu0
  %v1434 = vpop.f32.mrf.mxu0
  %v1435 = vadd.f32 %v1279, %v1434
  %v1436 = vpop.f32.mrf.mxu0
  %1437 = vmatprep.mubr.bf16.mxu0 0
  %1438 = vmatmul.mubr.bf16.gmra.mxu0 %v1300
  %v1439 = vpop.f32.mrf.mxu0
  %v1440 = vadd.f32 %v1279, %v1439
  %v1441 = vpop.f32.mrf.mxu0
  %v1442 = vpop.f32.mrf.mxu0
  %v1443 = vadd.f32 %v1279, %v1442
  %v1444 = vpop.f32.mrf.mxu0
  %1445 = vmatprep.mubr.bf16.mxu0 0
  %1446 = vmatmul.mubr.bf16.gmra.mxu0 %v1303
  %v1447 = vpop.f32.mrf.mxu0
  %v1448 = vadd.f32 %v1279, %v1447
  %v1449 = vpop.f32.mrf.mxu0
  %v1450 = vpop.f32.mrf.mxu0
  %v1451 = vadd.f32 %v1279, %v1450
  %v1452 = vpop.f32.mrf.mxu0
  %1453 = vmatprep.mubr.bf16.mxu0 0
  %1454 = vmatmul.mubr.bf16.gmra.mxu0 %v1306
  %v1455 = vpop.f32.mrf.mxu0
  %v1456 = vadd.f32 %v1279, %v1455
  %v1457 = vpop.f32.mrf.mxu0
  %v1458 = vpop.f32.mrf.mxu0
  %v1459 = vadd.f32 %v1279, %v1458
  %v1460 = vpop.f32.mrf.mxu0
  %1461 = vmatprep.mubr.bf16.mxu0 0
  %1462 = vmatmul.mubr.bf16.gmra.mxu0 %v1309
  %v1463 = vpop.f32.mrf.mxu0
  %v1464 = vadd.f32 %v1279, %v1463
  %v1465 = vpop.f32.mrf.mxu0
  %v1466 = vpop.f32.mrf.mxu0
  %v1467 = vadd.f32 %v1279, %v1466
  %v1468 = vpop.f32.mrf.mxu0
  %1469 = vmatprep.mubr.bf16.mxu0 0
  %1470 = vmatmul.mubr.bf16.gmra.mxu0 %v1312
  %v1471 = vpop.f32.mrf.mxu0
  %v1472 = vadd.f32 %v1279, %v1471
  %v1473 = vpop.f32.mrf.mxu0
  %v1474 = vpop.f32.mrf.mxu0
  %v1475 = vadd.f32 %v1279, %v1474
  %v1476 = vpop.f32.mrf.mxu0
  %1477 = vmatprep.mubr.bf16.mxu0 0
  %1478 = vmatmul.mubr.bf16.gmra.mxu0 %v1315
  %v1479 = vpop.f32.mrf.mxu0
  %v1480 = vadd.f32 %v1279, %v1479
  %v1481 = vpop.f32.mrf.mxu0
  %v1482 = vpop.f32.mrf.mxu0
  %v1483 = vadd.f32 %v1279, %v1482
  %v1484 = vpop.f32.mrf.mxu0
  %1485 = vmatprep.mubr.bf16.mxu0 0
  %1486 = vmatmul.mubr.bf16.gmra.mxu0 %v1318
  %v1487 = vpop.f32.mrf.mxu0
  %v1488 = vadd.f32 %v1279, %v1487
  %v1489 = vpop.f32.mrf.mxu0
  %v1490 = vpop.f32.mrf.mxu0
  %v1491 = vadd.f32 %v1279, %v1490
  %v1492 = vpop.f32.mrf.mxu0
  %1493 = vmatprep.mubr.bf16.mxu0 0
  %1494 = vmatmul.mubr.bf16.gmra.mxu0 %v1321
  %v1495 = vpop.f32.mrf.mxu0
  %v1496 = vadd.f32 %v1279, %v1495
  %v1497 = vpop.f32.mrf.mxu0
  %v1498 = vpop.f32.mrf.mxu0
  %v1499 = vadd.f32 %v1279, %v1498
  %v1500 = vpop.f32.mrf.mxu0
  %1501 = vmatprep.mubr.bf16.mxu0 0
  %1502 = vmatmul.mubr.bf16.gmra.mxu0 %v1324
  %v1503 = vpop.f32.mrf.mxu0
  %v1504 = vadd.f32 %v1279, %v1503
  %v1505 = vpop.f32.mrf.mxu0
  %v1506 = vpop.f32.mrf.mxu0
  %v1507 = vadd.f32 %v1279, %v1506
  %v1508 = vpop.f32.mrf.mxu0
  %1509 = vmatprep.mubr.bf16.mxu0 0
  %1510 = vmatmul.mubr.bf16.gmra.mxu0 %v1327
  %v1511 = vpop.f32.mrf.mxu0
  %v1512 = vadd.f32 %v1279, %v1511
  %v1513 = vpop.f32.mrf.mxu0
  %v1514 = vpop.f32.mrf.mxu0
  %v1515 = vadd.f32 %v1279, %v1514
  %v1516 = vpop.f32.mrf.mxu0
  %1517 = vmatprep.mubr.bf16.mxu0 0
  %1518 = vmatmul.mubr.bf16.gmra.mxu0 %v1330
  %v1519 = vpop.f32.mrf.mxu0
  %v1520 = vadd.f32 %v1279, %v1519
  %v1521 = vpop.f32.mrf.mxu0
  %v1522 = vpop.f32.mrf.mxu0
  %v1523 = vadd.f32 %v1279, %v1522
  %v1524 = vpop.f32.mrf.mxu0
  %1525 = vmatprep.mubr.bf16.mxu0 0
  %1526 = vmatmul.mubr.bf16.gmra.mxu0 %v1333
  %v1527 = vpop.f32.mrf.mxu0
  %v1528 = vadd.f32 %v1279, %v1527
  %v1529 = vpop.f32.mrf.mxu0
  %v1530 = vpop.f32.mrf.mxu0
  %v1531 = vadd.f32 %v1279, %v1530
  %v1532 = vpop.f32.mrf.mxu0
  %1533 = vmatprep.mubr.bf16.mxu0 0
  %1534 = vmatmul.mubr.bf16.gmra.mxu0 %v1336
  %v1535 = vpop.f32.mrf.mxu0
  %v1536 = vadd.f32 %v1279, %v1535
  %v1537 = vpop.f32.mrf.mxu0
  %v1538 = vpop.f32.mrf.mxu0
  %v1539 = vadd.f32 %v1279, %v1538
  %v1540 = vpop.f32.mrf.mxu0
  %1541 = vmatprep.mubr.bf16.mxu0 0
  %1542 = vmatmul.mubr.bf16.gmra.mxu0 %v1339
  %v1543 = vpop.f32.mrf.mxu0
  %v1544 = vadd.f32 %v1279, %v1543
  %v1545 = vpop.f32.mrf.mxu0
  %v1546 = vpop.f32.mrf.mxu0
  %v1547 = vadd.f32 %v1279, %v1546
  %v1548 = vpop.f32.mrf.mxu0
  %1549 = vmatprep.mubr.bf16.mxu0 0
  %1550 = vmatmul.mubr.bf16.gmra.mxu0 %v1342
  %v1551 = vpop.f32.mrf.mxu0
  %v1552 = vadd.f32 %v1279, %v1551
  %v1553 = vpop.f32.mrf.mxu0
  %v1554 = vpop.f32.mrf.mxu0
  %v1555 = vadd.f32 %v1279, %v1554
  %v1556 = vpop.f32.mrf.mxu0
  %1557 = vmatprep.mubr.bf16.mxu0 0
  %1558 = vmatmul.mubr.bf16.gmra.mxu0 %v1345
  %v1559 = vpop.f32.mrf.mxu0
  %v1560 = vadd.f32 %v1279, %v1559
  %v1561 = vpop.f32.mrf.mxu0
  %v1562 = vpop.f32.mrf.mxu0
  %v1563 = vadd.f32 %v1279, %v1562
  %v1564 = vpop.f32.mrf.mxu0
  %1565 = vmatprep.mubr.bf16.mxu0 0
  %1566 = vmatmul.mubr.bf16.gmra.mxu0 %v1348
  %v1567 = vpop.f32.mrf.mxu0
  %v1568 = vadd.f32 %v1279, %v1567
  %v1569 = vpop.f32.mrf.mxu0
  %v1570 = vpop.f32.mrf.mxu0
  %v1571 = vadd.f32 %v1279, %v1570
  %v1572 = vpop.f32.mrf.mxu0
  %1573 = vmatprep.mubr.bf16.mxu0 0
  %1574 = vmatmul.mubr.bf16.gmra.mxu0 %v1351
  %v1575 = vpop.f32.mrf.mxu0
  %v1576 = vadd.f32 %v1279, %v1575
  %v1577 = vpop.f32.mrf.mxu0
  %v1578 = vpop.f32.mrf.mxu0
  %v1579 = vadd.f32 %v1279, %v1578
  %v1580 = vpop.f32.mrf.mxu0
  %1581 = vmatprep.mubr.bf16.mxu0 0
  %1582 = vmatmul.mubr.bf16.gmra.mxu0 %v1354
  %v1583 = vpop.f32.mrf.mxu0
  %v1584 = vadd.f32 %v1279, %v1583
  %v1585 = vpop.f32.mrf.mxu0
  %v1586 = vpop.f32.mrf.mxu0
  %v1587 = vadd.f32 %v1279, %v1586
  %v1588 = vpop.f32.mrf.mxu0
  %1589 = vmatprep.mubr.bf16.mxu0 0
  %1590 = vmatmul.mubr.bf16.gmra.mxu0 %v1357
  %v1591 = vpop.f32.mrf.mxu0
  %v1592 = vadd.f32 %v1279, %v1591
  %v1593 = vpop.f32.mrf.mxu0
  %v1594 = vpop.f32.mrf.mxu0
  %v1595 = vadd.f32 %v1279, %v1594
  %v1596 = vpop.f32.mrf.mxu0
  %1597 = vmatprep.mubr.bf16.mxu0 0
  %1598 = vmatmul.mubr.bf16.gmra.mxu0 %v1360
  %v1599 = vpop.f32.mrf.mxu0
  %v1600 = vadd.f32 %v1279, %v1599
  %v1601 = vpop.f32.mrf.mxu0
  %v1602 = vpop.f32.mrf.mxu0
  %v1603 = vadd.f32 %v1279, %v1602
  %v1604 = vpop.f32.mrf.mxu0
  %1605 = vmatprep.mubr.bf16.mxu0 0
  %1606 = vmatmul.mubr.bf16.gmra.mxu0 %v1363
  %v1607 = vpop.f32.mrf.mxu0
  %v1608 = vadd.f32 %v1279, %v1607
  %v1609 = vpop.f32.mrf.mxu0
  %v1610 = vpop.f32.mrf.mxu0
  %v1611 = vadd.f32 %v1279, %v1610
  %v1612 = vpop.f32.mrf.mxu0
  %1613 = vmatprep.mubr.bf16.mxu0 0
  %1614 = vmatmul.mubr.bf16.gmra.mxu0 %v1366
  %v1615 = vpop.f32.mrf.mxu0
  %v1616 = vadd.f32 %v1279, %v1615
  %v1617 = vpop.f32.mrf.mxu0
  %v1618 = vpop.f32.mrf.mxu0
  %v1619 = vadd.f32 %v1279, %v1618
  %v1620 = vpop.f32.mrf.mxu0
  %1621 = vmatprep.mubr.bf16.mxu0 0
  %1622 = vmatmul.mubr.bf16.gmra.mxu0 %v1369
  %v1623 = vpop.f32.mrf.mxu0
  %v1624 = vadd.f32 %v1279, %v1623
  %v1625 = vpop.f32.mrf.mxu0
  %v1626 = vpop.f32.mrf.mxu0
  %v1627 = vadd.f32 %v1279, %v1626
  %v1628 = vpop.f32.mrf.mxu0
  %1629 = vmatprep.mubr.bf16.mxu0 0
  %1630 = vmatmul.mubr.bf16.gmra.mxu0 %v1372
  %v1631 = vpop.f32.mrf.mxu0
  %v1632 = vadd.f32 %v1279, %v1631
  %v1633 = vpop.f32.mrf.mxu0
  %v1634 = vpop.f32.mrf.mxu0
  %v1635 = vadd.f32 %v1279, %v1634
  %v1636 = vpop.f32.mrf.mxu0
  %1637 = vmatprep.mubr.bf16.mxu0 0
  %1638 = vmatmul.mubr.bf16.gmra.mxu0 %v1375
  %v1639 = vpop.f32.mrf.mxu0
  %v1640 = vadd.f32 %v1279, %v1639
  %v1641 = vpop.f32.mrf.mxu0
  %v1642 = vpop.f32.mrf.mxu0
  %v1643 = vadd.f32 %v1279, %v1642
  %v1644 = vpop.f32.mrf.mxu0
  %1645 = vmatprep.mubr.bf16.mxu0 0
  %1646 = vmatmul.mubr.bf16.gmra.mxu0 %v1378
  %v1647 = vpop.f32.mrf.mxu0
  %v1648 = vadd.f32 %v1279, %v1647
  %v1649 = vpop.f32.mrf.mxu0
  %v1650 = vpop.f32.mrf.mxu0
  %v1651 = vadd.f32 %v1279, %v1650
  %v1652 = vpop.f32.mrf.mxu0
  %1653 = vmatprep.mubr.bf16.mxu0 0
  %1654 = vmatmul.mubr.bf16.gmra.mxu0 %v1381
  %v1655 = vpop.f32.mrf.mxu0
  %v1656 = vadd.f32 %v1279, %v1655
  %v1657 = vpop.f32.mrf.mxu0
  %v1658 = vpop.f32.mrf.mxu0
  %v1659 = vadd.f32 %v1279, %v1658
  %v1660 = vpop.f32.mrf.mxu0
  %1661 = vmatprep.mubr.bf16.mxu0 0
  %1662 = vmatmul.mubr.bf16.gmra.mxu0 %v1384
  %v1663 = vpop.f32.mrf.mxu0
  %v1664 = vadd.f32 %v1279, %v1663
  %v1665 = vpop.f32.mrf.mxu0
  %v1666 = vpop.f32.mrf.mxu0
  %v1667 = vadd.f32 %v1279, %v1666
  %v1668 = vpop.f32.mrf.mxu0
  %1669 = vmatprep.mubr.bf16.mxu0 0
  %1670 = vmatmul.mubr.bf16.gmra.mxu0 %v1387
  %v1671 = vpop.f32.mrf.mxu0
  %v1672 = vadd.f32 %v1279, %v1671
  %v1673 = vpop.f32.mrf.mxu0
  %v1674 = vpop.f32.mrf.mxu0
  %v1675 = vadd.f32 %v1279, %v1674
  %v1676 = vpop.f32.mrf.mxu0
  %1677 = vdwg.mxu0
  %1678 = vst.msk [vmem:[%s9] sm:$0xff] %vm284, %v1424
  %1679 = vst.msk [vmem:[%s9 + $0x8] sm:$0xff] %vm284, %v1427
  %1680 = vst.msk [vmem:[%s9 + $0x10] sm:$0xff] %vm284, %v1432
  %1681 = vst.msk [vmem:[%s9 + $0x18] sm:$0xff] %vm284, %v1435
  %1682 = vst.msk [vmem:[%s9 + $0x20] sm:$0xff] %vm284, %v1440
  %1683 = vst.msk [vmem:[%s9 + $0x28] sm:$0xff] %vm284, %v1443
  %1684 = vst.msk [vmem:[%s9 + $0x30] sm:$0xff] %vm284, %v1448
  %1685 = vst.msk [vmem:[%s9 + $0x38] sm:$0xff] %vm284, %v1451
  %1686 = vst.msk [vmem:[%s9 + $0x40] sm:$0xff] %vm284, %v1456
  %1687 = vst.msk [vmem:[%s9 + $0x48] sm:$0xff] %vm284, %v1459
  %1688 = vst.msk [vmem:[%s9 + $0x50] sm:$0xff] %vm284, %v1464
  %1689 = vst.msk [vmem:[%s9 + $0x58] sm:$0xff] %vm284, %v1467
  %1690 = vst.msk [vmem:[%s9 + $0x60] sm:$0xff] %vm284, %v1472
  %1691 = vst.msk [vmem:[%s9 + $0x68] sm:$0xff] %vm284, %v1475
  %1692 = vst.msk [vmem:[%s9 + $0x70] sm:$0xff] %vm284, %v1480
  %1693 = vst.msk [vmem:[%s9 + $0x78] sm:$0xff] %vm284, %v1483
  %1694 = vst.msk [vmem:[%s9 + $0x80] sm:$0xff] %vm284, %v1488
  %1695 = vst.msk [vmem:[%s9 + $0x88] sm:$0xff] %vm284, %v1491
  %1696 = vst.msk [vmem:[%s9 + $0x90] sm:$0xff] %vm284, %v1496
  %1697 = vst.msk [vmem:[%s9 + $0x98] sm:$0xff] %vm284, %v1499
  %1698 = vst.msk [vmem:[%s9 + $0xa0] sm:$0xff] %vm284, %v1504
  %1699 = vst.msk [vmem:[%s9 + $0xa8] sm:$0xff] %vm284, %v1507
  %1700 = vst.msk [vmem:[%s9 + $0xb0] sm:$0xff] %vm284, %v1512
  %1701 = vst.msk [vmem:[%s9 + $0xb8] sm:$0xff] %vm284, %v1515
  %1702 = vst.msk [vmem:[%s9 + $0xc0] sm:$0xff] %vm284, %v1520
  %1703 = vst.msk [vmem:[%s9 + $0xc8] sm:$0xff] %vm284, %v1523
  %1704 = vst.msk [vmem:[%s9 + $0xd0] sm:$0xff] %vm284, %v1528
  %1705 = vst.msk [vmem:[%s9 + $0xd8] sm:$0xff] %vm284, %v1531
  %1706 = vst.msk [vmem:[%s9 + $0xe0] sm:$0xff] %vm284, %v1536
  %1707 = vst.msk [vmem:[%s9 + $0xe8] sm:$0xff] %vm284, %v1539
  %1708 = vst.msk [vmem:[%s9 + $0xf0] sm:$0xff] %vm284, %v1544
  %1709 = vst.msk [vmem:[%s9 + $0xf8] sm:$0xff] %vm284, %v1547
  %1710 = vst.msk [vmem:[%s9 + $0x100] sm:$0xff] %vm284, %v1552
  %1711 = vst.msk [vmem:[%s9 + $0x108] sm:$0xff] %vm284, %v1555
  %1712 = vst.msk [vmem:[%s9 + $0x110] sm:$0xff] %vm284, %v1560
  %1713 = vst.msk [vmem:[%s9 + $0x118] sm:$0xff] %vm284, %v1563
  %1714 = vst.msk [vmem:[%s9 + $0x120] sm:$0xff] %vm284, %v1568
  %1715 = vst.msk [vmem:[%s9 + $0x128] sm:$0xff] %vm284, %v1571
  %1716 = vst.msk [vmem:[%s9 + $0x130] sm:$0xff] %vm284, %v1576
  %1717 = vst.msk [vmem:[%s9 + $0x138] sm:$0xff] %vm284, %v1579
  %1718 = vst.msk [vmem:[%s9 + $0x140] sm:$0xff] %vm284, %v1584
  %1719 = vst.msk [vmem:[%s9 + $0x148] sm:$0xff] %vm284, %v1587
  %1720 = vst.msk [vmem:[%s9 + $0x150] sm:$0xff] %vm284, %v1592
  %1721 = vst.msk [vmem:[%s9 + $0x158] sm:$0xff] %vm284, %v1595
  %1722 = vst.msk [vmem:[%s9 + $0x160] sm:$0xff] %vm284, %v1600
  %1723 = vst.msk [vmem:[%s9 + $0x168] sm:$0xff] %vm284, %v1603
  %1724 = vst.msk [vmem:[%s9 + $0x170] sm:$0xff] %vm284, %v1608
  %1725 = vst.msk [vmem:[%s9 + $0x178] sm:$0xff] %vm284, %v1611
  %1726 = vst.msk [vmem:[%s9 + $0x180] sm:$0xff] %vm284, %v1616
  %1727 = vst.msk [vmem:[%s9 + $0x188] sm:$0xff] %vm284, %v1619
  %1728 = vst.msk [vmem:[%s9 + $0x190] sm:$0xff] %vm284, %v1624
  %1729 = vst.msk [vmem:[%s9 + $0x198] sm:$0xff] %vm284, %v1627
  %1730 = vst.msk [vmem:[%s9 + $0x1a0] sm:$0xff] %vm284, %v1632
  %1731 = vst.msk [vmem:[%s9 + $0x1a8] sm:$0xff] %vm284, %v1635
  %1732 = vst.msk [vmem:[%s9 + $0x1b0] sm:$0xff] %vm284, %v1640
  %1733 = vst.msk [vmem:[%s9 + $0x1b8] sm:$0xff] %vm284, %v1643
  %1734 = vst.msk [vmem:[%s9 + $0x1c0] sm:$0xff] %vm284, %v1648
  %1735 = vst.msk [vmem:[%s9 + $0x1c8] sm:$0xff] %vm284, %v1651
  %1736 = vst.msk [vmem:[%s9 + $0x1d0] sm:$0xff] %vm284, %v1656
  %1737 = vst.msk [vmem:[%s9 + $0x1d8] sm:$0xff] %vm284, %v1659
  %1738 = vst.msk [vmem:[%s9 + $0x1e0] sm:$0xff] %vm284, %v1664
  %1739 = vst.msk [vmem:[%s9 + $0x1e8] sm:$0xff] %vm284, %v1667
  %1740 = vst.msk [vmem:[%s9 + $0x1f0] sm:$0xff] %vm284, %v1672
  %1741 = vst.msk [vmem:[%s9 + $0x1f8] sm:$0xff] %vm284, %v1675
  %v1742 = vxor.u32 %v1424, 2147483648
  %v1743 = vxor.u32 %v1427, 2147483648
  %v1744 = vxor.u32 %v1432, 2147483648
  %v1745 = vxor.u32 %v1435, 2147483648
  %v1746 = vxor.u32 %v1440, 2147483648
  %v1747 = vxor.u32 %v1443, 2147483648
  %v1748 = vxor.u32 %v1448, 2147483648
  %v1749 = vxor.u32 %v1451, 2147483648
  %v1750 = vxor.u32 %v1456, 2147483648
  %v1751 = vxor.u32 %v1459, 2147483648
  %v1752 = vxor.u32 %v1464, 2147483648
  %v1753 = vxor.u32 %v1467, 2147483648
  %v1754 = vxor.u32 %v1472, 2147483648
  %v1755 = vxor.u32 %v1475, 2147483648
  %v1756 = vxor.u32 %v1480, 2147483648
  %v1757 = vxor.u32 %v1483, 2147483648
  %v1758 = vxor.u32 %v1488, 2147483648
  %v1759 = vxor.u32 %v1491, 2147483648
  %v1760 = vxor.u32 %v1496, 2147483648
  %v1761 = vxor.u32 %v1499, 2147483648
  %v1762 = vxor.u32 %v1504, 2147483648
  %v1763 = vxor.u32 %v1507, 2147483648
  %v1764 = vxor.u32 %v1512, 2147483648
  %v1765 = vxor.u32 %v1515, 2147483648
  %v1766 = vxor.u32 %v1520, 2147483648
  %v1767 = vxor.u32 %v1523, 2147483648
  %v1768 = vxor.u32 %v1528, 2147483648
  %v1769 = vxor.u32 %v1531, 2147483648
  %v1770 = vxor.u32 %v1536, 2147483648
  %v1771 = vxor.u32 %v1539, 2147483648
  %v1772 = vxor.u32 %v1544, 2147483648
  %v1773 = vxor.u32 %v1547, 2147483648
  %v1774 = vxor.u32 %v1552, 2147483648
  %v1775 = vxor.u32 %v1555, 2147483648
  %v1776 = vxor.u32 %v1560, 2147483648
  %v1777 = vxor.u32 %v1563, 2147483648
  %v1778 = vxor.u32 %v1568, 2147483648
  %v1779 = vxor.u32 %v1571, 2147483648
  %v1780 = vxor.u32 %v1576, 2147483648
  %v1781 = vxor.u32 %v1579, 2147483648
  %v1782 = vxor.u32 %v1584, 2147483648
  %v1783 = vxor.u32 %v1587, 2147483648
  %v1784 = vxor.u32 %v1592, 2147483648
  %v1785 = vxor.u32 %v1595, 2147483648
  %v1786 = vxor.u32 %v1600, 2147483648
  %v1787 = vxor.u32 %v1603, 2147483648
  %v1788 = vxor.u32 %v1608, 2147483648
  %v1789 = vxor.u32 %v1611, 2147483648
  %v1790 = vxor.u32 %v1616, 2147483648
  %v1791 = vxor.u32 %v1619, 2147483648
  %v1792 = vxor.u32 %v1624, 2147483648
  %v1793 = vxor.u32 %v1627, 2147483648
  %v1794 = vxor.u32 %v1632, 2147483648
  %v1795 = vxor.u32 %v1635, 2147483648
  %v1796 = vxor.u32 %v1640, 2147483648
  %v1797 = vxor.u32 %v1643, 2147483648
  %v1798 = vxor.u32 %v1648, 2147483648
  %v1799 = vxor.u32 %v1651, 2147483648
  %v1800 = vxor.u32 %v1656, 2147483648
  %v1801 = vxor.u32 %v1659, 2147483648
  %v1802 = vxor.u32 %v1664, 2147483648
  %v1803 = vxor.u32 %v1667, 2147483648
  %v1804 = vxor.u32 %v1672, 2147483648
  %v1805 = vxor.u32 %v1675, 2147483648
  %v1806 = vmul.f32 %v1742, 1.442695
  %v1807 = vpow.pop %v1806
  %v1808 = vmul.f32 %v1743, 1.442695
  %v1809 = vpow.pop %v1808
  %v1810 = vmul.f32 %v1744, 1.442695
  %v1811 = vpow.pop %v1810
  %v1812 = vmul.f32 %v1745, 1.442695
  %v1813 = vpow.pop %v1812
  %v1814 = vmul.f32 %v1746, 1.442695
  %v1815 = vpow.pop %v1814
  %v1816 = vmul.f32 %v1747, 1.442695
  %v1817 = vpow.pop %v1816
  %v1818 = vmul.f32 %v1748, 1.442695
  %v1819 = vpow.pop %v1818
  %v1820 = vmul.f32 %v1749, 1.442695
  %v1821 = vpow.pop %v1820
  %v1822 = vmul.f32 %v1750, 1.442695
  %v1823 = vpow.pop %v1822
  %v1824 = vmul.f32 %v1751, 1.442695
  %v1825 = vpow.pop %v1824
  %v1826 = vmul.f32 %v1752, 1.442695
  %v1827 = vpow.pop %v1826
  %v1828 = vmul.f32 %v1753, 1.442695
  %v1829 = vpow.pop %v1828
  %v1830 = vmul.f32 %v1754, 1.442695
  %v1831 = vpow.pop %v1830
  %v1832 = vmul.f32 %v1755, 1.442695
  %v1833 = vpow.pop %v1832
  %v1834 = vmul.f32 %v1756, 1.442695
  %v1835 = vpow.pop %v1834
  %v1836 = vmul.f32 %v1757, 1.442695
  %v1837 = vpow.pop %v1836
  %v1838 = vmul.f32 %v1758, 1.442695
  %v1839 = vpow.pop %v1838
  %v1840 = vmul.f32 %v1759, 1.442695
  %v1841 = vpow.pop %v1840
  %v1842 = vmul.f32 %v1760, 1.442695
  %v1843 = vpow.pop %v1842
  %v1844 = vmul.f32 %v1761, 1.442695
  %v1845 = vpow.pop %v1844
  %v1846 = vmul.f32 %v1762, 1.442695
  %v1847 = vpow.pop %v1846
  %v1848 = vmul.f32 %v1763, 1.442695
  %v1849 = vpow.pop %v1848
  %v1850 = vmul.f32 %v1764, 1.442695
  %v1851 = vpow.pop %v1850
  %v1852 = vmul.f32 %v1765, 1.442695
  %v1853 = vpow.pop %v1852
  %v1854 = vmul.f32 %v1766, 1.442695
  %v1855 = vpow.pop %v1854
  %v1856 = vmul.f32 %v1767, 1.442695
  %v1857 = vpow.pop %v1856
  %v1858 = vmul.f32 %v1768, 1.442695
  %v1859 = vpow.pop %v1858
  %v1860 = vmul.f32 %v1769, 1.442695
  %v1861 = vpow.pop %v1860
  %v1862 = vmul.f32 %v1770, 1.442695
  %v1863 = vpow.pop %v1862
  %v1864 = vmul.f32 %v1771, 1.442695
  %v1865 = vpow.pop %v1864
  %v1866 = vmul.f32 %v1772, 1.442695
  %v1867 = vpow.pop %v1866
  %v1868 = vmul.f32 %v1773, 1.442695
  %v1869 = vpow.pop %v1868
  %v1870 = vmul.f32 %v1774, 1.442695
  %v1871 = vpow.pop %v1870
  %v1872 = vmul.f32 %v1775, 1.442695
  %v1873 = vpow.pop %v1872
  %v1874 = vmul.f32 %v1776, 1.442695
  %v1875 = vpow.pop %v1874
  %v1876 = vmul.f32 %v1777, 1.442695
  %v1877 = vpow.pop %v1876
  %v1878 = vmul.f32 %v1778, 1.442695
  %v1879 = vpow.pop %v1878
  %v1880 = vmul.f32 %v1779, 1.442695
  %v1881 = vpow.pop %v1880
  %v1882 = vmul.f32 %v1780, 1.442695
  %v1883 = vpow.pop %v1882
  %v1884 = vmul.f32 %v1781, 1.442695
  %v1885 = vpow.pop %v1884
  %v1886 = vmul.f32 %v1782, 1.442695
  %v1887 = vpow.pop %v1886
  %v1888 = vmul.f32 %v1783, 1.442695
  %v1889 = vpow.pop %v1888
  %v1890 = vmul.f32 %v1784, 1.442695
  %v1891 = vpow.pop %v1890
  %v1892 = vmul.f32 %v1785, 1.442695
  %v1893 = vpow.pop %v1892
  %v1894 = vmul.f32 %v1786, 1.442695
  %v1895 = vpow.pop %v1894
  %v1896 = vmul.f32 %v1787, 1.442695
  %v1897 = vpow.pop %v1896
  %v1898 = vmul.f32 %v1788, 1.442695
  %v1899 = vpow.pop %v1898
  %v1900 = vmul.f32 %v1789, 1.442695
  %v1901 = vpow.pop %v1900
  %v1902 = vmul.f32 %v1790, 1.442695
  %v1903 = vpow.pop %v1902
  %v1904 = vmul.f32 %v1791, 1.442695
  %v1905 = vpow.pop %v1904
  %v1906 = vmul.f32 %v1792, 1.442695
  %v1907 = vpow.pop %v1906
  %v1908 = vmul.f32 %v1793, 1.442695
  %v1909 = vpow.pop %v1908
  %v1910 = vmul.f32 %v1794, 1.442695
  %v1911 = vpow.pop %v1910
  %v1912 = vmul.f32 %v1795, 1.442695
  %v1913 = vpow.pop %v1912
  %v1914 = vmul.f32 %v1796, 1.442695
  %v1915 = vpow.pop %v1914
  %v1916 = vmul.f32 %v1797, 1.442695
  %v1917 = vpow.pop %v1916
  %v1918 = vmul.f32 %v1798, 1.442695
  %v1919 = vpow.pop %v1918
  %v1920 = vmul.f32 %v1799, 1.442695
  %v1921 = vpow.pop %v1920
  %v1922 = vmul.f32 %v1800, 1.442695
  %v1923 = vpow.pop %v1922
  %v1924 = vmul.f32 %v1801, 1.442695
  %v1925 = vpow.pop %v1924
  %v1926 = vmul.f32 %v1802, 1.442695
  %v1927 = vpow.pop %v1926
  %v1928 = vmul.f32 %v1803, 1.442695
  %v1929 = vpow.pop %v1928
  %v1930 = vmul.f32 %v1804, 1.442695
  %v1931 = vpow.pop %v1930
  %v1932 = vmul.f32 %v1805, 1.442695
  %v1933 = vpow.pop %v1932
  %v1934 = vadd.f32 %v1807, 1.0
  %v1935 = vadd.f32 %v1809, 1.0
  %v1936 = vadd.f32 %v1811, 1.0
  %v1937 = vadd.f32 %v1813, 1.0
  %v1938 = vadd.f32 %v1815, 1.0
  %v1939 = vadd.f32 %v1817, 1.0
  %v1940 = vadd.f32 %v1819, 1.0
  %v1941 = vadd.f32 %v1821, 1.0
  %v1942 = vadd.f32 %v1823, 1.0
  %v1943 = vadd.f32 %v1825, 1.0
  %v1944 = vadd.f32 %v1827, 1.0
  %v1945 = vadd.f32 %v1829, 1.0
  %v1946 = vadd.f32 %v1831, 1.0
  %v1947 = vadd.f32 %v1833, 1.0
  %v1948 = vadd.f32 %v1835, 1.0
  %v1949 = vadd.f32 %v1837, 1.0
  %v1950 = vadd.f32 %v1839, 1.0
  %v1951 = vadd.f32 %v1841, 1.0
  %v1952 = vadd.f32 %v1843, 1.0
  %v1953 = vadd.f32 %v1845, 1.0
  %v1954 = vadd.f32 %v1847, 1.0
  %v1955 = vadd.f32 %v1849, 1.0
  %v1956 = vadd.f32 %v1851, 1.0
  %v1957 = vadd.f32 %v1853, 1.0
  %v1958 = vadd.f32 %v1855, 1.0
  %v1959 = vadd.f32 %v1857, 1.0
  %v1960 = vadd.f32 %v1859, 1.0
  %v1961 = vadd.f32 %v1861, 1.0
  %v1962 = vadd.f32 %v1863, 1.0
  %v1963 = vadd.f32 %v1865, 1.0
  %v1964 = vadd.f32 %v1867, 1.0
  %v1965 = vadd.f32 %v1869, 1.0
  %v1966 = vadd.f32 %v1871, 1.0
  %v1967 = vadd.f32 %v1873, 1.0
  %v1968 = vadd.f32 %v1875, 1.0
  %v1969 = vadd.f32 %v1877, 1.0
  %v1970 = vadd.f32 %v1879, 1.0
  %v1971 = vadd.f32 %v1881, 1.0
  %v1972 = vadd.f32 %v1883, 1.0
  %v1973 = vadd.f32 %v1885, 1.0
  %v1974 = vadd.f32 %v1887, 1.0
  %v1975 = vadd.f32 %v1889, 1.0
  %v1976 = vadd.f32 %v1891, 1.0
  %v1977 = vadd.f32 %v1893, 1.0
  %v1978 = vadd.f32 %v1895, 1.0
  %v1979 = vadd.f32 %v1897, 1.0
  %v1980 = vadd.f32 %v1899, 1.0
  %v1981 = vadd.f32 %v1901, 1.0
  %v1982 = vadd.f32 %v1903, 1.0
  %v1983 = vadd.f32 %v1905, 1.0
  %v1984 = vadd.f32 %v1907, 1.0
  %v1985 = vadd.f32 %v1909, 1.0
  %v1986 = vadd.f32 %v1911, 1.0
  %v1987 = vadd.f32 %v1913, 1.0
  %v1988 = vadd.f32 %v1915, 1.0
  %v1989 = vadd.f32 %v1917, 1.0
  %v1990 = vadd.f32 %v1919, 1.0
  %v1991 = vadd.f32 %v1921, 1.0
  %v1992 = vadd.f32 %v1923, 1.0
  %v1993 = vadd.f32 %v1925, 1.0
  %v1994 = vadd.f32 %v1927, 1.0
  %v1995 = vadd.f32 %v1929, 1.0
  %v1996 = vadd.f32 %v1931, 1.0
  %v1997 = vadd.f32 %v1933, 1.0
  %v1998 = vrcp.pop %v1934
  %v1999 = vmul.f32 1.0, %v1998
  %v2000 = vrcp.pop %v1935
  %v2001 = vmul.f32 1.0, %v2000
  %v2002 = vrcp.pop %v1936
  %v2003 = vmul.f32 1.0, %v2002
  %v2004 = vrcp.pop %v1937
  %v2005 = vmul.f32 1.0, %v2004
  %v2006 = vrcp.pop %v1938
  %v2007 = vmul.f32 1.0, %v2006
  %v2008 = vrcp.pop %v1939
  %v2009 = vmul.f32 1.0, %v2008
  %v2010 = vrcp.pop %v1940
  %v2011 = vmul.f32 1.0, %v2010
  %v2012 = vrcp.pop %v1941
  %v2013 = vmul.f32 1.0, %v2012
  %v2014 = vrcp.pop %v1942
  %v2015 = vmul.f32 1.0, %v2014
  %v2016 = vrcp.pop %v1943
  %v2017 = vmul.f32 1.0, %v2016
  %v2018 = vrcp.pop %v1944
  %v2019 = vmul.f32 1.0, %v2018
  %v2020 = vrcp.pop %v1945
  %v2021 = vmul.f32 1.0, %v2020
  %v2022 = vrcp.pop %v1946
  %v2023 = vmul.f32 1.0, %v2022
  %v2024 = vrcp.pop %v1947
  %v2025 = vmul.f32 1.0, %v2024
  %v2026 = vrcp.pop %v1948
  %v2027 = vmul.f32 1.0, %v2026
  %v2028 = vrcp.pop %v1949
  %v2029 = vmul.f32 1.0, %v2028
  %v2030 = vrcp.pop %v1950
  %v2031 = vmul.f32 1.0, %v2030
  %v2032 = vrcp.pop %v1951
  %v2033 = vmul.f32 1.0, %v2032
  %v2034 = vrcp.pop %v1952
  %v2035 = vmul.f32 1.0, %v2034
  %v2036 = vrcp.pop %v1953
  %v2037 = vmul.f32 1.0, %v2036
  %v2038 = vrcp.pop %v1954
  %v2039 = vmul.f32 1.0, %v2038
  %v2040 = vrcp.pop %v1955
  %v2041 = vmul.f32 1.0, %v2040
  %v2042 = vrcp.pop %v1956
  %v2043 = vmul.f32 1.0, %v2042
  %v2044 = vrcp.pop %v1957
  %v2045 = vmul.f32 1.0, %v2044
  %v2046 = vrcp.pop %v1958
  %v2047 = vmul.f32 1.0, %v2046
  %v2048 = vrcp.pop %v1959
  %v2049 = vmul.f32 1.0, %v2048
  %v2050 = vrcp.pop %v1960
  %v2051 = vmul.f32 1.0, %v2050
  %v2052 = vrcp.pop %v1961
  %v2053 = vmul.f32 1.0, %v2052
  %v2054 = vrcp.pop %v1962
  %v2055 = vmul.f32 1.0, %v2054
  %v2056 = vrcp.pop %v1963
  %v2057 = vmul.f32 1.0, %v2056
  %v2058 = vrcp.pop %v1964
  %v2059 = vmul.f32 1.0, %v2058
  %v2060 = vrcp.pop %v1965
  %v2061 = vmul.f32 1.0, %v2060
  %v2062 = vrcp.pop %v1966
  %v2063 = vmul.f32 1.0, %v2062
  %v2064 = vrcp.pop %v1967
  %v2065 = vmul.f32 1.0, %v2064
  %v2066 = vrcp.pop %v1968
  %v2067 = vmul.f32 1.0, %v2066
  %v2068 = vrcp.pop %v1969
  %v2069 = vmul.f32 1.0, %v2068
  %v2070 = vrcp.pop %v1970
  %v2071 = vmul.f32 1.0, %v2070
  %v2072 = vrcp.pop %v1971
  %v2073 = vmul.f32 1.0, %v2072
  %v2074 = vrcp.pop %v1972
  %v2075 = vmul.f32 1.0, %v2074
  %v2076 = vrcp.pop %v1973
  %v2077 = vmul.f32 1.0, %v2076
  %v2078 = vrcp.pop %v1974
  %v2079 = vmul.f32 1.0, %v2078
  %v2080 = vrcp.pop %v1975
  %v2081 = vmul.f32 1.0, %v2080
  %v2082 = vrcp.pop %v1976
  %v2083 = vmul.f32 1.0, %v2082
  %v2084 = vrcp.pop %v1977
  %v2085 = vmul.f32 1.0, %v2084
  %v2086 = vrcp.pop %v1978
  %v2087 = vmul.f32 1.0, %v2086
  %v2088 = vrcp.pop %v1979
  %v2089 = vmul.f32 1.0, %v2088
  %v2090 = vrcp.pop %v1980
  %v2091 = vmul.f32 1.0, %v2090
  %v2092 = vrcp.pop %v1981
  %v2093 = vmul.f32 1.0, %v2092
  %v2094 = vrcp.pop %v1982
  %v2095 = vmul.f32 1.0, %v2094
  %v2096 = vrcp.pop %v1983
  %v2097 = vmul.f32 1.0, %v2096
  %v2098 = vrcp.pop %v1984
  %v2099 = vmul.f32 1.0, %v2098
  %v2100 = vrcp.pop %v1985
  %v2101 = vmul.f32 1.0, %v2100
  %v2102 = vrcp.pop %v1986
  %v2103 = vmul.f32 1.0, %v2102
  %v2104 = vrcp.pop %v1987
  %v2105 = vmul.f32 1.0, %v2104
  %v2106 = vrcp.pop %v1988
  %v2107 = vmul.f32 1.0, %v2106
  %v2108 = vrcp.pop %v1989
  %v2109 = vmul.f32 1.0, %v2108
  %v2110 = vrcp.pop %v1990
  %v2111 = vmul.f32 1.0, %v2110
  %v2112 = vrcp.pop %v1991
  %v2113 = vmul.f32 1.0, %v2112
  %v2114 = vrcp.pop %v1992
  %v2115 = vmul.f32 1.0, %v2114
  %v2116 = vrcp.pop %v1993
  %v2117 = vmul.f32 1.0, %v2116
  %v2118 = vrcp.pop %v1994
  %v2119 = vmul.f32 1.0, %v2118
  %v2120 = vrcp.pop %v1995
  %v2121 = vmul.f32 1.0, %v2120
  %v2122 = vrcp.pop %v1996
  %v2123 = vmul.f32 1.0, %v2122
  %v2124 = vrcp.pop %v1997
  %v2125 = vmul.f32 1.0, %v2124
  %2126 = vst.msk [vmem:[%s10] sm:$0xff] %vm284, %v1999
  %2127 = vst.msk [vmem:[%s10 + $0x8] sm:$0xff] %vm284, %v2001
  %2128 = vst.msk [vmem:[%s10 + $0x10] sm:$0xff] %vm284, %v2003
  %2129 = vst.msk [vmem:[%s10 + $0x18] sm:$0xff] %vm284, %v2005
  %2130 = vst.msk [vmem:[%s10 + $0x20] sm:$0xff] %vm284, %v2007
  %2131 = vst.msk [vmem:[%s10 + $0x28] sm:$0xff] %vm284, %v2009
  %2132 = vst.msk [vmem:[%s10 + $0x30] sm:$0xff] %vm284, %v2011
  %2133 = vst.msk [vmem:[%s10 + $0x38] sm:$0xff] %vm284, %v2013
  %2134 = vst.msk [vmem:[%s10 + $0x40] sm:$0xff] %vm284, %v2015
  %2135 = vst.msk [vmem:[%s10 + $0x48] sm:$0xff] %vm284, %v2017
  %2136 = vst.msk [vmem:[%s10 + $0x50] sm:$0xff] %vm284, %v2019
  %2137 = vst.msk [vmem:[%s10 + $0x58] sm:$0xff] %vm284, %v2021
  %2138 = vst.msk [vmem:[%s10 + $0x60] sm:$0xff] %vm284, %v2023
  %2139 = vst.msk [vmem:[%s10 + $0x68] sm:$0xff] %vm284, %v2025
  %2140 = vst.msk [vmem:[%s10 + $0x70] sm:$0xff] %vm284, %v2027
  %2141 = vst.msk [vmem:[%s10 + $0x78] sm:$0xff] %vm284, %v2029
  %2142 = vst.msk [vmem:[%s10 + $0x80] sm:$0xff] %vm284, %v2031
  %2143 = vst.msk [vmem:[%s10 + $0x88] sm:$0xff] %vm284, %v2033
  %2144 = vst.msk [vmem:[%s10 + $0x90] sm:$0xff] %vm284, %v2035
  %2145 = vst.msk [vmem:[%s10 + $0x98] sm:$0xff] %vm284, %v2037
  %2146 = vst.msk [vmem:[%s10 + $0xa0] sm:$0xff] %vm284, %v2039
  %2147 = vst.msk [vmem:[%s10 + $0xa8] sm:$0xff] %vm284, %v2041
  %2148 = vst.msk [vmem:[%s10 + $0xb0] sm:$0xff] %vm284, %v2043
  %2149 = vst.msk [vmem:[%s10 + $0xb8] sm:$0xff] %vm284, %v2045
  %2150 = vst.msk [vmem:[%s10 + $0xc0] sm:$0xff] %vm284, %v2047
  %2151 = vst.msk [vmem:[%s10 + $0xc8] sm:$0xff] %vm284, %v2049
  %2152 = vst.msk [vmem:[%s10 + $0xd0] sm:$0xff] %vm284, %v2051
  %2153 = vst.msk [vmem:[%s10 + $0xd8] sm:$0xff] %vm284, %v2053
  %2154 = vst.msk [vmem:[%s10 + $0xe0] sm:$0xff] %vm284, %v2055
  %2155 = vst.msk [vmem:[%s10 + $0xe8] sm:$0xff] %vm284, %v2057
  %2156 = vst.msk [vmem:[%s10 + $0xf0] sm:$0xff] %vm284, %v2059
  %2157 = vst.msk [vmem:[%s10 + $0xf8] sm:$0xff] %vm284, %v2061
  %2158 = vst.msk [vmem:[%s10 + $0x100] sm:$0xff] %vm284, %v2063
  %2159 = vst.msk [vmem:[%s10 + $0x108] sm:$0xff] %vm284, %v2065
  %2160 = vst.msk [vmem:[%s10 + $0x110] sm:$0xff] %vm284, %v2067
  %2161 = vst.msk [vmem:[%s10 + $0x118] sm:$0xff] %vm284, %v2069
  %2162 = vst.msk [vmem:[%s10 + $0x120] sm:$0xff] %vm284, %v2071
  %2163 = vst.msk [vmem:[%s10 + $0x128] sm:$0xff] %vm284, %v2073
  %2164 = vst.msk [vmem:[%s10 + $0x130] sm:$0xff] %vm284, %v2075
  %2165 = vst.msk [vmem:[%s10 + $0x138] sm:$0xff] %vm284, %v2077
  %2166 = vst.msk [vmem:[%s10 + $0x140] sm:$0xff] %vm284, %v2079
  %2167 = vst.msk [vmem:[%s10 + $0x148] sm:$0xff] %vm284, %v2081
  %2168 = vst.msk [vmem:[%s10 + $0x150] sm:$0xff] %vm284, %v2083
  %2169 = vst.msk [vmem:[%s10 + $0x158] sm:$0xff] %vm284, %v2085
  %2170 = vst.msk [vmem:[%s10 + $0x160] sm:$0xff] %vm284, %v2087
  %2171 = vst.msk [vmem:[%s10 + $0x168] sm:$0xff] %vm284, %v2089
  %2172 = vst.msk [vmem:[%s10 + $0x170] sm:$0xff] %vm284, %v2091
  %2173 = vst.msk [vmem:[%s10 + $0x178] sm:$0xff] %vm284, %v2093
  %2174 = vst.msk [vmem:[%s10 + $0x180] sm:$0xff] %vm284, %v2095
  %2175 = vst.msk [vmem:[%s10 + $0x188] sm:$0xff] %vm284, %v2097
  %2176 = vst.msk [vmem:[%s10 + $0x190] sm:$0xff] %vm284, %v2099
  %2177 = vst.msk [vmem:[%s10 + $0x198] sm:$0xff] %vm284, %v2101
  %2178 = vst.msk [vmem:[%s10 + $0x1a0] sm:$0xff] %vm284, %v2103
  %2179 = vst.msk [vmem:[%s10 + $0x1a8] sm:$0xff] %vm284, %v2105
  %2180 = vst.msk [vmem:[%s10 + $0x1b0] sm:$0xff] %vm284, %v2107
  %2181 = vst.msk [vmem:[%s10 + $0x1b8] sm:$0xff] %vm284, %v2109
  %2182 = vst.msk [vmem:[%s10 + $0x1c0] sm:$0xff] %vm284, %v2111
  %2183 = vst.msk [vmem:[%s10 + $0x1c8] sm:$0xff] %vm284, %v2113
  %2184 = vst.msk [vmem:[%s10 + $0x1d0] sm:$0xff] %vm284, %v2115
  %2185 = vst.msk [vmem:[%s10 + $0x1d8] sm:$0xff] %vm284, %v2117
  %2186 = vst.msk [vmem:[%s10 + $0x1e0] sm:$0xff] %vm284, %v2119
  %2187 = vst.msk [vmem:[%s10 + $0x1e8] sm:$0xff] %vm284, %v2121
  %2188 = vst.msk [vmem:[%s10 + $0x1f0] sm:$0xff] %vm284, %v2123
  %2189 = vst.msk [vmem:[%s10 + $0x1f8] sm:$0xff] %vm284, %v2125
  %2254 = vrot.lane.b32.xlu0 %v1424, 96
  %v2255 = vpop.permute.xlu0 %2254
  %2256 = vrot.lane.b32.xlu0 %v1427, 96
  %v2257 = vpop.permute.xlu0 %2256
  %2258 = vrot.lane.b32.xlu0 %v1432, 96
  %v2259 = vpop.permute.xlu0 %2258
  %2260 = vrot.lane.b32.xlu0 %v1435, 96
  %v2261 = vpop.permute.xlu0 %2260
  %2262 = vrot.lane.b32.xlu0 %v1440, 96
  %v2263 = vpop.permute.xlu0 %2262
  %2264 = vrot.lane.b32.xlu0 %v1443, 96
  %v2265 = vpop.permute.xlu0 %2264
  %2266 = vrot.lane.b32.xlu0 %v1448, 96
  %v2267 = vpop.permute.xlu0 %2266
  %2268 = vrot.lane.b32.xlu0 %v1451, 96
  %v2269 = vpop.permute.xlu0 %2268
  %2270 = vrot.lane.b32.xlu0 %v1456, 96
  %v2271 = vpop.permute.xlu0 %2270
  %2272 = vrot.lane.b32.xlu0 %v1459, 96
  %v2273 = vpop.permute.xlu0 %2272
  %2274 = vrot.lane.b32.xlu0 %v1464, 96
  %v2275 = vpop.permute.xlu0 %2274
  %2276 = vrot.lane.b32.xlu0 %v1467, 96
  %v2277 = vpop.permute.xlu0 %2276
  %2278 = vrot.lane.b32.xlu0 %v1472, 96
  %v2279 = vpop.permute.xlu0 %2278
  %2280 = vrot.lane.b32.xlu0 %v1475, 96
  %v2281 = vpop.permute.xlu0 %2280
  %2282 = vrot.lane.b32.xlu0 %v1480, 96
  %v2283 = vpop.permute.xlu0 %2282
  %2284 = vrot.lane.b32.xlu0 %v1483, 96
  %v2285 = vpop.permute.xlu0 %2284
  %2286 = vrot.lane.b32.xlu0 %v1488, 96
  %v2287 = vpop.permute.xlu0 %2286
  %2288 = vrot.lane.b32.xlu0 %v1491, 96
  %v2289 = vpop.permute.xlu0 %2288
  %2290 = vrot.lane.b32.xlu0 %v1496, 96
  %v2291 = vpop.permute.xlu0 %2290
  %2292 = vrot.lane.b32.xlu0 %v1499, 96
  %v2293 = vpop.permute.xlu0 %2292
  %2294 = vrot.lane.b32.xlu0 %v1504, 96
  %v2295 = vpop.permute.xlu0 %2294
  %2296 = vrot.lane.b32.xlu0 %v1507, 96
  %v2297 = vpop.permute.xlu0 %2296
  %2298 = vrot.lane.b32.xlu0 %v1512, 96
  %v2299 = vpop.permute.xlu0 %2298
  %2300 = vrot.lane.b32.xlu0 %v1515, 96
  %v2301 = vpop.permute.xlu0 %2300
  %2302 = vrot.lane.b32.xlu0 %v1520, 96
  %v2303 = vpop.permute.xlu0 %2302
  %2304 = vrot.lane.b32.xlu0 %v1523, 96
  %v2305 = vpop.permute.xlu0 %2304
  %2306 = vrot.lane.b32.xlu0 %v1528, 96
  %v2307 = vpop.permute.xlu0 %2306
  %2308 = vrot.lane.b32.xlu0 %v1531, 96
  %v2309 = vpop.permute.xlu0 %2308
  %2310 = vrot.lane.b32.xlu0 %v1536, 96
  %v2311 = vpop.permute.xlu0 %2310
  %2312 = vrot.lane.b32.xlu0 %v1539, 96
  %v2313 = vpop.permute.xlu0 %2312
  %2314 = vrot.lane.b32.xlu0 %v1544, 96
  %v2315 = vpop.permute.xlu0 %2314
  %2316 = vrot.lane.b32.xlu0 %v1547, 96
  %v2317 = vpop.permute.xlu0 %2316
  %2318 = vrot.lane.b32.xlu0 %v1552, 96
  %v2319 = vpop.permute.xlu0 %2318
  %2320 = vrot.lane.b32.xlu0 %v1555, 96
  %v2321 = vpop.permute.xlu0 %2320
  %2322 = vrot.lane.b32.xlu0 %v1560, 96
  %v2323 = vpop.permute.xlu0 %2322
  %2324 = vrot.lane.b32.xlu0 %v1563, 96
  %v2325 = vpop.permute.xlu0 %2324
  %2326 = vrot.lane.b32.xlu0 %v1568, 96
  %v2327 = vpop.permute.xlu0 %2326
  %2328 = vrot.lane.b32.xlu0 %v1571, 96
  %v2329 = vpop.permute.xlu0 %2328
  %2330 = vrot.lane.b32.xlu0 %v1576, 96
  %v2331 = vpop.permute.xlu0 %2330
  %2332 = vrot.lane.b32.xlu0 %v1579, 96
  %v2333 = vpop.permute.xlu0 %2332
  %2334 = vrot.lane.b32.xlu0 %v1584, 96
  %v2335 = vpop.permute.xlu0 %2334
  %2336 = vrot.lane.b32.xlu0 %v1587, 96
  %v2337 = vpop.permute.xlu0 %2336
  %2338 = vrot.lane.b32.xlu0 %v1592, 96
  %v2339 = vpop.permute.xlu0 %2338
  %2340 = vrot.lane.b32.xlu0 %v1595, 96
  %v2341 = vpop.permute.xlu0 %2340
  %2342 = vrot.lane.b32.xlu0 %v1600, 96
  %v2343 = vpop.permute.xlu0 %2342
  %2344 = vrot.lane.b32.xlu0 %v1603, 96
  %v2345 = vpop.permute.xlu0 %2344
  %2346 = vrot.lane.b32.xlu0 %v1608, 96
  %v2347 = vpop.permute.xlu0 %2346
  %2348 = vrot.lane.b32.xlu0 %v1611, 96
  %v2349 = vpop.permute.xlu0 %2348
  %2350 = vrot.lane.b32.xlu0 %v1616, 96
  %v2351 = vpop.permute.xlu0 %2350
  %2352 = vrot.lane.b32.xlu0 %v1619, 96
  %v2353 = vpop.permute.xlu0 %2352
  %2354 = vrot.lane.b32.xlu0 %v1624, 96
  %v2355 = vpop.permute.xlu0 %2354
  %2356 = vrot.lane.b32.xlu0 %v1627, 96
  %v2357 = vpop.permute.xlu0 %2356
  %2358 = vrot.lane.b32.xlu0 %v1632, 96
  %v2359 = vpop.permute.xlu0 %2358
  %2360 = vrot.lane.b32.xlu0 %v1635, 96
  %v2361 = vpop.permute.xlu0 %2360
  %2362 = vrot.lane.b32.xlu0 %v1640, 96
  %v2363 = vpop.permute.xlu0 %2362
  %2364 = vrot.lane.b32.xlu0 %v1643, 96
  %v2365 = vpop.permute.xlu0 %2364
  %2366 = vrot.lane.b32.xlu0 %v1648, 96
  %v2367 = vpop.permute.xlu0 %2366
  %2368 = vrot.lane.b32.xlu0 %v1651, 96
  %v2369 = vpop.permute.xlu0 %2368
  %2370 = vrot.lane.b32.xlu0 %v1656, 96
  %v2371 = vpop.permute.xlu0 %2370
  %2372 = vrot.lane.b32.xlu0 %v1659, 96
  %v2373 = vpop.permute.xlu0 %2372
  %2374 = vrot.lane.b32.xlu0 %v1664, 96
  %v2375 = vpop.permute.xlu0 %2374
  %2376 = vrot.lane.b32.xlu0 %v1667, 96
  %v2377 = vpop.permute.xlu0 %2376
  %2378 = vrot.lane.b32.xlu0 %v1672, 96
  %v2379 = vpop.permute.xlu0 %2378
  %2380 = vrot.lane.b32.xlu0 %v1675, 96
  %v2381 = vpop.permute.xlu0 %2380
  %vm2446 = vcmask 130048
  %2447 = vst.msk [vmem:[%s11] sm:$0xff] %vm2446, %v2255
  %2448 = vst.msk [vmem:[%s11 + $0x8] sm:$0xff] %vm2446, %v2257
  %2449 = vst.msk [vmem:[%s11 + $0x10] sm:$0xff] %vm2446, %v2259
  %2450 = vst.msk [vmem:[%s11 + $0x18] sm:$0xff] %vm2446, %v2261
  %2451 = vst.msk [vmem:[%s11 + $0x20] sm:$0xff] %vm2446, %v2263
  %2452 = vst.msk [vmem:[%s11 + $0x28] sm:$0xff] %vm2446, %v2265
  %2453 = vst.msk [vmem:[%s11 + $0x30] sm:$0xff] %vm2446, %v2267
  %2454 = vst.msk [vmem:[%s11 + $0x38] sm:$0xff] %vm2446, %v2269
  %2455 = vst.msk [vmem:[%s11 + $0x40] sm:$0xff] %vm2446, %v2271
  %2456 = vst.msk [vmem:[%s11 + $0x48] sm:$0xff] %vm2446, %v2273
  %2457 = vst.msk [vmem:[%s11 + $0x50] sm:$0xff] %vm2446, %v2275
  %2458 = vst.msk [vmem:[%s11 + $0x58] sm:$0xff] %vm2446, %v2277
  %2459 = vst.msk [vmem:[%s11 + $0x60] sm:$0xff] %vm2446, %v2279
  %2460 = vst.msk [vmem:[%s11 + $0x68] sm:$0xff] %vm2446, %v2281
  %2461 = vst.msk [vmem:[%s11 + $0x70] sm:$0xff] %vm2446, %v2283
  %2462 = vst.msk [vmem:[%s11 + $0x78] sm:$0xff] %vm2446, %v2285
  %2463 = vst.msk [vmem:[%s11 + $0x80] sm:$0xff] %vm2446, %v2287
  %2464 = vst.msk [vmem:[%s11 + $0x88] sm:$0xff] %vm2446, %v2289
  %2465 = vst.msk [vmem:[%s11 + $0x90] sm:$0xff] %vm2446, %v2291
  %2466 = vst.msk [vmem:[%s11 + $0x98] sm:$0xff] %vm2446, %v2293
  %2467 = vst.msk [vmem:[%s11 + $0xa0] sm:$0xff] %vm2446, %v2295
  %2468 = vst.msk [vmem:[%s11 + $0xa8] sm:$0xff] %vm2446, %v2297
  %2469 = vst.msk [vmem:[%s11 + $0xb0] sm:$0xff] %vm2446, %v2299
  %2470 = vst.msk [vmem:[%s11 + $0xb8] sm:$0xff] %vm2446, %v2301
  %2471 = vst.msk [vmem:[%s11 + $0xc0] sm:$0xff] %vm2446, %v2303
  %2472 = vst.msk [vmem:[%s11 + $0xc8] sm:$0xff] %vm2446, %v2305
  %2473 = vst.msk [vmem:[%s11 + $0xd0] sm:$0xff] %vm2446, %v2307
  %2474 = vst.msk [vmem:[%s11 + $0xd8] sm:$0xff] %vm2446, %v2309
  %2475 = vst.msk [vmem:[%s11 + $0xe0] sm:$0xff] %vm2446, %v2311
  %2476 = vst.msk [vmem:[%s11 + $0xe8] sm:$0xff] %vm2446, %v2313
  %2477 = vst.msk [vmem:[%s11 + $0xf0] sm:$0xff] %vm2446, %v2315
  %2478 = vst.msk [vmem:[%s11 + $0xf8] sm:$0xff] %vm2446, %v2317
  %2479 = vst.msk [vmem:[%s11 + $0x100] sm:$0xff] %vm2446, %v2319
  %2480 = vst.msk [vmem:[%s11 + $0x108] sm:$0xff] %vm2446, %v2321
  %2481 = vst.msk [vmem:[%s11 + $0x110] sm:$0xff] %vm2446, %v2323
  %2482 = vst.msk [vmem:[%s11 + $0x118] sm:$0xff] %vm2446, %v2325
  %2483 = vst.msk [vmem:[%s11 + $0x120] sm:$0xff] %vm2446, %v2327
  %2484 = vst.msk [vmem:[%s11 + $0x128] sm:$0xff] %vm2446, %v2329
  %2485 = vst.msk [vmem:[%s11 + $0x130] sm:$0xff] %vm2446, %v2331
  %2486 = vst.msk [vmem:[%s11 + $0x138] sm:$0xff] %vm2446, %v2333
  %2487 = vst.msk [vmem:[%s11 + $0x140] sm:$0xff] %vm2446, %v2335
  %2488 = vst.msk [vmem:[%s11 + $0x148] sm:$0xff] %vm2446, %v2337
  %2489 = vst.msk [vmem:[%s11 + $0x150] sm:$0xff] %vm2446, %v2339
  %2490 = vst.msk [vmem:[%s11 + $0x158] sm:$0xff] %vm2446, %v2341
  %2491 = vst.msk [vmem:[%s11 + $0x160] sm:$0xff] %vm2446, %v2343
  %2492 = vst.msk [vmem:[%s11 + $0x168] sm:$0xff] %vm2446, %v2345
  %2493 = vst.msk [vmem:[%s11 + $0x170] sm:$0xff] %vm2446, %v2347
  %2494 = vst.msk [vmem:[%s11 + $0x178] sm:$0xff] %vm2446, %v2349
  %2495 = vst.msk [vmem:[%s11 + $0x180] sm:$0xff] %vm2446, %v2351
  %2496 = vst.msk [vmem:[%s11 + $0x188] sm:$0xff] %vm2446, %v2353
  %2497 = vst.msk [vmem:[%s11 + $0x190] sm:$0xff] %vm2446, %v2355
  %2498 = vst.msk [vmem:[%s11 + $0x198] sm:$0xff] %vm2446, %v2357
  %2499 = vst.msk [vmem:[%s11 + $0x1a0] sm:$0xff] %vm2446, %v2359
  %2500 = vst.msk [vmem:[%s11 + $0x1a8] sm:$0xff] %vm2446, %v2361
  %2501 = vst.msk [vmem:[%s11 + $0x1b0] sm:$0xff] %vm2446, %v2363
  %2502 = vst.msk [vmem:[%s11 + $0x1b8] sm:$0xff] %vm2446, %v2365
  %2503 = vst.msk [vmem:[%s11 + $0x1c0] sm:$0xff] %vm2446, %v2367
  %2504 = vst.msk [vmem:[%s11 + $0x1c8] sm:$0xff] %vm2446, %v2369
  %2505 = vst.msk [vmem:[%s11 + $0x1d0] sm:$0xff] %vm2446, %v2371
  %2506 = vst.msk [vmem:[%s11 + $0x1d8] sm:$0xff] %vm2446, %v2373
  %2507 = vst.msk [vmem:[%s11 + $0x1e0] sm:$0xff] %vm2446, %v2375
  %2508 = vst.msk [vmem:[%s11 + $0x1e8] sm:$0xff] %vm2446, %v2377
  %2509 = vst.msk [vmem:[%s11 + $0x1f0] sm:$0xff] %vm2446, %v2379
  %2510 = vst.msk [vmem:[%s11 + $0x1f8] sm:$0xff] %vm2446, %v2381
  %v2511 = vld [vmem:[%s8] sm:$0x1]
  %v2512 = vld [vmem:[%s8 + $0x1] sm:$0x1]
  %v2513 = vld [vmem:[%s8 + $0x2] sm:$0x1]
  %v2514 = vld [vmem:[%s8 + $0x3] sm:$0x1]
  %v2515 = vld [vmem:[%s8 + $0x4] sm:$0x1]
  %v2516 = vlaneseq
  %v2517 = vshrl.u32 %v2516, 7
  %v2518 = vsub.s32 0, %v2517
  %v2519 = vrot.slane %v2512, %v2518
  %2521 = vrot.lane.b32.xlu0 %v2519, 32
  %v2522 = vpop.permute.xlu0 %2521
  %v2524 = vmul.f32 %v1424, %v2522
  %v2525 = vmul.f32 %v1427, %v2522
  %v2526 = vmul.f32 %v1432, %v2522
  %v2527 = vmul.f32 %v1435, %v2522
  %v2528 = vmul.f32 %v1440, %v2522
  %v2529 = vmul.f32 %v1443, %v2522
  %v2530 = vmul.f32 %v1448, %v2522
  %v2531 = vmul.f32 %v1451, %v2522
  %v2532 = vmul.f32 %v1456, %v2522
  %v2533 = vmul.f32 %v1459, %v2522
  %v2534 = vmul.f32 %v1464, %v2522
  %v2535 = vmul.f32 %v1467, %v2522
  %v2536 = vmul.f32 %v1472, %v2522
  %v2537 = vmul.f32 %v1475, %v2522
  %v2538 = vmul.f32 %v1480, %v2522
  %v2539 = vmul.f32 %v1483, %v2522
  %v2540 = vmul.f32 %v1488, %v2522
  %v2541 = vmul.f32 %v1491, %v2522
  %v2542 = vmul.f32 %v1496, %v2522
  %v2543 = vmul.f32 %v1499, %v2522
  %v2544 = vmul.f32 %v1504, %v2522
  %v2545 = vmul.f32 %v1507, %v2522
  %v2546 = vmul.f32 %v1512, %v2522
  %v2547 = vmul.f32 %v1515, %v2522
  %v2548 = vmul.f32 %v1520, %v2522
  %v2549 = vmul.f32 %v1523, %v2522
  %v2550 = vmul.f32 %v1528, %v2522
  %v2551 = vmul.f32 %v1531, %v2522
  %v2552 = vmul.f32 %v1536, %v2522
  %v2553 = vmul.f32 %v1539, %v2522
  %v2554 = vmul.f32 %v1544, %v2522
  %v2555 = vmul.f32 %v1547, %v2522
  %v2556 = vmul.f32 %v1552, %v2522
  %v2557 = vmul.f32 %v1555, %v2522
  %v2558 = vmul.f32 %v1560, %v2522
  %v2559 = vmul.f32 %v1563, %v2522
  %v2560 = vmul.f32 %v1568, %v2522
  %v2561 = vmul.f32 %v1571, %v2522
  %v2562 = vmul.f32 %v1576, %v2522
  %v2563 = vmul.f32 %v1579, %v2522
  %v2564 = vmul.f32 %v1584, %v2522
  %v2565 = vmul.f32 %v1587, %v2522
  %v2566 = vmul.f32 %v1592, %v2522
  %v2567 = vmul.f32 %v1595, %v2522
  %v2568 = vmul.f32 %v1600, %v2522
  %v2569 = vmul.f32 %v1603, %v2522
  %v2570 = vmul.f32 %v1608, %v2522
  %v2571 = vmul.f32 %v1611, %v2522
  %v2572 = vmul.f32 %v1616, %v2522
  %v2573 = vmul.f32 %v1619, %v2522
  %v2574 = vmul.f32 %v1624, %v2522
  %v2575 = vmul.f32 %v1627, %v2522
  %v2576 = vmul.f32 %v1632, %v2522
  %v2577 = vmul.f32 %v1635, %v2522
  %v2578 = vmul.f32 %v1640, %v2522
  %v2579 = vmul.f32 %v1643, %v2522
  %v2580 = vmul.f32 %v1648, %v2522
  %v2581 = vmul.f32 %v1651, %v2522
  %v2582 = vmul.f32 %v1656, %v2522
  %v2583 = vmul.f32 %v1659, %v2522
  %v2584 = vmul.f32 %v1664, %v2522
  %v2585 = vmul.f32 %v1667, %v2522
  %v2586 = vmul.f32 %v1672, %v2522
  %v2587 = vmul.f32 %v1675, %v2522
  %2652 = vrot.lane.b32.xlu0 %v2524, 82
  %v2653 = vpop.permute.xlu0 %2652
  %2654 = vrot.lane.b32.xlu0 %v2525, 82
  %v2655 = vpop.permute.xlu0 %2654
  %2656 = vrot.lane.b32.xlu0 %v2526, 82
  %v2657 = vpop.permute.xlu0 %2656
  %2658 = vrot.lane.b32.xlu0 %v2527, 82
  %v2659 = vpop.permute.xlu0 %2658
  %2660 = vrot.lane.b32.xlu0 %v2528, 82
  %v2661 = vpop.permute.xlu0 %2660
  %2662 = vrot.lane.b32.xlu0 %v2529, 82
  %v2663 = vpop.permute.xlu0 %2662
  %2664 = vrot.lane.b32.xlu0 %v2530, 82
  %v2665 = vpop.permute.xlu0 %2664
  %2666 = vrot.lane.b32.xlu0 %v2531, 82
  %v2667 = vpop.permute.xlu0 %2666
  %2668 = vrot.lane.b32.xlu0 %v2532, 82
  %v2669 = vpop.permute.xlu0 %2668
  %2670 = vrot.lane.b32.xlu0 %v2533, 82
  %v2671 = vpop.permute.xlu0 %2670
  %2672 = vrot.lane.b32.xlu0 %v2534, 82
  %v2673 = vpop.permute.xlu0 %2672
  %2674 = vrot.lane.b32.xlu0 %v2535, 82
  %v2675 = vpop.permute.xlu0 %2674
  %2676 = vrot.lane.b32.xlu0 %v2536, 82
  %v2677 = vpop.permute.xlu0 %2676
  %2678 = vrot.lane.b32.xlu0 %v2537, 82
  %v2679 = vpop.permute.xlu0 %2678
  %2680 = vrot.lane.b32.xlu0 %v2538, 82
  %v2681 = vpop.permute.xlu0 %2680
  %2682 = vrot.lane.b32.xlu0 %v2539, 82
  %v2683 = vpop.permute.xlu0 %2682
  %2684 = vrot.lane.b32.xlu0 %v2540, 82
  %v2685 = vpop.permute.xlu0 %2684
  %2686 = vrot.lane.b32.xlu0 %v2541, 82
  %v2687 = vpop.permute.xlu0 %2686
  %2688 = vrot.lane.b32.xlu0 %v2542, 82
  %v2689 = vpop.permute.xlu0 %2688
  %2690 = vrot.lane.b32.xlu0 %v2543, 82
  %v2691 = vpop.permute.xlu0 %2690
  %2692 = vrot.lane.b32.xlu0 %v2544, 82
  %v2693 = vpop.permute.xlu0 %2692
  %2694 = vrot.lane.b32.xlu0 %v2545, 82
  %v2695 = vpop.permute.xlu0 %2694
  %2696 = vrot.lane.b32.xlu0 %v2546, 82
  %v2697 = vpop.permute.xlu0 %2696
  %2698 = vrot.lane.b32.xlu0 %v2547, 82
  %v2699 = vpop.permute.xlu0 %2698
  %2700 = vrot.lane.b32.xlu0 %v2548, 82
  %v2701 = vpop.permute.xlu0 %2700
  %2702 = vrot.lane.b32.xlu0 %v2549, 82
  %v2703 = vpop.permute.xlu0 %2702
  %2704 = vrot.lane.b32.xlu0 %v2550, 82
  %v2705 = vpop.permute.xlu0 %2704
  %2706 = vrot.lane.b32.xlu0 %v2551, 82
  %v2707 = vpop.permute.xlu0 %2706
  %2708 = vrot.lane.b32.xlu0 %v2552, 82
  %v2709 = vpop.permute.xlu0 %2708
  %2710 = vrot.lane.b32.xlu0 %v2553, 82
  %v2711 = vpop.permute.xlu0 %2710
  %2712 = vrot.lane.b32.xlu0 %v2554, 82
  %v2713 = vpop.permute.xlu0 %2712
  %2714 = vrot.lane.b32.xlu0 %v2555, 82
  %v2715 = vpop.permute.xlu0 %2714
  %2716 = vrot.lane.b32.xlu0 %v2556, 82
  %v2717 = vpop.permute.xlu0 %2716
  %2718 = vrot.lane.b32.xlu0 %v2557, 82
  %v2719 = vpop.permute.xlu0 %2718
  %2720 = vrot.lane.b32.xlu0 %v2558, 82
  %v2721 = vpop.permute.xlu0 %2720
  %2722 = vrot.lane.b32.xlu0 %v2559, 82
  %v2723 = vpop.permute.xlu0 %2722
  %2724 = vrot.lane.b32.xlu0 %v2560, 82
  %v2725 = vpop.permute.xlu0 %2724
  %2726 = vrot.lane.b32.xlu0 %v2561, 82
  %v2727 = vpop.permute.xlu0 %2726
  %2728 = vrot.lane.b32.xlu0 %v2562, 82
  %v2729 = vpop.permute.xlu0 %2728
  %2730 = vrot.lane.b32.xlu0 %v2563, 82
  %v2731 = vpop.permute.xlu0 %2730
  %2732 = vrot.lane.b32.xlu0 %v2564, 82
  %v2733 = vpop.permute.xlu0 %2732
  %2734 = vrot.lane.b32.xlu0 %v2565, 82
  %v2735 = vpop.permute.xlu0 %2734
  %2736 = vrot.lane.b32.xlu0 %v2566, 82
  %v2737 = vpop.permute.xlu0 %2736
  %2738 = vrot.lane.b32.xlu0 %v2567, 82
  %v2739 = vpop.permute.xlu0 %2738
  %2740 = vrot.lane.b32.xlu0 %v2568, 82
  %v2741 = vpop.permute.xlu0 %2740
  %2742 = vrot.lane.b32.xlu0 %v2569, 82
  %v2743 = vpop.permute.xlu0 %2742
  %2744 = vrot.lane.b32.xlu0 %v2570, 82
  %v2745 = vpop.permute.xlu0 %2744
  %2746 = vrot.lane.b32.xlu0 %v2571, 82
  %v2747 = vpop.permute.xlu0 %2746
  %2748 = vrot.lane.b32.xlu0 %v2572, 82
  %v2749 = vpop.permute.xlu0 %2748
  %2750 = vrot.lane.b32.xlu0 %v2573, 82
  %v2751 = vpop.permute.xlu0 %2750
  %2752 = vrot.lane.b32.xlu0 %v2574, 82
  %v2753 = vpop.permute.xlu0 %2752
  %2754 = vrot.lane.b32.xlu0 %v2575, 82
  %v2755 = vpop.permute.xlu0 %2754
  %2756 = vrot.lane.b32.xlu0 %v2576, 82
  %v2757 = vpop.permute.xlu0 %2756
  %2758 = vrot.lane.b32.xlu0 %v2577, 82
  %v2759 = vpop.permute.xlu0 %2758
  %2760 = vrot.lane.b32.xlu0 %v2578, 82
  %v2761 = vpop.permute.xlu0 %2760
  %2762 = vrot.lane.b32.xlu0 %v2579, 82
  %v2763 = vpop.permute.xlu0 %2762
  %2764 = vrot.lane.b32.xlu0 %v2580, 82
  %v2765 = vpop.permute.xlu0 %2764
  %2766 = vrot.lane.b32.xlu0 %v2581, 82
  %v2767 = vpop.permute.xlu0 %2766
  %2768 = vrot.lane.b32.xlu0 %v2582, 82
  %v2769 = vpop.permute.xlu0 %2768
  %2770 = vrot.lane.b32.xlu0 %v2583, 82
  %v2771 = vpop.permute.xlu0 %2770
  %2772 = vrot.lane.b32.xlu0 %v2584, 82
  %v2773 = vpop.permute.xlu0 %2772
  %2774 = vrot.lane.b32.xlu0 %v2585, 82
  %v2775 = vpop.permute.xlu0 %2774
  %2776 = vrot.lane.b32.xlu0 %v2586, 82
  %v2777 = vpop.permute.xlu0 %2776
  %2778 = vrot.lane.b32.xlu0 %v2587, 82
  %v2779 = vpop.permute.xlu0 %2778
  %2844 = vrot.lane.b32.xlu0 %v2524, 98
  %v2845 = vpop.permute.xlu0 %2844
  %2846 = vrot.lane.b32.xlu0 %v2525, 98
  %v2847 = vpop.permute.xlu0 %2846
  %2848 = vrot.lane.b32.xlu0 %v2526, 98
  %v2849 = vpop.permute.xlu0 %2848
  %2850 = vrot.lane.b32.xlu0 %v2527, 98
  %v2851 = vpop.permute.xlu0 %2850
  %2852 = vrot.lane.b32.xlu0 %v2528, 98
  %v2853 = vpop.permute.xlu0 %2852
  %2854 = vrot.lane.b32.xlu0 %v2529, 98
  %v2855 = vpop.permute.xlu0 %2854
  %2856 = vrot.lane.b32.xlu0 %v2530, 98
  %v2857 = vpop.permute.xlu0 %2856
  %2858 = vrot.lane.b32.xlu0 %v2531, 98
  %v2859 = vpop.permute.xlu0 %2858
  %2860 = vrot.lane.b32.xlu0 %v2532, 98
  %v2861 = vpop.permute.xlu0 %2860
  %2862 = vrot.lane.b32.xlu0 %v2533, 98
  %v2863 = vpop.permute.xlu0 %2862
  %2864 = vrot.lane.b32.xlu0 %v2534, 98
  %v2865 = vpop.permute.xlu0 %2864
  %2866 = vrot.lane.b32.xlu0 %v2535, 98
  %v2867 = vpop.permute.xlu0 %2866
  %2868 = vrot.lane.b32.xlu0 %v2536, 98
  %v2869 = vpop.permute.xlu0 %2868
  %2870 = vrot.lane.b32.xlu0 %v2537, 98
  %v2871 = vpop.permute.xlu0 %2870
  %2872 = vrot.lane.b32.xlu0 %v2538, 98
  %v2873 = vpop.permute.xlu0 %2872
  %2874 = vrot.lane.b32.xlu0 %v2539, 98
  %v2875 = vpop.permute.xlu0 %2874
  %2876 = vrot.lane.b32.xlu0 %v2540, 98
  %v2877 = vpop.permute.xlu0 %2876
  %2878 = vrot.lane.b32.xlu0 %v2541, 98
  %v2879 = vpop.permute.xlu0 %2878
  %2880 = vrot.lane.b32.xlu0 %v2542, 98
  %v2881 = vpop.permute.xlu0 %2880
  %2882 = vrot.lane.b32.xlu0 %v2543, 98
  %v2883 = vpop.permute.xlu0 %2882
  %2884 = vrot.lane.b32.xlu0 %v2544, 98
  %v2885 = vpop.permute.xlu0 %2884
  %2886 = vrot.lane.b32.xlu0 %v2545, 98
  %v2887 = vpop.permute.xlu0 %2886
  %2888 = vrot.lane.b32.xlu0 %v2546, 98
  %v2889 = vpop.permute.xlu0 %2888
  %2890 = vrot.lane.b32.xlu0 %v2547, 98
  %v2891 = vpop.permute.xlu0 %2890
  %2892 = vrot.lane.b32.xlu0 %v2548, 98
  %v2893 = vpop.permute.xlu0 %2892
  %2894 = vrot.lane.b32.xlu0 %v2549, 98
  %v2895 = vpop.permute.xlu0 %2894
  %2896 = vrot.lane.b32.xlu0 %v2550, 98
  %v2897 = vpop.permute.xlu0 %2896
  %2898 = vrot.lane.b32.xlu0 %v2551, 98
  %v2899 = vpop.permute.xlu0 %2898
  %2900 = vrot.lane.b32.xlu0 %v2552, 98
  %v2901 = vpop.permute.xlu0 %2900
  %2902 = vrot.lane.b32.xlu0 %v2553, 98
  %v2903 = vpop.permute.xlu0 %2902
  %2904 = vrot.lane.b32.xlu0 %v2554, 98
  %v2905 = vpop.permute.xlu0 %2904
  %2906 = vrot.lane.b32.xlu0 %v2555, 98
  %v2907 = vpop.permute.xlu0 %2906
  %2908 = vrot.lane.b32.xlu0 %v2556, 98
  %v2909 = vpop.permute.xlu0 %2908
  %2910 = vrot.lane.b32.xlu0 %v2557, 98
  %v2911 = vpop.permute.xlu0 %2910
  %2912 = vrot.lane.b32.xlu0 %v2558, 98
  %v2913 = vpop.permute.xlu0 %2912
  %2914 = vrot.lane.b32.xlu0 %v2559, 98
  %v2915 = vpop.permute.xlu0 %2914
  %2916 = vrot.lane.b32.xlu0 %v2560, 98
  %v2917 = vpop.permute.xlu0 %2916
  %2918 = vrot.lane.b32.xlu0 %v2561, 98
  %v2919 = vpop.permute.xlu0 %2918
  %2920 = vrot.lane.b32.xlu0 %v2562, 98
  %v2921 = vpop.permute.xlu0 %2920
  %2922 = vrot.lane.b32.xlu0 %v2563, 98
  %v2923 = vpop.permute.xlu0 %2922
  %2924 = vrot.lane.b32.xlu0 %v2564, 98
  %v2925 = vpop.permute.xlu0 %2924
  %2926 = vrot.lane.b32.xlu0 %v2565, 98
  %v2927 = vpop.permute.xlu0 %2926
  %2928 = vrot.lane.b32.xlu0 %v2566, 98
  %v2929 = vpop.permute.xlu0 %2928
  %2930 = vrot.lane.b32.xlu0 %v2567, 98
  %v2931 = vpop.permute.xlu0 %2930
  %2932 = vrot.lane.b32.xlu0 %v2568, 98
  %v2933 = vpop.permute.xlu0 %2932
  %2934 = vrot.lane.b32.xlu0 %v2569, 98
  %v2935 = vpop.permute.xlu0 %2934
  %2936 = vrot.lane.b32.xlu0 %v2570, 98
  %v2937 = vpop.permute.xlu0 %2936
  %2938 = vrot.lane.b32.xlu0 %v2571, 98
  %v2939 = vpop.permute.xlu0 %2938
  %2940 = vrot.lane.b32.xlu0 %v2572, 98
  %v2941 = vpop.permute.xlu0 %2940
  %2942 = vrot.lane.b32.xlu0 %v2573, 98
  %v2943 = vpop.permute.xlu0 %2942
  %2944 = vrot.lane.b32.xlu0 %v2574, 98
  %v2945 = vpop.permute.xlu0 %2944
  %2946 = vrot.lane.b32.xlu0 %v2575, 98
  %v2947 = vpop.permute.xlu0 %2946
  %2948 = vrot.lane.b32.xlu0 %v2576, 98
  %v2949 = vpop.permute.xlu0 %2948
  %2950 = vrot.lane.b32.xlu0 %v2577, 98
  %v2951 = vpop.permute.xlu0 %2950
  %2952 = vrot.lane.b32.xlu0 %v2578, 98
  %v2953 = vpop.permute.xlu0 %2952
  %2954 = vrot.lane.b32.xlu0 %v2579, 98
  %v2955 = vpop.permute.xlu0 %2954
  %2956 = vrot.lane.b32.xlu0 %v2580, 98
  %v2957 = vpop.permute.xlu0 %2956
  %2958 = vrot.lane.b32.xlu0 %v2581, 98
  %v2959 = vpop.permute.xlu0 %2958
  %2960 = vrot.lane.b32.xlu0 %v2582, 98
  %v2961 = vpop.permute.xlu0 %2960
  %2962 = vrot.lane.b32.xlu0 %v2583, 98
  %v2963 = vpop.permute.xlu0 %2962
  %2964 = vrot.lane.b32.xlu0 %v2584, 98
  %v2965 = vpop.permute.xlu0 %2964
  %2966 = vrot.lane.b32.xlu0 %v2585, 98
  %v2967 = vpop.permute.xlu0 %2966
  %2968 = vrot.lane.b32.xlu0 %v2586, 98
  %v2969 = vpop.permute.xlu0 %2968
  %2970 = vrot.lane.b32.xlu0 %v2587, 98
  %v2971 = vpop.permute.xlu0 %2970
  %vm3036 = vcmask 15360
  %v3037 = vsel %vm3036, %v2653, %v2845
  %v3038 = vsel %vm3036, %v2655, %v2847
  %v3039 = vsel %vm3036, %v2657, %v2849
  %v3040 = vsel %vm3036, %v2659, %v2851
  %v3041 = vsel %vm3036, %v2661, %v2853
  %v3042 = vsel %vm3036, %v2663, %v2855
  %v3043 = vsel %vm3036, %v2665, %v2857
  %v3044 = vsel %vm3036, %v2667, %v2859
  %v3045 = vsel %vm3036, %v2669, %v2861
  %v3046 = vsel %vm3036, %v2671, %v2863
  %v3047 = vsel %vm3036, %v2673, %v2865
  %v3048 = vsel %vm3036, %v2675, %v2867
  %v3049 = vsel %vm3036, %v2677, %v2869
  %v3050 = vsel %vm3036, %v2679, %v2871
  %v3051 = vsel %vm3036, %v2681, %v2873
  %v3052 = vsel %vm3036, %v2683, %v2875
  %v3053 = vsel %vm3036, %v2685, %v2877
  %v3054 = vsel %vm3036, %v2687, %v2879
  %v3055 = vsel %vm3036, %v2689, %v2881
  %v3056 = vsel %vm3036, %v2691, %v2883
  %v3057 = vsel %vm3036, %v2693, %v2885
  %v3058 = vsel %vm3036, %v2695, %v2887
  %v3059 = vsel %vm3036, %v2697, %v2889
  %v3060 = vsel %vm3036, %v2699, %v2891
  %v3061 = vsel %vm3036, %v2701, %v2893
  %v3062 = vsel %vm3036, %v2703, %v2895
  %v3063 = vsel %vm3036, %v2705, %v2897
  %v3064 = vsel %vm3036, %v2707, %v2899
  %v3065 = vsel %vm3036, %v2709, %v2901
  %v3066 = vsel %vm3036, %v2711, %v2903
  %v3067 = vsel %vm3036, %v2713, %v2905
  %v3068 = vsel %vm3036, %v2715, %v2907
  %v3069 = vsel %vm3036, %v2717, %v2909
  %v3070 = vsel %vm3036, %v2719, %v2911
  %v3071 = vsel %vm3036, %v2721, %v2913
  %v3072 = vsel %vm3036, %v2723, %v2915
  %v3073 = vsel %vm3036, %v2725, %v2917
  %v3074 = vsel %vm3036, %v2727, %v2919
  %v3075 = vsel %vm3036, %v2729, %v2921
  %v3076 = vsel %vm3036, %v2731, %v2923
  %v3077 = vsel %vm3036, %v2733, %v2925
  %v3078 = vsel %vm3036, %v2735, %v2927
  %v3079 = vsel %vm3036, %v2737, %v2929
  %v3080 = vsel %vm3036, %v2739, %v2931
  %v3081 = vsel %vm3036, %v2741, %v2933
  %v3082 = vsel %vm3036, %v2743, %v2935
  %v3083 = vsel %vm3036, %v2745, %v2937
  %v3084 = vsel %vm3036, %v2747, %v2939
  %v3085 = vsel %vm3036, %v2749, %v2941
  %v3086 = vsel %vm3036, %v2751, %v2943
  %v3087 = vsel %vm3036, %v2753, %v2945
  %v3088 = vsel %vm3036, %v2755, %v2947
  %v3089 = vsel %vm3036, %v2757, %v2949
  %v3090 = vsel %vm3036, %v2759, %v2951
  %v3091 = vsel %vm3036, %v2761, %v2953
  %v3092 = vsel %vm3036, %v2763, %v2955
  %v3093 = vsel %vm3036, %v2765, %v2957
  %v3094 = vsel %vm3036, %v2767, %v2959
  %v3095 = vsel %vm3036, %v2769, %v2961
  %v3096 = vsel %vm3036, %v2771, %v2963
  %v3097 = vsel %vm3036, %v2773, %v2965
  %v3098 = vsel %vm3036, %v2775, %v2967
  %v3099 = vsel %vm3036, %v2777, %v2969
  %v3100 = vsel %vm3036, %v2779, %v2971
  %3101 = vrot.lane.b32.xlu0 %v2524, 94
  %v3102 = vpop.permute.xlu0 %3101
  %3103 = vrot.lane.b32.xlu0 %v2525, 94
  %v3104 = vpop.permute.xlu0 %3103
  %3105 = vrot.lane.b32.xlu0 %v2526, 94
  %v3106 = vpop.permute.xlu0 %3105
  %3107 = vrot.lane.b32.xlu0 %v2527, 94
  %v3108 = vpop.permute.xlu0 %3107
  %3109 = vrot.lane.b32.xlu0 %v2528, 94
  %v3110 = vpop.permute.xlu0 %3109
  %3111 = vrot.lane.b32.xlu0 %v2529, 94
  %v3112 = vpop.permute.xlu0 %3111
  %3113 = vrot.lane.b32.xlu0 %v2530, 94
  %v3114 = vpop.permute.xlu0 %3113
  %3115 = vrot.lane.b32.xlu0 %v2531, 94
  %v3116 = vpop.permute.xlu0 %3115
  %3117 = vrot.lane.b32.xlu0 %v2532, 94
  %v3118 = vpop.permute.xlu0 %3117
  %3119 = vrot.lane.b32.xlu0 %v2533, 94
  %v3120 = vpop.permute.xlu0 %3119
  %3121 = vrot.lane.b32.xlu0 %v2534, 94
  %v3122 = vpop.permute.xlu0 %3121
  %3123 = vrot.lane.b32.xlu0 %v2535, 94
  %v3124 = vpop.permute.xlu0 %3123
  %3125 = vrot.lane.b32.xlu0 %v2536, 94
  %v3126 = vpop.permute.xlu0 %3125
  %3127 = vrot.lane.b32.xlu0 %v2537, 94
  %v3128 = vpop.permute.xlu0 %3127
  %3129 = vrot.lane.b32.xlu0 %v2538, 94
  %v3130 = vpop.permute.xlu0 %3129
  %3131 = vrot.lane.b32.xlu0 %v2539, 94
  %v3132 = vpop.permute.xlu0 %3131
  %3133 = vrot.lane.b32.xlu0 %v2540, 94
  %v3134 = vpop.permute.xlu0 %3133
  %3135 = vrot.lane.b32.xlu0 %v2541, 94
  %v3136 = vpop.permute.xlu0 %3135
  %3137 = vrot.lane.b32.xlu0 %v2542, 94
  %v3138 = vpop.permute.xlu0 %3137
  %3139 = vrot.lane.b32.xlu0 %v2543, 94
  %v3140 = vpop.permute.xlu0 %3139
  %3141 = vrot.lane.b32.xlu0 %v2544, 94
  %v3142 = vpop.permute.xlu0 %3141
  %3143 = vrot.lane.b32.xlu0 %v2545, 94
  %v3144 = vpop.permute.xlu0 %3143
  %3145 = vrot.lane.b32.xlu0 %v2546, 94
  %v3146 = vpop.permute.xlu0 %3145
  %3147 = vrot.lane.b32.xlu0 %v2547, 94
  %v3148 = vpop.permute.xlu0 %3147
  %3149 = vrot.lane.b32.xlu0 %v2548, 94
  %v3150 = vpop.permute.xlu0 %3149
  %3151 = vrot.lane.b32.xlu0 %v2549, 94
  %v3152 = vpop.permute.xlu0 %3151
  %3153 = vrot.lane.b32.xlu0 %v2550, 94
  %v3154 = vpop.permute.xlu0 %3153
  %3155 = vrot.lane.b32.xlu0 %v2551, 94
  %v3156 = vpop.permute.xlu0 %3155
  %3157 = vrot.lane.b32.xlu0 %v2552, 94
  %v3158 = vpop.permute.xlu0 %3157
  %3159 = vrot.lane.b32.xlu0 %v2553, 94
  %v3160 = vpop.permute.xlu0 %3159
  %3161 = vrot.lane.b32.xlu0 %v2554, 94
  %v3162 = vpop.permute.xlu0 %3161
  %3163 = vrot.lane.b32.xlu0 %v2555, 94
  %v3164 = vpop.permute.xlu0 %3163
  %3165 = vrot.lane.b32.xlu0 %v2556, 94
  %v3166 = vpop.permute.xlu0 %3165
  %3167 = vrot.lane.b32.xlu0 %v2557, 94
  %v3168 = vpop.permute.xlu0 %3167
  %3169 = vrot.lane.b32.xlu0 %v2558, 94
  %v3170 = vpop.permute.xlu0 %3169
  %3171 = vrot.lane.b32.xlu0 %v2559, 94
  %v3172 = vpop.permute.xlu0 %3171
  %3173 = vrot.lane.b32.xlu0 %v2560, 94
  %v3174 = vpop.permute.xlu0 %3173
  %3175 = vrot.lane.b32.xlu0 %v2561, 94
  %v3176 = vpop.permute.xlu0 %3175
  %3177 = vrot.lane.b32.xlu0 %v2562, 94
  %v3178 = vpop.permute.xlu0 %3177
  %3179 = vrot.lane.b32.xlu0 %v2563, 94
  %v3180 = vpop.permute.xlu0 %3179
  %3181 = vrot.lane.b32.xlu0 %v2564, 94
  %v3182 = vpop.permute.xlu0 %3181
  %3183 = vrot.lane.b32.xlu0 %v2565, 94
  %v3184 = vpop.permute.xlu0 %3183
  %3185 = vrot.lane.b32.xlu0 %v2566, 94
  %v3186 = vpop.permute.xlu0 %3185
  %3187 = vrot.lane.b32.xlu0 %v2567, 94
  %v3188 = vpop.permute.xlu0 %3187
  %3189 = vrot.lane.b32.xlu0 %v2568, 94
  %v3190 = vpop.permute.xlu0 %3189
  %3191 = vrot.lane.b32.xlu0 %v2569, 94
  %v3192 = vpop.permute.xlu0 %3191
  %3193 = vrot.lane.b32.xlu0 %v2570, 94
  %v3194 = vpop.permute.xlu0 %3193
  %3195 = vrot.lane.b32.xlu0 %v2571, 94
  %v3196 = vpop.permute.xlu0 %3195
  %3197 = vrot.lane.b32.xlu0 %v2572, 94
  %v3198 = vpop.permute.xlu0 %3197
  %3199 = vrot.lane.b32.xlu0 %v2573, 94
  %v3200 = vpop.permute.xlu0 %3199
  %3201 = vrot.lane.b32.xlu0 %v2574, 94
  %v3202 = vpop.permute.xlu0 %3201
  %3203 = vrot.lane.b32.xlu0 %v2575, 94
  %v3204 = vpop.permute.xlu0 %3203
  %3205 = vrot.lane.b32.xlu0 %v2576, 94
  %v3206 = vpop.permute.xlu0 %3205
  %3207 = vrot.lane.b32.xlu0 %v2577, 94
  %v3208 = vpop.permute.xlu0 %3207
  %3209 = vrot.lane.b32.xlu0 %v2578, 94
  %v3210 = vpop.permute.xlu0 %3209
  %3211 = vrot.lane.b32.xlu0 %v2579, 94
  %v3212 = vpop.permute.xlu0 %3211
  %3213 = vrot.lane.b32.xlu0 %v2580, 94
  %v3214 = vpop.permute.xlu0 %3213
  %3215 = vrot.lane.b32.xlu0 %v2581, 94
  %v3216 = vpop.permute.xlu0 %3215
  %3217 = vrot.lane.b32.xlu0 %v2582, 94
  %v3218 = vpop.permute.xlu0 %3217
  %3219 = vrot.lane.b32.xlu0 %v2583, 94
  %v3220 = vpop.permute.xlu0 %3219
  %3221 = vrot.lane.b32.xlu0 %v2584, 94
  %v3222 = vpop.permute.xlu0 %3221
  %3223 = vrot.lane.b32.xlu0 %v2585, 94
  %v3224 = vpop.permute.xlu0 %3223
  %3225 = vrot.lane.b32.xlu0 %v2586, 94
  %v3226 = vpop.permute.xlu0 %3225
  %3227 = vrot.lane.b32.xlu0 %v2587, 94
  %v3228 = vpop.permute.xlu0 %3227
  %3293 = vrot.lane.b32.xlu0 %v2524, 110
  %v3294 = vpop.permute.xlu0 %3293
  %3295 = vrot.lane.b32.xlu0 %v2525, 110
  %v3296 = vpop.permute.xlu0 %3295
  %3297 = vrot.lane.b32.xlu0 %v2526, 110
  %v3298 = vpop.permute.xlu0 %3297
  %3299 = vrot.lane.b32.xlu0 %v2527, 110
  %v3300 = vpop.permute.xlu0 %3299
  %3301 = vrot.lane.b32.xlu0 %v2528, 110
  %v3302 = vpop.permute.xlu0 %3301
  %3303 = vrot.lane.b32.xlu0 %v2529, 110
  %v3304 = vpop.permute.xlu0 %3303
  %3305 = vrot.lane.b32.xlu0 %v2530, 110
  %v3306 = vpop.permute.xlu0 %3305
  %3307 = vrot.lane.b32.xlu0 %v2531, 110
  %v3308 = vpop.permute.xlu0 %3307
  %3309 = vrot.lane.b32.xlu0 %v2532, 110
  %v3310 = vpop.permute.xlu0 %3309
  %3311 = vrot.lane.b32.xlu0 %v2533, 110
  %v3312 = vpop.permute.xlu0 %3311
  %3313 = vrot.lane.b32.xlu0 %v2534, 110
  %v3314 = vpop.permute.xlu0 %3313
  %3315 = vrot.lane.b32.xlu0 %v2535, 110
  %v3316 = vpop.permute.xlu0 %3315
  %3317 = vrot.lane.b32.xlu0 %v2536, 110
  %v3318 = vpop.permute.xlu0 %3317
  %3319 = vrot.lane.b32.xlu0 %v2537, 110
  %v3320 = vpop.permute.xlu0 %3319
  %3321 = vrot.lane.b32.xlu0 %v2538, 110
  %v3322 = vpop.permute.xlu0 %3321
  %3323 = vrot.lane.b32.xlu0 %v2539, 110
  %v3324 = vpop.permute.xlu0 %3323
  %3325 = vrot.lane.b32.xlu0 %v2540, 110
  %v3326 = vpop.permute.xlu0 %3325
  %3327 = vrot.lane.b32.xlu0 %v2541, 110
  %v3328 = vpop.permute.xlu0 %3327
  %3329 = vrot.lane.b32.xlu0 %v2542, 110
  %v3330 = vpop.permute.xlu0 %3329
  %3331 = vrot.lane.b32.xlu0 %v2543, 110
  %v3332 = vpop.permute.xlu0 %3331
  %3333 = vrot.lane.b32.xlu0 %v2544, 110
  %v3334 = vpop.permute.xlu0 %3333
  %3335 = vrot.lane.b32.xlu0 %v2545, 110
  %v3336 = vpop.permute.xlu0 %3335
  %3337 = vrot.lane.b32.xlu0 %v2546, 110
  %v3338 = vpop.permute.xlu0 %3337
  %3339 = vrot.lane.b32.xlu0 %v2547, 110
  %v3340 = vpop.permute.xlu0 %3339
  %3341 = vrot.lane.b32.xlu0 %v2548, 110
  %v3342 = vpop.permute.xlu0 %3341
  %3343 = vrot.lane.b32.xlu0 %v2549, 110
  %v3344 = vpop.permute.xlu0 %3343
  %3345 = vrot.lane.b32.xlu0 %v2550, 110
  %v3346 = vpop.permute.xlu0 %3345
  %3347 = vrot.lane.b32.xlu0 %v2551, 110
  %v3348 = vpop.permute.xlu0 %3347
  %3349 = vrot.lane.b32.xlu0 %v2552, 110
  %v3350 = vpop.permute.xlu0 %3349
  %3351 = vrot.lane.b32.xlu0 %v2553, 110
  %v3352 = vpop.permute.xlu0 %3351
  %3353 = vrot.lane.b32.xlu0 %v2554, 110
  %v3354 = vpop.permute.xlu0 %3353
  %3355 = vrot.lane.b32.xlu0 %v2555, 110
  %v3356 = vpop.permute.xlu0 %3355
  %3357 = vrot.lane.b32.xlu0 %v2556, 110
  %v3358 = vpop.permute.xlu0 %3357
  %3359 = vrot.lane.b32.xlu0 %v2557, 110
  %v3360 = vpop.permute.xlu0 %3359
  %3361 = vrot.lane.b32.xlu0 %v2558, 110
  %v3362 = vpop.permute.xlu0 %3361
  %3363 = vrot.lane.b32.xlu0 %v2559, 110
  %v3364 = vpop.permute.xlu0 %3363
  %3365 = vrot.lane.b32.xlu0 %v2560, 110
  %v3366 = vpop.permute.xlu0 %3365
  %3367 = vrot.lane.b32.xlu0 %v2561, 110
  %v3368 = vpop.permute.xlu0 %3367
  %3369 = vrot.lane.b32.xlu0 %v2562, 110
  %v3370 = vpop.permute.xlu0 %3369
  %3371 = vrot.lane.b32.xlu0 %v2563, 110
  %v3372 = vpop.permute.xlu0 %3371
  %3373 = vrot.lane.b32.xlu0 %v2564, 110
  %v3374 = vpop.permute.xlu0 %3373
  %3375 = vrot.lane.b32.xlu0 %v2565, 110
  %v3376 = vpop.permute.xlu0 %3375
  %3377 = vrot.lane.b32.xlu0 %v2566, 110
  %v3378 = vpop.permute.xlu0 %3377
  %3379 = vrot.lane.b32.xlu0 %v2567, 110
  %v3380 = vpop.permute.xlu0 %3379
  %3381 = vrot.lane.b32.xlu0 %v2568, 110
  %v3382 = vpop.permute.xlu0 %3381
  %3383 = vrot.lane.b32.xlu0 %v2569, 110
  %v3384 = vpop.permute.xlu0 %3383
  %3385 = vrot.lane.b32.xlu0 %v2570, 110
  %v3386 = vpop.permute.xlu0 %3385
  %3387 = vrot.lane.b32.xlu0 %v2571, 110
  %v3388 = vpop.permute.xlu0 %3387
  %3389 = vrot.lane.b32.xlu0 %v2572, 110
  %v3390 = vpop.permute.xlu0 %3389
  %3391 = vrot.lane.b32.xlu0 %v2573, 110
  %v3392 = vpop.permute.xlu0 %3391
  %3393 = vrot.lane.b32.xlu0 %v2574, 110
  %v3394 = vpop.permute.xlu0 %3393
  %3395 = vrot.lane.b32.xlu0 %v2575, 110
  %v3396 = vpop.permute.xlu0 %3395
  %3397 = vrot.lane.b32.xlu0 %v2576, 110
  %v3398 = vpop.permute.xlu0 %3397
  %3399 = vrot.lane.b32.xlu0 %v2577, 110
  %v3400 = vpop.permute.xlu0 %3399
  %3401 = vrot.lane.b32.xlu0 %v2578, 110
  %v3402 = vpop.permute.xlu0 %3401
  %3403 = vrot.lane.b32.xlu0 %v2579, 110
  %v3404 = vpop.permute.xlu0 %3403
  %3405 = vrot.lane.b32.xlu0 %v2580, 110
  %v3406 = vpop.permute.xlu0 %3405
  %3407 = vrot.lane.b32.xlu0 %v2581, 110
  %v3408 = vpop.permute.xlu0 %3407
  %3409 = vrot.lane.b32.xlu0 %v2582, 110
  %v3410 = vpop.permute.xlu0 %3409
  %3411 = vrot.lane.b32.xlu0 %v2583, 110
  %v3412 = vpop.permute.xlu0 %3411
  %3413 = vrot.lane.b32.xlu0 %v2584, 110
  %v3414 = vpop.permute.xlu0 %3413
  %3415 = vrot.lane.b32.xlu0 %v2585, 110
  %v3416 = vpop.permute.xlu0 %3415
  %3417 = vrot.lane.b32.xlu0 %v2586, 110
  %v3418 = vpop.permute.xlu0 %3417
  %3419 = vrot.lane.b32.xlu0 %v2587, 110
  %v3420 = vpop.permute.xlu0 %3419
  %vm3485 = vcmask 113664
  %v3486 = vsel %vm3485, %v3102, %v3294
  %v3487 = vsel %vm3485, %v3104, %v3296
  %v3488 = vsel %vm3485, %v3106, %v3298
  %v3489 = vsel %vm3485, %v3108, %v3300
  %v3490 = vsel %vm3485, %v3110, %v3302
  %v3491 = vsel %vm3485, %v3112, %v3304
  %v3492 = vsel %vm3485, %v3114, %v3306
  %v3493 = vsel %vm3485, %v3116, %v3308
  %v3494 = vsel %vm3485, %v3118, %v3310
  %v3495 = vsel %vm3485, %v3120, %v3312
  %v3496 = vsel %vm3485, %v3122, %v3314
  %v3497 = vsel %vm3485, %v3124, %v3316
  %v3498 = vsel %vm3485, %v3126, %v3318
  %v3499 = vsel %vm3485, %v3128, %v3320
  %v3500 = vsel %vm3485, %v3130, %v3322
  %v3501 = vsel %vm3485, %v3132, %v3324
  %v3502 = vsel %vm3485, %v3134, %v3326
  %v3503 = vsel %vm3485, %v3136, %v3328
  %v3504 = vsel %vm3485, %v3138, %v3330
  %v3505 = vsel %vm3485, %v3140, %v3332
  %v3506 = vsel %vm3485, %v3142, %v3334
  %v3507 = vsel %vm3485, %v3144, %v3336
  %v3508 = vsel %vm3485, %v3146, %v3338
  %v3509 = vsel %vm3485, %v3148, %v3340
  %v3510 = vsel %vm3485, %v3150, %v3342
  %v3511 = vsel %vm3485, %v3152, %v3344
  %v3512 = vsel %vm3485, %v3154, %v3346
  %v3513 = vsel %vm3485, %v3156, %v3348
  %v3514 = vsel %vm3485, %v3158, %v3350
  %v3515 = vsel %vm3485, %v3160, %v3352
  %v3516 = vsel %vm3485, %v3162, %v3354
  %v3517 = vsel %vm3485, %v3164, %v3356
  %v3518 = vsel %vm3485, %v3166, %v3358
  %v3519 = vsel %vm3485, %v3168, %v3360
  %v3520 = vsel %vm3485, %v3170, %v3362
  %v3521 = vsel %vm3485, %v3172, %v3364
  %v3522 = vsel %vm3485, %v3174, %v3366
  %v3523 = vsel %vm3485, %v3176, %v3368
  %v3524 = vsel %vm3485, %v3178, %v3370
  %v3525 = vsel %vm3485, %v3180, %v3372
  %v3526 = vsel %vm3485, %v3182, %v3374
  %v3527 = vsel %vm3485, %v3184, %v3376
  %v3528 = vsel %vm3485, %v3186, %v3378
  %v3529 = vsel %vm3485, %v3188, %v3380
  %v3530 = vsel %vm3485, %v3190, %v3382
  %v3531 = vsel %vm3485, %v3192, %v3384
  %v3532 = vsel %vm3485, %v3194, %v3386
  %v3533 = vsel %vm3485, %v3196, %v3388
  %v3534 = vsel %vm3485, %v3198, %v3390
  %v3535 = vsel %vm3485, %v3200, %v3392
  %v3536 = vsel %vm3485, %v3202, %v3394
  %v3537 = vsel %vm3485, %v3204, %v3396
  %v3538 = vsel %vm3485, %v3206, %v3398
  %v3539 = vsel %vm3485, %v3208, %v3400
  %v3540 = vsel %vm3485, %v3210, %v3402
  %v3541 = vsel %vm3485, %v3212, %v3404
  %v3542 = vsel %vm3485, %v3214, %v3406
  %v3543 = vsel %vm3485, %v3216, %v3408
  %v3544 = vsel %vm3485, %v3218, %v3410
  %v3545 = vsel %vm3485, %v3220, %v3412
  %v3546 = vsel %vm3485, %v3222, %v3414
  %v3547 = vsel %vm3485, %v3224, %v3416
  %v3548 = vsel %vm3485, %v3226, %v3418
  %v3549 = vsel %vm3485, %v3228, %v3420
  %v3550 = vlaneseq
  %v3551 = vshrl.u32 %v3550, 7
  %v3552 = vsub.s32 0, %v3551
  %v3553 = vrot.slane %v2514, %v3552
  %3554 = vrot.lane.b32.xlu0 %v2524, 96
  %v3555 = vpop.permute.xlu0 %3554
  %3556 = vrot.lane.b32.xlu0 %v2525, 96
  %v3557 = vpop.permute.xlu0 %3556
  %3558 = vrot.lane.b32.xlu0 %v2526, 96
  %v3559 = vpop.permute.xlu0 %3558
  %3560 = vrot.lane.b32.xlu0 %v2527, 96
  %v3561 = vpop.permute.xlu0 %3560
  %3562 = vrot.lane.b32.xlu0 %v2528, 96
  %v3563 = vpop.permute.xlu0 %3562
  %3564 = vrot.lane.b32.xlu0 %v2529, 96
  %v3565 = vpop.permute.xlu0 %3564
  %3566 = vrot.lane.b32.xlu0 %v2530, 96
  %v3567 = vpop.permute.xlu0 %3566
  %3568 = vrot.lane.b32.xlu0 %v2531, 96
  %v3569 = vpop.permute.xlu0 %3568
  %3570 = vrot.lane.b32.xlu0 %v2532, 96
  %v3571 = vpop.permute.xlu0 %3570
  %3572 = vrot.lane.b32.xlu0 %v2533, 96
  %v3573 = vpop.permute.xlu0 %3572
  %3574 = vrot.lane.b32.xlu0 %v2534, 96
  %v3575 = vpop.permute.xlu0 %3574
  %3576 = vrot.lane.b32.xlu0 %v2535, 96
  %v3577 = vpop.permute.xlu0 %3576
  %3578 = vrot.lane.b32.xlu0 %v2536, 96
  %v3579 = vpop.permute.xlu0 %3578
  %3580 = vrot.lane.b32.xlu0 %v2537, 96
  %v3581 = vpop.permute.xlu0 %3580
  %3582 = vrot.lane.b32.xlu0 %v2538, 96
  %v3583 = vpop.permute.xlu0 %3582
  %3584 = vrot.lane.b32.xlu0 %v2539, 96
  %v3585 = vpop.permute.xlu0 %3584
  %3586 = vrot.lane.b32.xlu0 %v2540, 96
  %v3587 = vpop.permute.xlu0 %3586
  %3588 = vrot.lane.b32.xlu0 %v2541, 96
  %v3589 = vpop.permute.xlu0 %3588
  %3590 = vrot.lane.b32.xlu0 %v2542, 96
  %v3591 = vpop.permute.xlu0 %3590
  %3592 = vrot.lane.b32.xlu0 %v2543, 96
  %v3593 = vpop.permute.xlu0 %3592
  %3594 = vrot.lane.b32.xlu0 %v2544, 96
  %v3595 = vpop.permute.xlu0 %3594
  %3596 = vrot.lane.b32.xlu0 %v2545, 96
  %v3597 = vpop.permute.xlu0 %3596
  %3598 = vrot.lane.b32.xlu0 %v2546, 96
  %v3599 = vpop.permute.xlu0 %3598
  %3600 = vrot.lane.b32.xlu0 %v2547, 96
  %v3601 = vpop.permute.xlu0 %3600
  %3602 = vrot.lane.b32.xlu0 %v2548, 96
  %v3603 = vpop.permute.xlu0 %3602
  %3604 = vrot.lane.b32.xlu0 %v2549, 96
  %v3605 = vpop.permute.xlu0 %3604
  %3606 = vrot.lane.b32.xlu0 %v2550, 96
  %v3607 = vpop.permute.xlu0 %3606
  %3608 = vrot.lane.b32.xlu0 %v2551, 96
  %v3609 = vpop.permute.xlu0 %3608
  %3610 = vrot.lane.b32.xlu0 %v2552, 96
  %v3611 = vpop.permute.xlu0 %3610
  %3612 = vrot.lane.b32.xlu0 %v2553, 96
  %v3613 = vpop.permute.xlu0 %3612
  %3614 = vrot.lane.b32.xlu0 %v2554, 96
  %v3615 = vpop.permute.xlu0 %3614
  %3616 = vrot.lane.b32.xlu0 %v2555, 96
  %v3617 = vpop.permute.xlu0 %3616
  %3618 = vrot.lane.b32.xlu0 %v2556, 96
  %v3619 = vpop.permute.xlu0 %3618
  %3620 = vrot.lane.b32.xlu0 %v2557, 96
  %v3621 = vpop.permute.xlu0 %3620
  %3622 = vrot.lane.b32.xlu0 %v2558, 96
  %v3623 = vpop.permute.xlu0 %3622
  %3624 = vrot.lane.b32.xlu0 %v2559, 96
  %v3625 = vpop.permute.xlu0 %3624
  %3626 = vrot.lane.b32.xlu0 %v2560, 96
  %v3627 = vpop.permute.xlu0 %3626
  %3628 = vrot.lane.b32.xlu0 %v2561, 96
  %v3629 = vpop.permute.xlu0 %3628
  %3630 = vrot.lane.b32.xlu0 %v2562, 96
  %v3631 = vpop.permute.xlu0 %3630
  %3632 = vrot.lane.b32.xlu0 %v2563, 96
  %v3633 = vpop.permute.xlu0 %3632
  %3634 = vrot.lane.b32.xlu0 %v2564, 96
  %v3635 = vpop.permute.xlu0 %3634
  %3636 = vrot.lane.b32.xlu0 %v2565, 96
  %v3637 = vpop.permute.xlu0 %3636
  %3638 = vrot.lane.b32.xlu0 %v2566, 96
  %v3639 = vpop.permute.xlu0 %3638
  %3640 = vrot.lane.b32.xlu0 %v2567, 96
  %v3641 = vpop.permute.xlu0 %3640
  %3642 = vrot.lane.b32.xlu0 %v2568, 96
  %v3643 = vpop.permute.xlu0 %3642
  %3644 = vrot.lane.b32.xlu0 %v2569, 96
  %v3645 = vpop.permute.xlu0 %3644
  %3646 = vrot.lane.b32.xlu0 %v2570, 96
  %v3647 = vpop.permute.xlu0 %3646
  %3648 = vrot.lane.b32.xlu0 %v2571, 96
  %v3649 = vpop.permute.xlu0 %3648
  %3650 = vrot.lane.b32.xlu0 %v2572, 96
  %v3651 = vpop.permute.xlu0 %3650
  %3652 = vrot.lane.b32.xlu0 %v2573, 96
  %v3653 = vpop.permute.xlu0 %3652
  %3654 = vrot.lane.b32.xlu0 %v2574, 96
  %v3655 = vpop.permute.xlu0 %3654
  %3656 = vrot.lane.b32.xlu0 %v2575, 96
  %v3657 = vpop.permute.xlu0 %3656
  %3658 = vrot.lane.b32.xlu0 %v2576, 96
  %v3659 = vpop.permute.xlu0 %3658
  %3660 = vrot.lane.b32.xlu0 %v2577, 96
  %v3661 = vpop.permute.xlu0 %3660
  %3662 = vrot.lane.b32.xlu0 %v2578, 96
  %v3663 = vpop.permute.xlu0 %3662
  %3664 = vrot.lane.b32.xlu0 %v2579, 96
  %v3665 = vpop.permute.xlu0 %3664
  %3666 = vrot.lane.b32.xlu0 %v2580, 96
  %v3667 = vpop.permute.xlu0 %3666
  %3668 = vrot.lane.b32.xlu0 %v2581, 96
  %v3669 = vpop.permute.xlu0 %3668
  %3670 = vrot.lane.b32.xlu0 %v2582, 96
  %v3671 = vpop.permute.xlu0 %3670
  %3672 = vrot.lane.b32.xlu0 %v2583, 96
  %v3673 = vpop.permute.xlu0 %3672
  %3674 = vrot.lane.b32.xlu0 %v2584, 96
  %v3675 = vpop.permute.xlu0 %3674
  %3676 = vrot.lane.b32.xlu0 %v2585, 96
  %v3677 = vpop.permute.xlu0 %3676
  %3678 = vrot.lane.b32.xlu0 %v2586, 96
  %v3679 = vpop.permute.xlu0 %3678
  %3680 = vrot.lane.b32.xlu0 %v2587, 96
  %v3681 = vpop.permute.xlu0 %3680
  %v3746 = vmul.f32 %v3553, %v3555
  %v3747 = vmul.f32 %v3553, %v3557
  %v3748 = vmul.f32 %v3553, %v3559
  %v3749 = vmul.f32 %v3553, %v3561
  %v3750 = vmul.f32 %v3553, %v3563
  %v3751 = vmul.f32 %v3553, %v3565
  %v3752 = vmul.f32 %v3553, %v3567
  %v3753 = vmul.f32 %v3553, %v3569
  %v3754 = vmul.f32 %v3553, %v3571
  %v3755 = vmul.f32 %v3553, %v3573
  %v3756 = vmul.f32 %v3553, %v3575
  %v3757 = vmul.f32 %v3553, %v3577
  %v3758 = vmul.f32 %v3553, %v3579
  %v3759 = vmul.f32 %v3553, %v3581
  %v3760 = vmul.f32 %v3553, %v3583
  %v3761 = vmul.f32 %v3553, %v3585
  %v3762 = vmul.f32 %v3553, %v3587
  %v3763 = vmul.f32 %v3553, %v3589
  %v3764 = vmul.f32 %v3553, %v3591
  %v3765 = vmul.f32 %v3553, %v3593
  %v3766 = vmul.f32 %v3553, %v3595
  %v3767 = vmul.f32 %v3553, %v3597
  %v3768 = vmul.f32 %v3553, %v3599
  %v3769 = vmul.f32 %v3553, %v3601
  %v3770 = vmul.f32 %v3553, %v3603
  %v3771 = vmul.f32 %v3553, %v3605
  %v3772 = vmul.f32 %v3553, %v3607
  %v3773 = vmul.f32 %v3553, %v3609
  %v3774 = vmul.f32 %v3553, %v3611
  %v3775 = vmul.f32 %v3553, %v3613
  %v3776 = vmul.f32 %v3553, %v3615
  %v3777 = vmul.f32 %v3553, %v3617
  %v3778 = vmul.f32 %v3553, %v3619
  %v3779 = vmul.f32 %v3553, %v3621
  %v3780 = vmul.f32 %v3553, %v3623
  %v3781 = vmul.f32 %v3553, %v3625
  %v3782 = vmul.f32 %v3553, %v3627
  %v3783 = vmul.f32 %v3553, %v3629
  %v3784 = vmul.f32 %v3553, %v3631
  %v3785 = vmul.f32 %v3553, %v3633
  %v3786 = vmul.f32 %v3553, %v3635
  %v3787 = vmul.f32 %v3553, %v3637
  %v3788 = vmul.f32 %v3553, %v3639
  %v3789 = vmul.f32 %v3553, %v3641
  %v3790 = vmul.f32 %v3553, %v3643
  %v3791 = vmul.f32 %v3553, %v3645
  %v3792 = vmul.f32 %v3553, %v3647
  %v3793 = vmul.f32 %v3553, %v3649
  %v3794 = vmul.f32 %v3553, %v3651
  %v3795 = vmul.f32 %v3553, %v3653
  %v3796 = vmul.f32 %v3553, %v3655
  %v3797 = vmul.f32 %v3553, %v3657
  %v3798 = vmul.f32 %v3553, %v3659
  %v3799 = vmul.f32 %v3553, %v3661
  %v3800 = vmul.f32 %v3553, %v3663
  %v3801 = vmul.f32 %v3553, %v3665
  %v3802 = vmul.f32 %v3553, %v3667
  %v3803 = vmul.f32 %v3553, %v3669
  %v3804 = vmul.f32 %v3553, %v3671
  %v3805 = vmul.f32 %v3553, %v3673
  %v3806 = vmul.f32 %v3553, %v3675
  %v3807 = vmul.f32 %v3553, %v3677
  %v3808 = vmul.f32 %v3553, %v3679
  %v3809 = vmul.f32 %v3553, %v3681
  %v3810 = vsub.f32 1.0, %v2514
  %v3811 = vlaneseq
  %v3812 = vshrl.u32 %v3811, 7
  %v3813 = vsub.s32 0, %v3812
  %v3814 = vrot.slane %v3810, %v3813
  %v3815 = vmul.f32 %v3814, %v3037
  %v3816 = vmul.f32 %v3814, %v3038
  %v3817 = vmul.f32 %v3814, %v3039
  %v3818 = vmul.f32 %v3814, %v3040
  %v3819 = vmul.f32 %v3814, %v3041
  %v3820 = vmul.f32 %v3814, %v3042
  %v3821 = vmul.f32 %v3814, %v3043
  %v3822 = vmul.f32 %v3814, %v3044
  %v3823 = vmul.f32 %v3814, %v3045
  %v3824 = vmul.f32 %v3814, %v3046
  %v3825 = vmul.f32 %v3814, %v3047
  %v3826 = vmul.f32 %v3814, %v3048
  %v3827 = vmul.f32 %v3814, %v3049
  %v3828 = vmul.f32 %v3814, %v3050
  %v3829 = vmul.f32 %v3814, %v3051
  %v3830 = vmul.f32 %v3814, %v3052
  %v3831 = vmul.f32 %v3814, %v3053
  %v3832 = vmul.f32 %v3814, %v3054
  %v3833 = vmul.f32 %v3814, %v3055
  %v3834 = vmul.f32 %v3814, %v3056
  %v3835 = vmul.f32 %v3814, %v3057
  %v3836 = vmul.f32 %v3814, %v3058
  %v3837 = vmul.f32 %v3814, %v3059
  %v3838 = vmul.f32 %v3814, %v3060
  %v3839 = vmul.f32 %v3814, %v3061
  %v3840 = vmul.f32 %v3814, %v3062
  %v3841 = vmul.f32 %v3814, %v3063
  %v3842 = vmul.f32 %v3814, %v3064
  %v3843 = vmul.f32 %v3814, %v3065
  %v3844 = vmul.f32 %v3814, %v3066
  %v3845 = vmul.f32 %v3814, %v3067
  %v3846 = vmul.f32 %v3814, %v3068
  %v3847 = vmul.f32 %v3814, %v3069
  %v3848 = vmul.f32 %v3814, %v3070
  %v3849 = vmul.f32 %v3814, %v3071
  %v3850 = vmul.f32 %v3814, %v3072
  %v3851 = vmul.f32 %v3814, %v3073
  %v3852 = vmul.f32 %v3814, %v3074
  %v3853 = vmul.f32 %v3814, %v3075
  %v3854 = vmul.f32 %v3814, %v3076
  %v3855 = vmul.f32 %v3814, %v3077
  %v3856 = vmul.f32 %v3814, %v3078
  %v3857 = vmul.f32 %v3814, %v3079
  %v3858 = vmul.f32 %v3814, %v3080
  %v3859 = vmul.f32 %v3814, %v3081
  %v3860 = vmul.f32 %v3814, %v3082
  %v3861 = vmul.f32 %v3814, %v3083
  %v3862 = vmul.f32 %v3814, %v3084
  %v3863 = vmul.f32 %v3814, %v3085
  %v3864 = vmul.f32 %v3814, %v3086
  %v3865 = vmul.f32 %v3814, %v3087
  %v3866 = vmul.f32 %v3814, %v3088
  %v3867 = vmul.f32 %v3814, %v3089
  %v3868 = vmul.f32 %v3814, %v3090
  %v3869 = vmul.f32 %v3814, %v3091
  %v3870 = vmul.f32 %v3814, %v3092
  %v3871 = vmul.f32 %v3814, %v3093
  %v3872 = vmul.f32 %v3814, %v3094
  %v3873 = vmul.f32 %v3814, %v3095
  %v3874 = vmul.f32 %v3814, %v3096
  %v3875 = vmul.f32 %v3814, %v3097
  %v3876 = vmul.f32 %v3814, %v3098
  %v3877 = vmul.f32 %v3814, %v3099
  %v3878 = vmul.f32 %v3814, %v3100
  %v3879 = vadd.f32 %v3746, %v3815
  %v3880 = vadd.f32 %v3747, %v3816
  %v3881 = vadd.f32 %v3748, %v3817
  %v3882 = vadd.f32 %v3749, %v3818
  %v3883 = vadd.f32 %v3750, %v3819
  %v3884 = vadd.f32 %v3751, %v3820
  %v3885 = vadd.f32 %v3752, %v3821
  %v3886 = vadd.f32 %v3753, %v3822
  %v3887 = vadd.f32 %v3754, %v3823
  %v3888 = vadd.f32 %v3755, %v3824
  %v3889 = vadd.f32 %v3756, %v3825
  %v3890 = vadd.f32 %v3757, %v3826
  %v3891 = vadd.f32 %v3758, %v3827
  %v3892 = vadd.f32 %v3759, %v3828
  %v3893 = vadd.f32 %v3760, %v3829
  %v3894 = vadd.f32 %v3761, %v3830
  %v3895 = vadd.f32 %v3762, %v3831
  %v3896 = vadd.f32 %v3763, %v3832
  %v3897 = vadd.f32 %v3764, %v3833
  %v3898 = vadd.f32 %v3765, %v3834
  %v3899 = vadd.f32 %v3766, %v3835
  %v3900 = vadd.f32 %v3767, %v3836
  %v3901 = vadd.f32 %v3768, %v3837
  %v3902 = vadd.f32 %v3769, %v3838
  %v3903 = vadd.f32 %v3770, %v3839
  %v3904 = vadd.f32 %v3771, %v3840
  %v3905 = vadd.f32 %v3772, %v3841
  %v3906 = vadd.f32 %v3773, %v3842
  %v3907 = vadd.f32 %v3774, %v3843
  %v3908 = vadd.f32 %v3775, %v3844
  %v3909 = vadd.f32 %v3776, %v3845
  %v3910 = vadd.f32 %v3777, %v3846
  %v3911 = vadd.f32 %v3778, %v3847
  %v3912 = vadd.f32 %v3779, %v3848
  %v3913 = vadd.f32 %v3780, %v3849
  %v3914 = vadd.f32 %v3781, %v3850
  %v3915 = vadd.f32 %v3782, %v3851
  %v3916 = vadd.f32 %v3783, %v3852
  %v3917 = vadd.f32 %v3784, %v3853
  %v3918 = vadd.f32 %v3785, %v3854
  %v3919 = vadd.f32 %v3786, %v3855
  %v3920 = vadd.f32 %v3787, %v3856
  %v3921 = vadd.f32 %v3788, %v3857
  %v3922 = vadd.f32 %v3789, %v3858
  %v3923 = vadd.f32 %v3790, %v3859
  %v3924 = vadd.f32 %v3791, %v3860
  %v3925 = vadd.f32 %v3792, %v3861
  %v3926 = vadd.f32 %v3793, %v3862
  %v3927 = vadd.f32 %v3794, %v3863
  %v3928 = vadd.f32 %v3795, %v3864
  %v3929 = vadd.f32 %v3796, %v3865
  %v3930 = vadd.f32 %v3797, %v3866
  %v3931 = vadd.f32 %v3798, %v3867
  %v3932 = vadd.f32 %v3799, %v3868
  %v3933 = vadd.f32 %v3800, %v3869
  %v3934 = vadd.f32 %v3801, %v3870
  %v3935 = vadd.f32 %v3802, %v3871
  %v3936 = vadd.f32 %v3803, %v3872
  %v3937 = vadd.f32 %v3804, %v3873
  %v3938 = vadd.f32 %v3805, %v3874
  %v3939 = vadd.f32 %v3806, %v3875
  %v3940 = vadd.f32 %v3807, %v3876
  %v3941 = vadd.f32 %v3808, %v3877
  %v3942 = vadd.f32 %v3809, %v3878
  %v3943 = vmul.f32 %v3553, %v3486
  %v3944 = vmul.f32 %v3553, %v3487
  %v3945 = vmul.f32 %v3553, %v3488
  %v3946 = vmul.f32 %v3553, %v3489
  %v3947 = vmul.f32 %v3553, %v3490
  %v3948 = vmul.f32 %v3553, %v3491
  %v3949 = vmul.f32 %v3553, %v3492
  %v3950 = vmul.f32 %v3553, %v3493
  %v3951 = vmul.f32 %v3553, %v3494
  %v3952 = vmul.f32 %v3553, %v3495
  %v3953 = vmul.f32 %v3553, %v3496
  %v3954 = vmul.f32 %v3553, %v3497
  %v3955 = vmul.f32 %v3553, %v3498
  %v3956 = vmul.f32 %v3553, %v3499
  %v3957 = vmul.f32 %v3553, %v3500
  %v3958 = vmul.f32 %v3553, %v3501
  %v3959 = vmul.f32 %v3553, %v3502
  %v3960 = vmul.f32 %v3553, %v3503
  %v3961 = vmul.f32 %v3553, %v3504
  %v3962 = vmul.f32 %v3553, %v3505
  %v3963 = vmul.f32 %v3553, %v3506
  %v3964 = vmul.f32 %v3553, %v3507
  %v3965 = vmul.f32 %v3553, %v3508
  %v3966 = vmul.f32 %v3553, %v3509
  %v3967 = vmul.f32 %v3553, %v3510
  %v3968 = vmul.f32 %v3553, %v3511
  %v3969 = vmul.f32 %v3553, %v3512
  %v3970 = vmul.f32 %v3553, %v3513
  %v3971 = vmul.f32 %v3553, %v3514
  %v3972 = vmul.f32 %v3553, %v3515
  %v3973 = vmul.f32 %v3553, %v3516
  %v3974 = vmul.f32 %v3553, %v3517
  %v3975 = vmul.f32 %v3553, %v3518
  %v3976 = vmul.f32 %v3553, %v3519
  %v3977 = vmul.f32 %v3553, %v3520
  %v3978 = vmul.f32 %v3553, %v3521
  %v3979 = vmul.f32 %v3553, %v3522
  %v3980 = vmul.f32 %v3553, %v3523
  %v3981 = vmul.f32 %v3553, %v3524
  %v3982 = vmul.f32 %v3553, %v3525
  %v3983 = vmul.f32 %v3553, %v3526
  %v3984 = vmul.f32 %v3553, %v3527
  %v3985 = vmul.f32 %v3553, %v3528
  %v3986 = vmul.f32 %v3553, %v3529
  %v3987 = vmul.f32 %v3553, %v3530
  %v3988 = vmul.f32 %v3553, %v3531
  %v3989 = vmul.f32 %v3553, %v3532
  %v3990 = vmul.f32 %v3553, %v3533
  %v3991 = vmul.f32 %v3553, %v3534
  %v3992 = vmul.f32 %v3553, %v3535
  %v3993 = vmul.f32 %v3553, %v3536
  %v3994 = vmul.f32 %v3553, %v3537
  %v3995 = vmul.f32 %v3553, %v3538
  %v3996 = vmul.f32 %v3553, %v3539
  %v3997 = vmul.f32 %v3553, %v3540
  %v3998 = vmul.f32 %v3553, %v3541
  %v3999 = vmul.f32 %v3553, %v3542
  %v4000 = vmul.f32 %v3553, %v3543
  %v4001 = vmul.f32 %v3553, %v3544
  %v4002 = vmul.f32 %v3553, %v3545
  %v4003 = vmul.f32 %v3553, %v3546
  %v4004 = vmul.f32 %v3553, %v3547
  %v4005 = vmul.f32 %v3553, %v3548
  %v4006 = vmul.f32 %v3553, %v3549
  %v4007 = vmul.f32 %v3814, %v3555
  %v4008 = vmul.f32 %v3814, %v3557
  %v4009 = vmul.f32 %v3814, %v3559
  %v4010 = vmul.f32 %v3814, %v3561
  %v4011 = vmul.f32 %v3814, %v3563
  %v4012 = vmul.f32 %v3814, %v3565
  %v4013 = vmul.f32 %v3814, %v3567
  %v4014 = vmul.f32 %v3814, %v3569
  %v4015 = vmul.f32 %v3814, %v3571
  %v4016 = vmul.f32 %v3814, %v3573
  %v4017 = vmul.f32 %v3814, %v3575
  %v4018 = vmul.f32 %v3814, %v3577
  %v4019 = vmul.f32 %v3814, %v3579
  %v4020 = vmul.f32 %v3814, %v3581
  %v4021 = vmul.f32 %v3814, %v3583
  %v4022 = vmul.f32 %v3814, %v3585
  %v4023 = vmul.f32 %v3814, %v3587
  %v4024 = vmul.f32 %v3814, %v3589
  %v4025 = vmul.f32 %v3814, %v3591
  %v4026 = vmul.f32 %v3814, %v3593
  %v4027 = vmul.f32 %v3814, %v3595
  %v4028 = vmul.f32 %v3814, %v3597
  %v4029 = vmul.f32 %v3814, %v3599
  %v4030 = vmul.f32 %v3814, %v3601
  %v4031 = vmul.f32 %v3814, %v3603
  %v4032 = vmul.f32 %v3814, %v3605
  %v4033 = vmul.f32 %v3814, %v3607
  %v4034 = vmul.f32 %v3814, %v3609
  %v4035 = vmul.f32 %v3814, %v3611
  %v4036 = vmul.f32 %v3814, %v3613
  %v4037 = vmul.f32 %v3814, %v3615
  %v4038 = vmul.f32 %v3814, %v3617
  %v4039 = vmul.f32 %v3814, %v3619
  %v4040 = vmul.f32 %v3814, %v3621
  %v4041 = vmul.f32 %v3814, %v3623
  %v4042 = vmul.f32 %v3814, %v3625
  %v4043 = vmul.f32 %v3814, %v3627
  %v4044 = vmul.f32 %v3814, %v3629
  %v4045 = vmul.f32 %v3814, %v3631
  %v4046 = vmul.f32 %v3814, %v3633
  %v4047 = vmul.f32 %v3814, %v3635
  %v4048 = vmul.f32 %v3814, %v3637
  %v4049 = vmul.f32 %v3814, %v3639
  %v4050 = vmul.f32 %v3814, %v3641
  %v4051 = vmul.f32 %v3814, %v3643
  %v4052 = vmul.f32 %v3814, %v3645
  %v4053 = vmul.f32 %v3814, %v3647
  %v4054 = vmul.f32 %v3814, %v3649
  %v4055 = vmul.f32 %v3814, %v3651
  %v4056 = vmul.f32 %v3814, %v3653
  %v4057 = vmul.f32 %v3814, %v3655
  %v4058 = vmul.f32 %v3814, %v3657
  %v4059 = vmul.f32 %v3814, %v3659
  %v4060 = vmul.f32 %v3814, %v3661
  %v4061 = vmul.f32 %v3814, %v3663
  %v4062 = vmul.f32 %v3814, %v3665
  %v4063 = vmul.f32 %v3814, %v3667
  %v4064 = vmul.f32 %v3814, %v3669
  %v4065 = vmul.f32 %v3814, %v3671
  %v4066 = vmul.f32 %v3814, %v3673
  %v4067 = vmul.f32 %v3814, %v3675
  %v4068 = vmul.f32 %v3814, %v3677
  %v4069 = vmul.f32 %v3814, %v3679
  %v4070 = vmul.f32 %v3814, %v3681
  %v4071 = vadd.f32 %v3943, %v4007
  %v4072 = vadd.f32 %v3944, %v4008
  %v4073 = vadd.f32 %v3945, %v4009
  %v4074 = vadd.f32 %v3946, %v4010
  %v4075 = vadd.f32 %v3947, %v4011
  %v4076 = vadd.f32 %v3948, %v4012
  %v4077 = vadd.f32 %v3949, %v4013
  %v4078 = vadd.f32 %v3950, %v4014
  %v4079 = vadd.f32 %v3951, %v4015
  %v4080 = vadd.f32 %v3952, %v4016
  %v4081 = vadd.f32 %v3953, %v4017
  %v4082 = vadd.f32 %v3954, %v4018
  %v4083 = vadd.f32 %v3955, %v4019
  %v4084 = vadd.f32 %v3956, %v4020
  %v4085 = vadd.f32 %v3957, %v4021
  %v4086 = vadd.f32 %v3958, %v4022
  %v4087 = vadd.f32 %v3959, %v4023
  %v4088 = vadd.f32 %v3960, %v4024
  %v4089 = vadd.f32 %v3961, %v4025
  %v4090 = vadd.f32 %v3962, %v4026
  %v4091 = vadd.f32 %v3963, %v4027
  %v4092 = vadd.f32 %v3964, %v4028
  %v4093 = vadd.f32 %v3965, %v4029
  %v4094 = vadd.f32 %v3966, %v4030
  %v4095 = vadd.f32 %v3967, %v4031
  %v4096 = vadd.f32 %v3968, %v4032
  %v4097 = vadd.f32 %v3969, %v4033
  %v4098 = vadd.f32 %v3970, %v4034
  %v4099 = vadd.f32 %v3971, %v4035
  %v4100 = vadd.f32 %v3972, %v4036
  %v4101 = vadd.f32 %v3973, %v4037
  %v4102 = vadd.f32 %v3974, %v4038
  %v4103 = vadd.f32 %v3975, %v4039
  %v4104 = vadd.f32 %v3976, %v4040
  %v4105 = vadd.f32 %v3977, %v4041
  %v4106 = vadd.f32 %v3978, %v4042
  %v4107 = vadd.f32 %v3979, %v4043
  %v4108 = vadd.f32 %v3980, %v4044
  %v4109 = vadd.f32 %v3981, %v4045
  %v4110 = vadd.f32 %v3982, %v4046
  %v4111 = vadd.f32 %v3983, %v4047
  %v4112 = vadd.f32 %v3984, %v4048
  %v4113 = vadd.f32 %v3985, %v4049
  %v4114 = vadd.f32 %v3986, %v4050
  %v4115 = vadd.f32 %v3987, %v4051
  %v4116 = vadd.f32 %v3988, %v4052
  %v4117 = vadd.f32 %v3989, %v4053
  %v4118 = vadd.f32 %v3990, %v4054
  %v4119 = vadd.f32 %v3991, %v4055
  %v4120 = vadd.f32 %v3992, %v4056
  %v4121 = vadd.f32 %v3993, %v4057
  %v4122 = vadd.f32 %v3994, %v4058
  %v4123 = vadd.f32 %v3995, %v4059
  %v4124 = vadd.f32 %v3996, %v4060
  %v4125 = vadd.f32 %v3997, %v4061
  %v4126 = vadd.f32 %v3998, %v4062
  %v4127 = vadd.f32 %v3999, %v4063
  %v4128 = vadd.f32 %v4000, %v4064
  %v4129 = vadd.f32 %v4001, %v4065
  %v4130 = vadd.f32 %v4002, %v4066
  %v4131 = vadd.f32 %v4003, %v4067
  %v4132 = vadd.f32 %v4004, %v4068
  %v4133 = vadd.f32 %v4005, %v4069
  %v4134 = vadd.f32 %v4006, %v4070
  %v4135 = vld [vmem:[%s1] sm:$0xff]
  %v4136 = vld [vmem:[%s1 + $0x8] sm:$0xff]
  %v4137 = vld [vmem:[%s1 + $0x10] sm:$0xff]
  %v4138 = vld [vmem:[%s1 + $0x18] sm:$0xff]
  %v4139 = vld [vmem:[%s1 + $0x20] sm:$0xff]
  %v4140 = vld [vmem:[%s1 + $0x28] sm:$0xff]
  %v4141 = vld [vmem:[%s1 + $0x30] sm:$0xff]
  %v4142 = vld [vmem:[%s1 + $0x38] sm:$0xff]
  %v4143 = vld [vmem:[%s1 + $0x40] sm:$0xff]
  %v4144 = vld [vmem:[%s1 + $0x48] sm:$0xff]
  %v4145 = vld [vmem:[%s1 + $0x50] sm:$0xff]
  %v4146 = vld [vmem:[%s1 + $0x58] sm:$0xff]
  %v4147 = vld [vmem:[%s1 + $0x60] sm:$0xff]
  %v4148 = vld [vmem:[%s1 + $0x68] sm:$0xff]
  %v4149 = vld [vmem:[%s1 + $0x70] sm:$0xff]
  %v4150 = vld [vmem:[%s1 + $0x78] sm:$0xff]
  %v4151 = vld [vmem:[%s1 + $0x80] sm:$0xff]
  %v4152 = vld [vmem:[%s1 + $0x88] sm:$0xff]
  %v4153 = vld [vmem:[%s1 + $0x90] sm:$0xff]
  %v4154 = vld [vmem:[%s1 + $0x98] sm:$0xff]
  %v4155 = vld [vmem:[%s1 + $0xa0] sm:$0xff]
  %v4156 = vld [vmem:[%s1 + $0xa8] sm:$0xff]
  %v4157 = vld [vmem:[%s1 + $0xb0] sm:$0xff]
  %v4158 = vld [vmem:[%s1 + $0xb8] sm:$0xff]
  %v4159 = vld [vmem:[%s1 + $0xc0] sm:$0xff]
  %v4160 = vld [vmem:[%s1 + $0xc8] sm:$0xff]
  %v4161 = vld [vmem:[%s1 + $0xd0] sm:$0xff]
  %v4162 = vld [vmem:[%s1 + $0xd8] sm:$0xff]
  %v4163 = vld [vmem:[%s1 + $0xe0] sm:$0xff]
  %v4164 = vld [vmem:[%s1 + $0xe8] sm:$0xff]
  %v4165 = vld [vmem:[%s1 + $0xf0] sm:$0xff]
  %v4166 = vld [vmem:[%s1 + $0xf8] sm:$0xff]
  %v4167 = vld [vmem:[%s1 + $0x100] sm:$0xff]
  %v4168 = vld [vmem:[%s1 + $0x108] sm:$0xff]
  %v4169 = vld [vmem:[%s1 + $0x110] sm:$0xff]
  %v4170 = vld [vmem:[%s1 + $0x118] sm:$0xff]
  %v4171 = vld [vmem:[%s1 + $0x120] sm:$0xff]
  %v4172 = vld [vmem:[%s1 + $0x128] sm:$0xff]
  %v4173 = vld [vmem:[%s1 + $0x130] sm:$0xff]
  %v4174 = vld [vmem:[%s1 + $0x138] sm:$0xff]
  %v4175 = vld [vmem:[%s1 + $0x140] sm:$0xff]
  %v4176 = vld [vmem:[%s1 + $0x148] sm:$0xff]
  %v4177 = vld [vmem:[%s1 + $0x150] sm:$0xff]
  %v4178 = vld [vmem:[%s1 + $0x158] sm:$0xff]
  %v4179 = vld [vmem:[%s1 + $0x160] sm:$0xff]
  %v4180 = vld [vmem:[%s1 + $0x168] sm:$0xff]
  %v4181 = vld [vmem:[%s1 + $0x170] sm:$0xff]
  %v4182 = vld [vmem:[%s1 + $0x178] sm:$0xff]
  %v4183 = vld [vmem:[%s1 + $0x180] sm:$0xff]
  %v4184 = vld [vmem:[%s1 + $0x188] sm:$0xff]
  %v4185 = vld [vmem:[%s1 + $0x190] sm:$0xff]
  %v4186 = vld [vmem:[%s1 + $0x198] sm:$0xff]
  %v4187 = vld [vmem:[%s1 + $0x1a0] sm:$0xff]
  %v4188 = vld [vmem:[%s1 + $0x1a8] sm:$0xff]
  %v4189 = vld [vmem:[%s1 + $0x1b0] sm:$0xff]
  %v4190 = vld [vmem:[%s1 + $0x1b8] sm:$0xff]
  %v4191 = vld [vmem:[%s1 + $0x1c0] sm:$0xff]
  %v4192 = vld [vmem:[%s1 + $0x1c8] sm:$0xff]
  %v4193 = vld [vmem:[%s1 + $0x1d0] sm:$0xff]
  %v4194 = vld [vmem:[%s1 + $0x1d8] sm:$0xff]
  %v4195 = vld [vmem:[%s1 + $0x1e0] sm:$0xff]
  %v4196 = vld [vmem:[%s1 + $0x1e8] sm:$0xff]
  %v4197 = vld [vmem:[%s1 + $0x1f0] sm:$0xff]
  %v4198 = vld [vmem:[%s1 + $0x1f8] sm:$0xff]
  %v4199 = vlaneseq
  %v4200 = vshrl.u32 %v4199, 7
  %v4201 = vsub.s32 0, %v4200
  %v4202 = vrot.slane %v2515, %v4201
  %4204 = vset.pattern.permute.xlu0 0
  %4205 = vperm.xlu0 %4204, %v4135
  %v4206 = vpop.permute.xlu0 %4205
  %4209 = vset.pattern.permute.xlu0 0
  %4210 = vperm.xlu0 %4209, %v4136
  %v4211 = vpop.permute.xlu0 %4210
  %4214 = vset.pattern.permute.xlu0 0
  %4215 = vperm.xlu0 %4214, %v4137
  %v4216 = vpop.permute.xlu0 %4215
  %4219 = vset.pattern.permute.xlu0 0
  %4220 = vperm.xlu0 %4219, %v4138
  %v4221 = vpop.permute.xlu0 %4220
  %4224 = vset.pattern.permute.xlu0 0
  %4225 = vperm.xlu0 %4224, %v4139
  %v4226 = vpop.permute.xlu0 %4225
  %4229 = vset.pattern.permute.xlu0 0
  %4230 = vperm.xlu0 %4229, %v4140
  %v4231 = vpop.permute.xlu0 %4230
  %4234 = vset.pattern.permute.xlu0 0
  %4235 = vperm.xlu0 %4234, %v4141
  %v4236 = vpop.permute.xlu0 %4235
  %4239 = vset.pattern.permute.xlu0 0
  %4240 = vperm.xlu0 %4239, %v4142
  %v4241 = vpop.permute.xlu0 %4240
  %4244 = vset.pattern.permute.xlu0 0
  %4245 = vperm.xlu0 %4244, %v4143
  %v4246 = vpop.permute.xlu0 %4245
  %4249 = vset.pattern.permute.xlu0 0
  %4250 = vperm.xlu0 %4249, %v4144
  %v4251 = vpop.permute.xlu0 %4250
  %4254 = vset.pattern.permute.xlu0 0
  %4255 = vperm.xlu0 %4254, %v4145
  %v4256 = vpop.permute.xlu0 %4255
  %4259 = vset.pattern.permute.xlu0 0
  %4260 = vperm.xlu0 %4259, %v4146
  %v4261 = vpop.permute.xlu0 %4260
  %4264 = vset.pattern.permute.xlu0 0
  %4265 = vperm.xlu0 %4264, %v4147
  %v4266 = vpop.permute.xlu0 %4265
  %4269 = vset.pattern.permute.xlu0 0
  %4270 = vperm.xlu0 %4269, %v4148
  %v4271 = vpop.permute.xlu0 %4270
  %4274 = vset.pattern.permute.xlu0 0
  %4275 = vperm.xlu0 %4274, %v4149
  %v4276 = vpop.permute.xlu0 %4275
  %4279 = vset.pattern.permute.xlu0 0
  %4280 = vperm.xlu0 %4279, %v4150
  %v4281 = vpop.permute.xlu0 %4280
  %4284 = vset.pattern.permute.xlu0 0
  %4285 = vperm.xlu0 %4284, %v4151
  %v4286 = vpop.permute.xlu0 %4285
  %4289 = vset.pattern.permute.xlu0 0
  %4290 = vperm.xlu0 %4289, %v4152
  %v4291 = vpop.permute.xlu0 %4290
  %4294 = vset.pattern.permute.xlu0 0
  %4295 = vperm.xlu0 %4294, %v4153
  %v4296 = vpop.permute.xlu0 %4295
  %4299 = vset.pattern.permute.xlu0 0
  %4300 = vperm.xlu0 %4299, %v4154
  %v4301 = vpop.permute.xlu0 %4300
  %4304 = vset.pattern.permute.xlu0 0
  %4305 = vperm.xlu0 %4304, %v4155
  %v4306 = vpop.permute.xlu0 %4305
  %4309 = vset.pattern.permute.xlu0 0
  %4310 = vperm.xlu0 %4309, %v4156
  %v4311 = vpop.permute.xlu0 %4310
  %4314 = vset.pattern.permute.xlu0 0
  %4315 = vperm.xlu0 %4314, %v4157
  %v4316 = vpop.permute.xlu0 %4315
  %4319 = vset.pattern.permute.xlu0 0
  %4320 = vperm.xlu0 %4319, %v4158
  %v4321 = vpop.permute.xlu0 %4320
  %4324 = vset.pattern.permute.xlu0 0
  %4325 = vperm.xlu0 %4324, %v4159
  %v4326 = vpop.permute.xlu0 %4325
  %4329 = vset.pattern.permute.xlu0 0
  %4330 = vperm.xlu0 %4329, %v4160
  %v4331 = vpop.permute.xlu0 %4330
  %4334 = vset.pattern.permute.xlu0 0
  %4335 = vperm.xlu0 %4334, %v4161
  %v4336 = vpop.permute.xlu0 %4335
  %4339 = vset.pattern.permute.xlu0 0
  %4340 = vperm.xlu0 %4339, %v4162
  %v4341 = vpop.permute.xlu0 %4340
  %4344 = vset.pattern.permute.xlu0 0
  %4345 = vperm.xlu0 %4344, %v4163
  %v4346 = vpop.permute.xlu0 %4345
  %4349 = vset.pattern.permute.xlu0 0
  %4350 = vperm.xlu0 %4349, %v4164
  %v4351 = vpop.permute.xlu0 %4350
  %4354 = vset.pattern.permute.xlu0 0
  %4355 = vperm.xlu0 %4354, %v4165
  %v4356 = vpop.permute.xlu0 %4355
  %4359 = vset.pattern.permute.xlu0 0
  %4360 = vperm.xlu0 %4359, %v4166
  %v4361 = vpop.permute.xlu0 %4360
  %4364 = vset.pattern.permute.xlu0 0
  %4365 = vperm.xlu0 %4364, %v4167
  %v4366 = vpop.permute.xlu0 %4365
  %4369 = vset.pattern.permute.xlu0 0
  %4370 = vperm.xlu0 %4369, %v4168
  %v4371 = vpop.permute.xlu0 %4370
  %4374 = vset.pattern.permute.xlu0 0
  %4375 = vperm.xlu0 %4374, %v4169
  %v4376 = vpop.permute.xlu0 %4375
  %4379 = vset.pattern.permute.xlu0 0
  %4380 = vperm.xlu0 %4379, %v4170
  %v4381 = vpop.permute.xlu0 %4380
  %4384 = vset.pattern.permute.xlu0 0
  %4385 = vperm.xlu0 %4384, %v4171
  %v4386 = vpop.permute.xlu0 %4385
  %4389 = vset.pattern.permute.xlu0 0
  %4390 = vperm.xlu0 %4389, %v4172
  %v4391 = vpop.permute.xlu0 %4390
  %4394 = vset.pattern.permute.xlu0 0
  %4395 = vperm.xlu0 %4394, %v4173
  %v4396 = vpop.permute.xlu0 %4395
  %4399 = vset.pattern.permute.xlu0 0
  %4400 = vperm.xlu0 %4399, %v4174
  %v4401 = vpop.permute.xlu0 %4400
  %4404 = vset.pattern.permute.xlu0 0
  %4405 = vperm.xlu0 %4404, %v4175
  %v4406 = vpop.permute.xlu0 %4405
  %4409 = vset.pattern.permute.xlu0 0
  %4410 = vperm.xlu0 %4409, %v4176
  %v4411 = vpop.permute.xlu0 %4410
  %4414 = vset.pattern.permute.xlu0 0
  %4415 = vperm.xlu0 %4414, %v4177
  %v4416 = vpop.permute.xlu0 %4415
  %4419 = vset.pattern.permute.xlu0 0
  %4420 = vperm.xlu0 %4419, %v4178
  %v4421 = vpop.permute.xlu0 %4420
  %4424 = vset.pattern.permute.xlu0 0
  %4425 = vperm.xlu0 %4424, %v4179
  %v4426 = vpop.permute.xlu0 %4425
  %4429 = vset.pattern.permute.xlu0 0
  %4430 = vperm.xlu0 %4429, %v4180
  %v4431 = vpop.permute.xlu0 %4430
  %4434 = vset.pattern.permute.xlu0 0
  %4435 = vperm.xlu0 %4434, %v4181
  %v4436 = vpop.permute.xlu0 %4435
  %4439 = vset.pattern.permute.xlu0 0
  %4440 = vperm.xlu0 %4439, %v4182
  %v4441 = vpop.permute.xlu0 %4440
  %4444 = vset.pattern.permute.xlu0 0
  %4445 = vperm.xlu0 %4444, %v4183
  %v4446 = vpop.permute.xlu0 %4445
  %4449 = vset.pattern.permute.xlu0 0
  %4450 = vperm.xlu0 %4449, %v4184
  %v4451 = vpop.permute.xlu0 %4450
  %4454 = vset.pattern.permute.xlu0 0
  %4455 = vperm.xlu0 %4454, %v4185
  %v4456 = vpop.permute.xlu0 %4455
  %4459 = vset.pattern.permute.xlu0 0
  %4460 = vperm.xlu0 %4459, %v4186
  %v4461 = vpop.permute.xlu0 %4460
  %4464 = vset.pattern.permute.xlu0 0
  %4465 = vperm.xlu0 %4464, %v4187
  %v4466 = vpop.permute.xlu0 %4465
  %4469 = vset.pattern.permute.xlu0 0
  %4470 = vperm.xlu0 %4469, %v4188
  %v4471 = vpop.permute.xlu0 %4470
  %4474 = vset.pattern.permute.xlu0 0
  %4475 = vperm.xlu0 %4474, %v4189
  %v4476 = vpop.permute.xlu0 %4475
  %4479 = vset.pattern.permute.xlu0 0
  %4480 = vperm.xlu0 %4479, %v4190
  %v4481 = vpop.permute.xlu0 %4480
  %4484 = vset.pattern.permute.xlu0 0
  %4485 = vperm.xlu0 %4484, %v4191
  %v4486 = vpop.permute.xlu0 %4485
  %4489 = vset.pattern.permute.xlu0 0
  %4490 = vperm.xlu0 %4489, %v4192
  %v4491 = vpop.permute.xlu0 %4490
  %4494 = vset.pattern.permute.xlu0 0
  %4495 = vperm.xlu0 %4494, %v4193
  %v4496 = vpop.permute.xlu0 %4495
  %4499 = vset.pattern.permute.xlu0 0
  %4500 = vperm.xlu0 %4499, %v4194
  %v4501 = vpop.permute.xlu0 %4500
  %4504 = vset.pattern.permute.xlu0 0
  %4505 = vperm.xlu0 %4504, %v4195
  %v4506 = vpop.permute.xlu0 %4505
  %4509 = vset.pattern.permute.xlu0 0
  %4510 = vperm.xlu0 %4509, %v4196
  %v4511 = vpop.permute.xlu0 %4510
  %4514 = vset.pattern.permute.xlu0 0
  %4515 = vperm.xlu0 %4514, %v4197
  %v4516 = vpop.permute.xlu0 %4515
  %4519 = vset.pattern.permute.xlu0 0
  %4520 = vperm.xlu0 %4519, %v4198
  %v4521 = vpop.permute.xlu0 %4520
  %v4523 = vmul.f32 %v4202, %v4206
  %v4524 = vmul.f32 %v4202, %v4211
  %v4525 = vmul.f32 %v4202, %v4216
  %v4526 = vmul.f32 %v4202, %v4221
  %v4527 = vmul.f32 %v4202, %v4226
  %v4528 = vmul.f32 %v4202, %v4231
  %v4529 = vmul.f32 %v4202, %v4236
  %v4530 = vmul.f32 %v4202, %v4241
  %v4531 = vmul.f32 %v4202, %v4246
  %v4532 = vmul.f32 %v4202, %v4251
  %v4533 = vmul.f32 %v4202, %v4256
  %v4534 = vmul.f32 %v4202, %v4261
  %v4535 = vmul.f32 %v4202, %v4266
  %v4536 = vmul.f32 %v4202, %v4271
  %v4537 = vmul.f32 %v4202, %v4276
  %v4538 = vmul.f32 %v4202, %v4281
  %v4539 = vmul.f32 %v4202, %v4286
  %v4540 = vmul.f32 %v4202, %v4291
  %v4541 = vmul.f32 %v4202, %v4296
  %v4542 = vmul.f32 %v4202, %v4301
  %v4543 = vmul.f32 %v4202, %v4306
  %v4544 = vmul.f32 %v4202, %v4311
  %v4545 = vmul.f32 %v4202, %v4316
  %v4546 = vmul.f32 %v4202, %v4321
  %v4547 = vmul.f32 %v4202, %v4326
  %v4548 = vmul.f32 %v4202, %v4331
  %v4549 = vmul.f32 %v4202, %v4336
  %v4550 = vmul.f32 %v4202, %v4341
  %v4551 = vmul.f32 %v4202, %v4346
  %v4552 = vmul.f32 %v4202, %v4351
  %v4553 = vmul.f32 %v4202, %v4356
  %v4554 = vmul.f32 %v4202, %v4361
  %v4555 = vmul.f32 %v4202, %v4366
  %v4556 = vmul.f32 %v4202, %v4371
  %v4557 = vmul.f32 %v4202, %v4376
  %v4558 = vmul.f32 %v4202, %v4381
  %v4559 = vmul.f32 %v4202, %v4386
  %v4560 = vmul.f32 %v4202, %v4391
  %v4561 = vmul.f32 %v4202, %v4396
  %v4562 = vmul.f32 %v4202, %v4401
  %v4563 = vmul.f32 %v4202, %v4406
  %v4564 = vmul.f32 %v4202, %v4411
  %v4565 = vmul.f32 %v4202, %v4416
  %v4566 = vmul.f32 %v4202, %v4421
  %v4567 = vmul.f32 %v4202, %v4426
  %v4568 = vmul.f32 %v4202, %v4431
  %v4569 = vmul.f32 %v4202, %v4436
  %v4570 = vmul.f32 %v4202, %v4441
  %v4571 = vmul.f32 %v4202, %v4446
  %v4572 = vmul.f32 %v4202, %v4451
  %v4573 = vmul.f32 %v4202, %v4456
  %v4574 = vmul.f32 %v4202, %v4461
  %v4575 = vmul.f32 %v4202, %v4466
  %v4576 = vmul.f32 %v4202, %v4471
  %v4577 = vmul.f32 %v4202, %v4476
  %v4578 = vmul.f32 %v4202, %v4481
  %v4579 = vmul.f32 %v4202, %v4486
  %v4580 = vmul.f32 %v4202, %v4491
  %v4581 = vmul.f32 %v4202, %v4496
  %v4582 = vmul.f32 %v4202, %v4501
  %v4583 = vmul.f32 %v4202, %v4506
  %v4584 = vmul.f32 %v4202, %v4511
  %v4585 = vmul.f32 %v4202, %v4516
  %v4586 = vmul.f32 %v4202, %v4521
  %v4587 = vsub.f32 1.0, %v2515
  %v4588 = vlaneseq
  %v4589 = vshrl.u32 %v4588, 7
  %v4590 = vsub.s32 0, %v4589
  %v4591 = vrot.slane %v4587, %v4590
  %4592 = vset.pattern.permute.xlu0 1
  %4593 = vperm.xlu0 %4592, %v4135
  %v4594 = vpop.permute.xlu0 %4593
  %4596 = vset.pattern.permute.xlu0 1
  %4597 = vperm.xlu0 %4596, %v4136
  %v4598 = vpop.permute.xlu0 %4597
  %4600 = vset.pattern.permute.xlu0 1
  %4601 = vperm.xlu0 %4600, %v4137
  %v4602 = vpop.permute.xlu0 %4601
  %4604 = vset.pattern.permute.xlu0 1
  %4605 = vperm.xlu0 %4604, %v4138
  %v4606 = vpop.permute.xlu0 %4605
  %4608 = vset.pattern.permute.xlu0 1
  %4609 = vperm.xlu0 %4608, %v4139
  %v4610 = vpop.permute.xlu0 %4609
  %4612 = vset.pattern.permute.xlu0 1
  %4613 = vperm.xlu0 %4612, %v4140
  %v4614 = vpop.permute.xlu0 %4613
  %4616 = vset.pattern.permute.xlu0 1
  %4617 = vperm.xlu0 %4616, %v4141
  %v4618 = vpop.permute.xlu0 %4617
  %4620 = vset.pattern.permute.xlu0 1
  %4621 = vperm.xlu0 %4620, %v4142
  %v4622 = vpop.permute.xlu0 %4621
  %4624 = vset.pattern.permute.xlu0 1
  %4625 = vperm.xlu0 %4624, %v4143
  %v4626 = vpop.permute.xlu0 %4625
  %4628 = vset.pattern.permute.xlu0 1
  %4629 = vperm.xlu0 %4628, %v4144
  %v4630 = vpop.permute.xlu0 %4629
  %4632 = vset.pattern.permute.xlu0 1
  %4633 = vperm.xlu0 %4632, %v4145
  %v4634 = vpop.permute.xlu0 %4633
  %4636 = vset.pattern.permute.xlu0 1
  %4637 = vperm.xlu0 %4636, %v4146
  %v4638 = vpop.permute.xlu0 %4637
  %4640 = vset.pattern.permute.xlu0 1
  %4641 = vperm.xlu0 %4640, %v4147
  %v4642 = vpop.permute.xlu0 %4641
  %4644 = vset.pattern.permute.xlu0 1
  %4645 = vperm.xlu0 %4644, %v4148
  %v4646 = vpop.permute.xlu0 %4645
  %4648 = vset.pattern.permute.xlu0 1
  %4649 = vperm.xlu0 %4648, %v4149
  %v4650 = vpop.permute.xlu0 %4649
  %4652 = vset.pattern.permute.xlu0 1
  %4653 = vperm.xlu0 %4652, %v4150
  %v4654 = vpop.permute.xlu0 %4653
  %4656 = vset.pattern.permute.xlu0 1
  %4657 = vperm.xlu0 %4656, %v4151
  %v4658 = vpop.permute.xlu0 %4657
  %4660 = vset.pattern.permute.xlu0 1
  %4661 = vperm.xlu0 %4660, %v4152
  %v4662 = vpop.permute.xlu0 %4661
  %4664 = vset.pattern.permute.xlu0 1
  %4665 = vperm.xlu0 %4664, %v4153
  %v4666 = vpop.permute.xlu0 %4665
  %4668 = vset.pattern.permute.xlu0 1
  %4669 = vperm.xlu0 %4668, %v4154
  %v4670 = vpop.permute.xlu0 %4669
  %4672 = vset.pattern.permute.xlu0 1
  %4673 = vperm.xlu0 %4672, %v4155
  %v4674 = vpop.permute.xlu0 %4673
  %4676 = vset.pattern.permute.xlu0 1
  %4677 = vperm.xlu0 %4676, %v4156
  %v4678 = vpop.permute.xlu0 %4677
  %4680 = vset.pattern.permute.xlu0 1
  %4681 = vperm.xlu0 %4680, %v4157
  %v4682 = vpop.permute.xlu0 %4681
  %4684 = vset.pattern.permute.xlu0 1
  %4685 = vperm.xlu0 %4684, %v4158
  %v4686 = vpop.permute.xlu0 %4685
  %4688 = vset.pattern.permute.xlu0 1
  %4689 = vperm.xlu0 %4688, %v4159
  %v4690 = vpop.permute.xlu0 %4689
  %4692 = vset.pattern.permute.xlu0 1
  %4693 = vperm.xlu0 %4692, %v4160
  %v4694 = vpop.permute.xlu0 %4693
  %4696 = vset.pattern.permute.xlu0 1
  %4697 = vperm.xlu0 %4696, %v4161
  %v4698 = vpop.permute.xlu0 %4697
  %4700 = vset.pattern.permute.xlu0 1
  %4701 = vperm.xlu0 %4700, %v4162
  %v4702 = vpop.permute.xlu0 %4701
  %4704 = vset.pattern.permute.xlu0 1
  %4705 = vperm.xlu0 %4704, %v4163
  %v4706 = vpop.permute.xlu0 %4705
  %4708 = vset.pattern.permute.xlu0 1
  %4709 = vperm.xlu0 %4708, %v4164
  %v4710 = vpop.permute.xlu0 %4709
  %4712 = vset.pattern.permute.xlu0 1
  %4713 = vperm.xlu0 %4712, %v4165
  %v4714 = vpop.permute.xlu0 %4713
  %4716 = vset.pattern.permute.xlu0 1
  %4717 = vperm.xlu0 %4716, %v4166
  %v4718 = vpop.permute.xlu0 %4717
  %4720 = vset.pattern.permute.xlu0 1
  %4721 = vperm.xlu0 %4720, %v4167
  %v4722 = vpop.permute.xlu0 %4721
  %4724 = vset.pattern.permute.xlu0 1
  %4725 = vperm.xlu0 %4724, %v4168
  %v4726 = vpop.permute.xlu0 %4725
  %4728 = vset.pattern.permute.xlu0 1
  %4729 = vperm.xlu0 %4728, %v4169
  %v4730 = vpop.permute.xlu0 %4729
  %4732 = vset.pattern.permute.xlu0 1
  %4733 = vperm.xlu0 %4732, %v4170
  %v4734 = vpop.permute.xlu0 %4733
  %4736 = vset.pattern.permute.xlu0 1
  %4737 = vperm.xlu0 %4736, %v4171
  %v4738 = vpop.permute.xlu0 %4737
  %4740 = vset.pattern.permute.xlu0 1
  %4741 = vperm.xlu0 %4740, %v4172
  %v4742 = vpop.permute.xlu0 %4741
  %4744 = vset.pattern.permute.xlu0 1
  %4745 = vperm.xlu0 %4744, %v4173
  %v4746 = vpop.permute.xlu0 %4745
  %4748 = vset.pattern.permute.xlu0 1
  %4749 = vperm.xlu0 %4748, %v4174
  %v4750 = vpop.permute.xlu0 %4749
  %4752 = vset.pattern.permute.xlu0 1
  %4753 = vperm.xlu0 %4752, %v4175
  %v4754 = vpop.permute.xlu0 %4753
  %4756 = vset.pattern.permute.xlu0 1
  %4757 = vperm.xlu0 %4756, %v4176
  %v4758 = vpop.permute.xlu0 %4757
  %4760 = vset.pattern.permute.xlu0 1
  %4761 = vperm.xlu0 %4760, %v4177
  %v4762 = vpop.permute.xlu0 %4761
  %4764 = vset.pattern.permute.xlu0 1
  %4765 = vperm.xlu0 %4764, %v4178
  %v4766 = vpop.permute.xlu0 %4765
  %4768 = vset.pattern.permute.xlu0 1
  %4769 = vperm.xlu0 %4768, %v4179
  %v4770 = vpop.permute.xlu0 %4769
  %4772 = vset.pattern.permute.xlu0 1
  %4773 = vperm.xlu0 %4772, %v4180
  %v4774 = vpop.permute.xlu0 %4773
  %4776 = vset.pattern.permute.xlu0 1
  %4777 = vperm.xlu0 %4776, %v4181
  %v4778 = vpop.permute.xlu0 %4777
  %4780 = vset.pattern.permute.xlu0 1
  %4781 = vperm.xlu0 %4780, %v4182
  %v4782 = vpop.permute.xlu0 %4781
  %4784 = vset.pattern.permute.xlu0 1
  %4785 = vperm.xlu0 %4784, %v4183
  %v4786 = vpop.permute.xlu0 %4785
  %4788 = vset.pattern.permute.xlu0 1
  %4789 = vperm.xlu0 %4788, %v4184
  %v4790 = vpop.permute.xlu0 %4789
  %4792 = vset.pattern.permute.xlu0 1
  %4793 = vperm.xlu0 %4792, %v4185
  %v4794 = vpop.permute.xlu0 %4793
  %4796 = vset.pattern.permute.xlu0 1
  %4797 = vperm.xlu0 %4796, %v4186
  %v4798 = vpop.permute.xlu0 %4797
  %4800 = vset.pattern.permute.xlu0 1
  %4801 = vperm.xlu0 %4800, %v4187
  %v4802 = vpop.permute.xlu0 %4801
  %4804 = vset.pattern.permute.xlu0 1
  %4805 = vperm.xlu0 %4804, %v4188
  %v4806 = vpop.permute.xlu0 %4805
  %4808 = vset.pattern.permute.xlu0 1
  %4809 = vperm.xlu0 %4808, %v4189
  %v4810 = vpop.permute.xlu0 %4809
  %4812 = vset.pattern.permute.xlu0 1
  %4813 = vperm.xlu0 %4812, %v4190
  %v4814 = vpop.permute.xlu0 %4813
  %4816 = vset.pattern.permute.xlu0 1
  %4817 = vperm.xlu0 %4816, %v4191
  %v4818 = vpop.permute.xlu0 %4817
  %4820 = vset.pattern.permute.xlu0 1
  %4821 = vperm.xlu0 %4820, %v4192
  %v4822 = vpop.permute.xlu0 %4821
  %4824 = vset.pattern.permute.xlu0 1
  %4825 = vperm.xlu0 %4824, %v4193
  %v4826 = vpop.permute.xlu0 %4825
  %4828 = vset.pattern.permute.xlu0 1
  %4829 = vperm.xlu0 %4828, %v4194
  %v4830 = vpop.permute.xlu0 %4829
  %4832 = vset.pattern.permute.xlu0 1
  %4833 = vperm.xlu0 %4832, %v4195
  %v4834 = vpop.permute.xlu0 %4833
  %4836 = vset.pattern.permute.xlu0 1
  %4837 = vperm.xlu0 %4836, %v4196
  %v4838 = vpop.permute.xlu0 %4837
  %4840 = vset.pattern.permute.xlu0 1
  %4841 = vperm.xlu0 %4840, %v4197
  %v4842 = vpop.permute.xlu0 %4841
  %4844 = vset.pattern.permute.xlu0 1
  %4845 = vperm.xlu0 %4844, %v4198
  %v4846 = vpop.permute.xlu0 %4845
  %v4848 = vmul.f32 %v4591, %v4594
  %v4849 = vmul.f32 %v4591, %v4598
  %v4850 = vmul.f32 %v4591, %v4602
  %v4851 = vmul.f32 %v4591, %v4606
  %v4852 = vmul.f32 %v4591, %v4610
  %v4853 = vmul.f32 %v4591, %v4614
  %v4854 = vmul.f32 %v4591, %v4618
  %v4855 = vmul.f32 %v4591, %v4622
  %v4856 = vmul.f32 %v4591, %v4626
  %v4857 = vmul.f32 %v4591, %v4630
  %v4858 = vmul.f32 %v4591, %v4634
  %v4859 = vmul.f32 %v4591, %v4638
  %v4860 = vmul.f32 %v4591, %v4642
  %v4861 = vmul.f32 %v4591, %v4646
  %v4862 = vmul.f32 %v4591, %v4650
  %v4863 = vmul.f32 %v4591, %v4654
  %v4864 = vmul.f32 %v4591, %v4658
  %v4865 = vmul.f32 %v4591, %v4662
  %v4866 = vmul.f32 %v4591, %v4666
  %v4867 = vmul.f32 %v4591, %v4670
  %v4868 = vmul.f32 %v4591, %v4674
  %v4869 = vmul.f32 %v4591, %v4678
  %v4870 = vmul.f32 %v4591, %v4682
  %v4871 = vmul.f32 %v4591, %v4686
  %v4872 = vmul.f32 %v4591, %v4690
  %v4873 = vmul.f32 %v4591, %v4694
  %v4874 = vmul.f32 %v4591, %v4698
  %v4875 = vmul.f32 %v4591, %v4702
  %v4876 = vmul.f32 %v4591, %v4706
  %v4877 = vmul.f32 %v4591, %v4710
  %v4878 = vmul.f32 %v4591, %v4714
  %v4879 = vmul.f32 %v4591, %v4718
  %v4880 = vmul.f32 %v4591, %v4722
  %v4881 = vmul.f32 %v4591, %v4726
  %v4882 = vmul.f32 %v4591, %v4730
  %v4883 = vmul.f32 %v4591, %v4734
  %v4884 = vmul.f32 %v4591, %v4738
  %v4885 = vmul.f32 %v4591, %v4742
  %v4886 = vmul.f32 %v4591, %v4746
  %v4887 = vmul.f32 %v4591, %v4750
  %v4888 = vmul.f32 %v4591, %v4754
  %v4889 = vmul.f32 %v4591, %v4758
  %v4890 = vmul.f32 %v4591, %v4762
  %v4891 = vmul.f32 %v4591, %v4766
  %v4892 = vmul.f32 %v4591, %v4770
  %v4893 = vmul.f32 %v4591, %v4774
  %v4894 = vmul.f32 %v4591, %v4778
  %v4895 = vmul.f32 %v4591, %v4782
  %v4896 = vmul.f32 %v4591, %v4786
  %v4897 = vmul.f32 %v4591, %v4790
  %v4898 = vmul.f32 %v4591, %v4794
  %v4899 = vmul.f32 %v4591, %v4798
  %v4900 = vmul.f32 %v4591, %v4802
  %v4901 = vmul.f32 %v4591, %v4806
  %v4902 = vmul.f32 %v4591, %v4810
  %v4903 = vmul.f32 %v4591, %v4814
  %v4904 = vmul.f32 %v4591, %v4818
  %v4905 = vmul.f32 %v4591, %v4822
  %v4906 = vmul.f32 %v4591, %v4826
  %v4907 = vmul.f32 %v4591, %v4830
  %v4908 = vmul.f32 %v4591, %v4834
  %v4909 = vmul.f32 %v4591, %v4838
  %v4910 = vmul.f32 %v4591, %v4842
  %v4911 = vmul.f32 %v4591, %v4846
  %v4912 = vadd.f32 %v4523, %v4848
  %v4913 = vadd.f32 %v4524, %v4849
  %v4914 = vadd.f32 %v4525, %v4850
  %v4915 = vadd.f32 %v4526, %v4851
  %v4916 = vadd.f32 %v4527, %v4852
  %v4917 = vadd.f32 %v4528, %v4853
  %v4918 = vadd.f32 %v4529, %v4854
  %v4919 = vadd.f32 %v4530, %v4855
  %v4920 = vadd.f32 %v4531, %v4856
  %v4921 = vadd.f32 %v4532, %v4857
  %v4922 = vadd.f32 %v4533, %v4858
  %v4923 = vadd.f32 %v4534, %v4859
  %v4924 = vadd.f32 %v4535, %v4860
  %v4925 = vadd.f32 %v4536, %v4861
  %v4926 = vadd.f32 %v4537, %v4862
  %v4927 = vadd.f32 %v4538, %v4863
  %v4928 = vadd.f32 %v4539, %v4864
  %v4929 = vadd.f32 %v4540, %v4865
  %v4930 = vadd.f32 %v4541, %v4866
  %v4931 = vadd.f32 %v4542, %v4867
  %v4932 = vadd.f32 %v4543, %v4868
  %v4933 = vadd.f32 %v4544, %v4869
  %v4934 = vadd.f32 %v4545, %v4870
  %v4935 = vadd.f32 %v4546, %v4871
  %v4936 = vadd.f32 %v4547, %v4872
  %v4937 = vadd.f32 %v4548, %v4873
  %v4938 = vadd.f32 %v4549, %v4874
  %v4939 = vadd.f32 %v4550, %v4875
  %v4940 = vadd.f32 %v4551, %v4876
  %v4941 = vadd.f32 %v4552, %v4877
  %v4942 = vadd.f32 %v4553, %v4878
  %v4943 = vadd.f32 %v4554, %v4879
  %v4944 = vadd.f32 %v4555, %v4880
  %v4945 = vadd.f32 %v4556, %v4881
  %v4946 = vadd.f32 %v4557, %v4882
  %v4947 = vadd.f32 %v4558, %v4883
  %v4948 = vadd.f32 %v4559, %v4884
  %v4949 = vadd.f32 %v4560, %v4885
  %v4950 = vadd.f32 %v4561, %v4886
  %v4951 = vadd.f32 %v4562, %v4887
  %v4952 = vadd.f32 %v4563, %v4888
  %v4953 = vadd.f32 %v4564, %v4889
  %v4954 = vadd.f32 %v4565, %v4890
  %v4955 = vadd.f32 %v4566, %v4891
  %v4956 = vadd.f32 %v4567, %v4892
  %v4957 = vadd.f32 %v4568, %v4893
  %v4958 = vadd.f32 %v4569, %v4894
  %v4959 = vadd.f32 %v4570, %v4895
  %v4960 = vadd.f32 %v4571, %v4896
  %v4961 = vadd.f32 %v4572, %v4897
  %v4962 = vadd.f32 %v4573, %v4898
  %v4963 = vadd.f32 %v4574, %v4899
  %v4964 = vadd.f32 %v4575, %v4900
  %v4965 = vadd.f32 %v4576, %v4901
  %v4966 = vadd.f32 %v4577, %v4902
  %v4967 = vadd.f32 %v4578, %v4903
  %v4968 = vadd.f32 %v4579, %v4904
  %v4969 = vadd.f32 %v4580, %v4905
  %v4970 = vadd.f32 %v4581, %v4906
  %v4971 = vadd.f32 %v4582, %v4907
  %v4972 = vadd.f32 %v4583, %v4908
  %v4973 = vadd.f32 %v4584, %v4909
  %v4974 = vadd.f32 %v4585, %v4910
  %v4975 = vadd.f32 %v4586, %v4911
  %v4976 = vlaneseq
  %v4977 = vshrl.u32 %v4976, 7
  %v4978 = vsub.s32 0, %v4977
  %v4979 = vrot.slane %v2511, %v4978
  %v4980 = vmul.f32 %v3879, %v4979
  %v4981 = vmul.f32 %v3880, %v4979
  %v4982 = vmul.f32 %v3881, %v4979
  %v4983 = vmul.f32 %v3882, %v4979
  %v4984 = vmul.f32 %v3883, %v4979
  %v4985 = vmul.f32 %v3884, %v4979
  %v4986 = vmul.f32 %v3885, %v4979
  %v4987 = vmul.f32 %v3886, %v4979
  %v4988 = vmul.f32 %v3887, %v4979
  %v4989 = vmul.f32 %v3888, %v4979
  %v4990 = vmul.f32 %v3889, %v4979
  %v4991 = vmul.f32 %v3890, %v4979
  %v4992 = vmul.f32 %v3891, %v4979
  %v4993 = vmul.f32 %v3892, %v4979
  %v4994 = vmul.f32 %v3893, %v4979
  %v4995 = vmul.f32 %v3894, %v4979
  %v4996 = vmul.f32 %v3895, %v4979
  %v4997 = vmul.f32 %v3896, %v4979
  %v4998 = vmul.f32 %v3897, %v4979
  %v4999 = vmul.f32 %v3898, %v4979
  %v5000 = vmul.f32 %v3899, %v4979
  %v5001 = vmul.f32 %v3900, %v4979
  %v5002 = vmul.f32 %v3901, %v4979
  %v5003 = vmul.f32 %v3902, %v4979
  %v5004 = vmul.f32 %v3903, %v4979
  %v5005 = vmul.f32 %v3904, %v4979
  %v5006 = vmul.f32 %v3905, %v4979
  %v5007 = vmul.f32 %v3906, %v4979
  %v5008 = vmul.f32 %v3907, %v4979
  %v5009 = vmul.f32 %v3908, %v4979
  %v5010 = vmul.f32 %v3909, %v4979
  %v5011 = vmul.f32 %v3910, %v4979
  %v5012 = vmul.f32 %v3911, %v4979
  %v5013 = vmul.f32 %v3912, %v4979
  %v5014 = vmul.f32 %v3913, %v4979
  %v5015 = vmul.f32 %v3914, %v4979
  %v5016 = vmul.f32 %v3915, %v4979
  %v5017 = vmul.f32 %v3916, %v4979
  %v5018 = vmul.f32 %v3917, %v4979
  %v5019 = vmul.f32 %v3918, %v4979
  %v5020 = vmul.f32 %v3919, %v4979
  %v5021 = vmul.f32 %v3920, %v4979
  %v5022 = vmul.f32 %v3921, %v4979
  %v5023 = vmul.f32 %v3922, %v4979
  %v5024 = vmul.f32 %v3923, %v4979
  %v5025 = vmul.f32 %v3924, %v4979
  %v5026 = vmul.f32 %v3925, %v4979
  %v5027 = vmul.f32 %v3926, %v4979
  %v5028 = vmul.f32 %v3927, %v4979
  %v5029 = vmul.f32 %v3928, %v4979
  %v5030 = vmul.f32 %v3929, %v4979
  %v5031 = vmul.f32 %v3930, %v4979
  %v5032 = vmul.f32 %v3931, %v4979
  %v5033 = vmul.f32 %v3932, %v4979
  %v5034 = vmul.f32 %v3933, %v4979
  %v5035 = vmul.f32 %v3934, %v4979
  %v5036 = vmul.f32 %v3935, %v4979
  %v5037 = vmul.f32 %v3936, %v4979
  %v5038 = vmul.f32 %v3937, %v4979
  %v5039 = vmul.f32 %v3938, %v4979
  %v5040 = vmul.f32 %v3939, %v4979
  %v5041 = vmul.f32 %v3940, %v4979
  %v5042 = vmul.f32 %v3941, %v4979
  %v5043 = vmul.f32 %v3942, %v4979
  %v5044 = vmax.f32 %v4980, -32.0
  %v5045 = vmax.f32 %v4981, -32.0
  %v5046 = vmax.f32 %v4982, -32.0
  %v5047 = vmax.f32 %v4983, -32.0
  %v5048 = vmax.f32 %v4984, -32.0
  %v5049 = vmax.f32 %v4985, -32.0
  %v5050 = vmax.f32 %v4986, -32.0
  %v5051 = vmax.f32 %v4987, -32.0
  %v5052 = vmax.f32 %v4988, -32.0
  %v5053 = vmax.f32 %v4989, -32.0
  %v5054 = vmax.f32 %v4990, -32.0
  %v5055 = vmax.f32 %v4991, -32.0
  %v5056 = vmax.f32 %v4992, -32.0
  %v5057 = vmax.f32 %v4993, -32.0
  %v5058 = vmax.f32 %v4994, -32.0
  %v5059 = vmax.f32 %v4995, -32.0
  %v5060 = vmax.f32 %v4996, -32.0
  %v5061 = vmax.f32 %v4997, -32.0
  %v5062 = vmax.f32 %v4998, -32.0
  %v5063 = vmax.f32 %v4999, -32.0
  %v5064 = vmax.f32 %v5000, -32.0
  %v5065 = vmax.f32 %v5001, -32.0
  %v5066 = vmax.f32 %v5002, -32.0
  %v5067 = vmax.f32 %v5003, -32.0
  %v5068 = vmax.f32 %v5004, -32.0
  %v5069 = vmax.f32 %v5005, -32.0
  %v5070 = vmax.f32 %v5006, -32.0
  %v5071 = vmax.f32 %v5007, -32.0
  %v5072 = vmax.f32 %v5008, -32.0
  %v5073 = vmax.f32 %v5009, -32.0
  %v5074 = vmax.f32 %v5010, -32.0
  %v5075 = vmax.f32 %v5011, -32.0
  %v5076 = vmax.f32 %v5012, -32.0
  %v5077 = vmax.f32 %v5013, -32.0
  %v5078 = vmax.f32 %v5014, -32.0
  %v5079 = vmax.f32 %v5015, -32.0
  %v5080 = vmax.f32 %v5016, -32.0
  %v5081 = vmax.f32 %v5017, -32.0
  %v5082 = vmax.f32 %v5018, -32.0
  %v5083 = vmax.f32 %v5019, -32.0
  %v5084 = vmax.f32 %v5020, -32.0
  %v5085 = vmax.f32 %v5021, -32.0
  %v5086 = vmax.f32 %v5022, -32.0
  %v5087 = vmax.f32 %v5023, -32.0
  %v5088 = vmax.f32 %v5024, -32.0
  %v5089 = vmax.f32 %v5025, -32.0
  %v5090 = vmax.f32 %v5026, -32.0
  %v5091 = vmax.f32 %v5027, -32.0
  %v5092 = vmax.f32 %v5028, -32.0
  %v5093 = vmax.f32 %v5029, -32.0
  %v5094 = vmax.f32 %v5030, -32.0
  %v5095 = vmax.f32 %v5031, -32.0
  %v5096 = vmax.f32 %v5032, -32.0
  %v5097 = vmax.f32 %v5033, -32.0
  %v5098 = vmax.f32 %v5034, -32.0
  %v5099 = vmax.f32 %v5035, -32.0
  %v5100 = vmax.f32 %v5036, -32.0
  %v5101 = vmax.f32 %v5037, -32.0
  %v5102 = vmax.f32 %v5038, -32.0
  %v5103 = vmax.f32 %v5039, -32.0
  %v5104 = vmax.f32 %v5040, -32.0
  %v5105 = vmax.f32 %v5041, -32.0
  %v5106 = vmax.f32 %v5042, -32.0
  %v5107 = vmax.f32 %v5043, -32.0
  %v5108 = vmin.f32 %v5044, 32.0
  %v5109 = vmin.f32 %v5045, 32.0
  %v5110 = vmin.f32 %v5046, 32.0
  %v5111 = vmin.f32 %v5047, 32.0
  %v5112 = vmin.f32 %v5048, 32.0
  %v5113 = vmin.f32 %v5049, 32.0
  %v5114 = vmin.f32 %v5050, 32.0
  %v5115 = vmin.f32 %v5051, 32.0
  %v5116 = vmin.f32 %v5052, 32.0
  %v5117 = vmin.f32 %v5053, 32.0
  %v5118 = vmin.f32 %v5054, 32.0
  %v5119 = vmin.f32 %v5055, 32.0
  %v5120 = vmin.f32 %v5056, 32.0
  %v5121 = vmin.f32 %v5057, 32.0
  %v5122 = vmin.f32 %v5058, 32.0
  %v5123 = vmin.f32 %v5059, 32.0
  %v5124 = vmin.f32 %v5060, 32.0
  %v5125 = vmin.f32 %v5061, 32.0
  %v5126 = vmin.f32 %v5062, 32.0
  %v5127 = vmin.f32 %v5063, 32.0
  %v5128 = vmin.f32 %v5064, 32.0
  %v5129 = vmin.f32 %v5065, 32.0
  %v5130 = vmin.f32 %v5066, 32.0
  %v5131 = vmin.f32 %v5067, 32.0
  %v5132 = vmin.f32 %v5068, 32.0
  %v5133 = vmin.f32 %v5069, 32.0
  %v5134 = vmin.f32 %v5070, 32.0
  %v5135 = vmin.f32 %v5071, 32.0
  %v5136 = vmin.f32 %v5072, 32.0
  %v5137 = vmin.f32 %v5073, 32.0
  %v5138 = vmin.f32 %v5074, 32.0
  %v5139 = vmin.f32 %v5075, 32.0
  %v5140 = vmin.f32 %v5076, 32.0
  %v5141 = vmin.f32 %v5077, 32.0
  %v5142 = vmin.f32 %v5078, 32.0
  %v5143 = vmin.f32 %v5079, 32.0
  %v5144 = vmin.f32 %v5080, 32.0
  %v5145 = vmin.f32 %v5081, 32.0
  %v5146 = vmin.f32 %v5082, 32.0
  %v5147 = vmin.f32 %v5083, 32.0
  %v5148 = vmin.f32 %v5084, 32.0
  %v5149 = vmin.f32 %v5085, 32.0
  %v5150 = vmin.f32 %v5086, 32.0
  %v5151 = vmin.f32 %v5087, 32.0
  %v5152 = vmin.f32 %v5088, 32.0
  %v5153 = vmin.f32 %v5089, 32.0
  %v5154 = vmin.f32 %v5090, 32.0
  %v5155 = vmin.f32 %v5091, 32.0
  %v5156 = vmin.f32 %v5092, 32.0
  %v5157 = vmin.f32 %v5093, 32.0
  %v5158 = vmin.f32 %v5094, 32.0
  %v5159 = vmin.f32 %v5095, 32.0
  %v5160 = vmin.f32 %v5096, 32.0
  %v5161 = vmin.f32 %v5097, 32.0
  %v5162 = vmin.f32 %v5098, 32.0
  %v5163 = vmin.f32 %v5099, 32.0
  %v5164 = vmin.f32 %v5100, 32.0
  %v5165 = vmin.f32 %v5101, 32.0
  %v5166 = vmin.f32 %v5102, 32.0
  %v5167 = vmin.f32 %v5103, 32.0
  %v5168 = vmin.f32 %v5104, 32.0
  %v5169 = vmin.f32 %v5105, 32.0
  %v5170 = vmin.f32 %v5106, 32.0
  %v5171 = vmin.f32 %v5107, 32.0
  %v5172 = vadd.f32 %v4912, %v5108
  %v5173 = vadd.f32 %v4913, %v5109
  %v5174 = vadd.f32 %v4914, %v5110
  %v5175 = vadd.f32 %v4915, %v5111
  %v5176 = vadd.f32 %v4916, %v5112
  %v5177 = vadd.f32 %v4917, %v5113
  %v5178 = vadd.f32 %v4918, %v5114
  %v5179 = vadd.f32 %v4919, %v5115
  %v5180 = vadd.f32 %v4920, %v5116
  %v5181 = vadd.f32 %v4921, %v5117
  %v5182 = vadd.f32 %v4922, %v5118
  %v5183 = vadd.f32 %v4923, %v5119
  %v5184 = vadd.f32 %v4924, %v5120
  %v5185 = vadd.f32 %v4925, %v5121
  %v5186 = vadd.f32 %v4926, %v5122
  %v5187 = vadd.f32 %v4927, %v5123
  %v5188 = vadd.f32 %v4928, %v5124
  %v5189 = vadd.f32 %v4929, %v5125
  %v5190 = vadd.f32 %v4930, %v5126
  %v5191 = vadd.f32 %v4931, %v5127
  %v5192 = vadd.f32 %v4932, %v5128
  %v5193 = vadd.f32 %v4933, %v5129
  %v5194 = vadd.f32 %v4934, %v5130
  %v5195 = vadd.f32 %v4935, %v5131
  %v5196 = vadd.f32 %v4936, %v5132
  %v5197 = vadd.f32 %v4937, %v5133
  %v5198 = vadd.f32 %v4938, %v5134
  %v5199 = vadd.f32 %v4939, %v5135
  %v5200 = vadd.f32 %v4940, %v5136
  %v5201 = vadd.f32 %v4941, %v5137
  %v5202 = vadd.f32 %v4942, %v5138
  %v5203 = vadd.f32 %v4943, %v5139
  %v5204 = vadd.f32 %v4944, %v5140
  %v5205 = vadd.f32 %v4945, %v5141
  %v5206 = vadd.f32 %v4946, %v5142
  %v5207 = vadd.f32 %v4947, %v5143
  %v5208 = vadd.f32 %v4948, %v5144
  %v5209 = vadd.f32 %v4949, %v5145
  %v5210 = vadd.f32 %v4950, %v5146
  %v5211 = vadd.f32 %v4951, %v5147
  %v5212 = vadd.f32 %v4952, %v5148
  %v5213 = vadd.f32 %v4953, %v5149
  %v5214 = vadd.f32 %v4954, %v5150
  %v5215 = vadd.f32 %v4955, %v5151
  %v5216 = vadd.f32 %v4956, %v5152
  %v5217 = vadd.f32 %v4957, %v5153
  %v5218 = vadd.f32 %v4958, %v5154
  %v5219 = vadd.f32 %v4959, %v5155
  %v5220 = vadd.f32 %v4960, %v5156
  %v5221 = vadd.f32 %v4961, %v5157
  %v5222 = vadd.f32 %v4962, %v5158
  %v5223 = vadd.f32 %v4963, %v5159
  %v5224 = vadd.f32 %v4964, %v5160
  %v5225 = vadd.f32 %v4965, %v5161
  %v5226 = vadd.f32 %v4966, %v5162
  %v5227 = vadd.f32 %v4967, %v5163
  %v5228 = vadd.f32 %v4968, %v5164
  %v5229 = vadd.f32 %v4969, %v5165
  %v5230 = vadd.f32 %v4970, %v5166
  %v5231 = vadd.f32 %v4971, %v5167
  %v5232 = vadd.f32 %v4972, %v5168
  %v5233 = vadd.f32 %v4973, %v5169
  %v5234 = vadd.f32 %v4974, %v5170
  %v5235 = vadd.f32 %v4975, %v5171
  %v5236 = vmin.f32 %v4071, 4.1351666
  %v5237 = vmin.f32 %v4072, 4.1351666
  %v5238 = vmin.f32 %v4073, 4.1351666
  %v5239 = vmin.f32 %v4074, 4.1351666
  %v5240 = vmin.f32 %v4075, 4.1351666
  %v5241 = vmin.f32 %v4076, 4.1351666
  %v5242 = vmin.f32 %v4077, 4.1351666
  %v5243 = vmin.f32 %v4078, 4.1351666
  %v5244 = vmin.f32 %v4079, 4.1351666
  %v5245 = vmin.f32 %v4080, 4.1351666
  %v5246 = vmin.f32 %v4081, 4.1351666
  %v5247 = vmin.f32 %v4082, 4.1351666
  %v5248 = vmin.f32 %v4083, 4.1351666
  %v5249 = vmin.f32 %v4084, 4.1351666
  %v5250 = vmin.f32 %v4085, 4.1351666
  %v5251 = vmin.f32 %v4086, 4.1351666
  %v5252 = vmin.f32 %v4087, 4.1351666
  %v5253 = vmin.f32 %v4088, 4.1351666
  %v5254 = vmin.f32 %v4089, 4.1351666
  %v5255 = vmin.f32 %v4090, 4.1351666
  %v5256 = vmin.f32 %v4091, 4.1351666
  %v5257 = vmin.f32 %v4092, 4.1351666
  %v5258 = vmin.f32 %v4093, 4.1351666
  %v5259 = vmin.f32 %v4094, 4.1351666
  %v5260 = vmin.f32 %v4095, 4.1351666
  %v5261 = vmin.f32 %v4096, 4.1351666
  %v5262 = vmin.f32 %v4097, 4.1351666
  %v5263 = vmin.f32 %v4098, 4.1351666
  %v5264 = vmin.f32 %v4099, 4.1351666
  %v5265 = vmin.f32 %v4100, 4.1351666
  %v5266 = vmin.f32 %v4101, 4.1351666
  %v5267 = vmin.f32 %v4102, 4.1351666
  %v5268 = vmin.f32 %v4103, 4.1351666
  %v5269 = vmin.f32 %v4104, 4.1351666
  %v5270 = vmin.f32 %v4105, 4.1351666
  %v5271 = vmin.f32 %v4106, 4.1351666
  %v5272 = vmin.f32 %v4107, 4.1351666
  %v5273 = vmin.f32 %v4108, 4.1351666
  %v5274 = vmin.f32 %v4109, 4.1351666
  %v5275 = vmin.f32 %v4110, 4.1351666
  %v5276 = vmin.f32 %v4111, 4.1351666
  %v5277 = vmin.f32 %v4112, 4.1351666
  %v5278 = vmin.f32 %v4113, 4.1351666
  %v5279 = vmin.f32 %v4114, 4.1351666
  %v5280 = vmin.f32 %v4115, 4.1351666
  %v5281 = vmin.f32 %v4116, 4.1351666
  %v5282 = vmin.f32 %v4117, 4.1351666
  %v5283 = vmin.f32 %v4118, 4.1351666
  %v5284 = vmin.f32 %v4119, 4.1351666
  %v5285 = vmin.f32 %v4120, 4.1351666
  %v5286 = vmin.f32 %v4121, 4.1351666
  %v5287 = vmin.f32 %v4122, 4.1351666
  %v5288 = vmin.f32 %v4123, 4.1351666
  %v5289 = vmin.f32 %v4124, 4.1351666
  %v5290 = vmin.f32 %v4125, 4.1351666
  %v5291 = vmin.f32 %v4126, 4.1351666
  %v5292 = vmin.f32 %v4127, 4.1351666
  %v5293 = vmin.f32 %v4128, 4.1351666
  %v5294 = vmin.f32 %v4129, 4.1351666
  %v5295 = vmin.f32 %v4130, 4.1351666
  %v5296 = vmin.f32 %v4131, 4.1351666
  %v5297 = vmin.f32 %v4132, 4.1351666
  %v5298 = vmin.f32 %v4133, 4.1351666
  %v5299 = vmin.f32 %v4134, 4.1351666
  %v5300 = vmul.f32 %v5236, 1.442695
  %v5301 = vpow.pop %v5300
  %v5302 = vmul.f32 %v5237, 1.442695
  %v5303 = vpow.pop %v5302
  %v5304 = vmul.f32 %v5238, 1.442695
  %v5305 = vpow.pop %v5304
  %v5306 = vmul.f32 %v5239, 1.442695
  %v5307 = vpow.pop %v5306
  %v5308 = vmul.f32 %v5240, 1.442695
  %v5309 = vpow.pop %v5308
  %v5310 = vmul.f32 %v5241, 1.442695
  %v5311 = vpow.pop %v5310
  %v5312 = vmul.f32 %v5242, 1.442695
  %v5313 = vpow.pop %v5312
  %v5314 = vmul.f32 %v5243, 1.442695
  %v5315 = vpow.pop %v5314
  %v5316 = vmul.f32 %v5244, 1.442695
  %v5317 = vpow.pop %v5316
  %v5318 = vmul.f32 %v5245, 1.442695
  %v5319 = vpow.pop %v5318
  %v5320 = vmul.f32 %v5246, 1.442695
  %v5321 = vpow.pop %v5320
  %v5322 = vmul.f32 %v5247, 1.442695
  %v5323 = vpow.pop %v5322
  %v5324 = vmul.f32 %v5248, 1.442695
  %v5325 = vpow.pop %v5324
  %v5326 = vmul.f32 %v5249, 1.442695
  %v5327 = vpow.pop %v5326
  %v5328 = vmul.f32 %v5250, 1.442695
  %v5329 = vpow.pop %v5328
  %v5330 = vmul.f32 %v5251, 1.442695
  %v5331 = vpow.pop %v5330
  %v5332 = vmul.f32 %v5252, 1.442695
  %v5333 = vpow.pop %v5332
  %v5334 = vmul.f32 %v5253, 1.442695
  %v5335 = vpow.pop %v5334
  %v5336 = vmul.f32 %v5254, 1.442695
  %v5337 = vpow.pop %v5336
  %v5338 = vmul.f32 %v5255, 1.442695
  %v5339 = vpow.pop %v5338
  %v5340 = vmul.f32 %v5256, 1.442695
  %v5341 = vpow.pop %v5340
  %v5342 = vmul.f32 %v5257, 1.442695
  %v5343 = vpow.pop %v5342
  %v5344 = vmul.f32 %v5258, 1.442695
  %v5345 = vpow.pop %v5344
  %v5346 = vmul.f32 %v5259, 1.442695
  %v5347 = vpow.pop %v5346
  %v5348 = vmul.f32 %v5260, 1.442695
  %v5349 = vpow.pop %v5348
  %v5350 = vmul.f32 %v5261, 1.442695
  %v5351 = vpow.pop %v5350
  %v5352 = vmul.f32 %v5262, 1.442695
  %v5353 = vpow.pop %v5352
  %v5354 = vmul.f32 %v5263, 1.442695
  %v5355 = vpow.pop %v5354
  %v5356 = vmul.f32 %v5264, 1.442695
  %v5357 = vpow.pop %v5356
  %v5358 = vmul.f32 %v5265, 1.442695
  %v5359 = vpow.pop %v5358
  %v5360 = vmul.f32 %v5266, 1.442695
  %v5361 = vpow.pop %v5360
  %v5362 = vmul.f32 %v5267, 1.442695
  %v5363 = vpow.pop %v5362
  %v5364 = vmul.f32 %v5268, 1.442695
  %v5365 = vpow.pop %v5364
  %v5366 = vmul.f32 %v5269, 1.442695
  %v5367 = vpow.pop %v5366
  %v5368 = vmul.f32 %v5270, 1.442695
  %v5369 = vpow.pop %v5368
  %v5370 = vmul.f32 %v5271, 1.442695
  %v5371 = vpow.pop %v5370
  %v5372 = vmul.f32 %v5272, 1.442695
  %v5373 = vpow.pop %v5372
  %v5374 = vmul.f32 %v5273, 1.442695
  %v5375 = vpow.pop %v5374
  %v5376 = vmul.f32 %v5274, 1.442695
  %v5377 = vpow.pop %v5376
  %v5378 = vmul.f32 %v5275, 1.442695
  %v5379 = vpow.pop %v5378
  %v5380 = vmul.f32 %v5276, 1.442695
  %v5381 = vpow.pop %v5380
  %v5382 = vmul.f32 %v5277, 1.442695
  %v5383 = vpow.pop %v5382
  %v5384 = vmul.f32 %v5278, 1.442695
  %v5385 = vpow.pop %v5384
  %v5386 = vmul.f32 %v5279, 1.442695
  %v5387 = vpow.pop %v5386
  %v5388 = vmul.f32 %v5280, 1.442695
  %v5389 = vpow.pop %v5388
  %v5390 = vmul.f32 %v5281, 1.442695
  %v5391 = vpow.pop %v5390
  %v5392 = vmul.f32 %v5282, 1.442695
  %v5393 = vpow.pop %v5392
  %v5394 = vmul.f32 %v5283, 1.442695
  %v5395 = vpow.pop %v5394
  %v5396 = vmul.f32 %v5284, 1.442695
  %v5397 = vpow.pop %v5396
  %v5398 = vmul.f32 %v5285, 1.442695
  %v5399 = vpow.pop %v5398
  %v5400 = vmul.f32 %v5286, 1.442695
  %v5401 = vpow.pop %v5400
  %v5402 = vmul.f32 %v5287, 1.442695
  %v5403 = vpow.pop %v5402
  %v5404 = vmul.f32 %v5288, 1.442695
  %v5405 = vpow.pop %v5404
  %v5406 = vmul.f32 %v5289, 1.442695
  %v5407 = vpow.pop %v5406
  %v5408 = vmul.f32 %v5290, 1.442695
  %v5409 = vpow.pop %v5408
  %v5410 = vmul.f32 %v5291, 1.442695
  %v5411 = vpow.pop %v5410
  %v5412 = vmul.f32 %v5292, 1.442695
  %v5413 = vpow.pop %v5412
  %v5414 = vmul.f32 %v5293, 1.442695
  %v5415 = vpow.pop %v5414
  %v5416 = vmul.f32 %v5294, 1.442695
  %v5417 = vpow.pop %v5416
  %v5418 = vmul.f32 %v5295, 1.442695
  %v5419 = vpow.pop %v5418
  %v5420 = vmul.f32 %v5296, 1.442695
  %v5421 = vpow.pop %v5420
  %v5422 = vmul.f32 %v5297, 1.442695
  %v5423 = vpow.pop %v5422
  %v5424 = vmul.f32 %v5298, 1.442695
  %v5425 = vpow.pop %v5424
  %v5426 = vmul.f32 %v5299, 1.442695
  %v5427 = vpow.pop %v5426
  %v5428 = vmul.f32 %v5301, %v4979
  %v5429 = vmul.f32 %v5303, %v4979
  %v5430 = vmul.f32 %v5305, %v4979
  %v5431 = vmul.f32 %v5307, %v4979
  %v5432 = vmul.f32 %v5309, %v4979
  %v5433 = vmul.f32 %v5311, %v4979
  %v5434 = vmul.f32 %v5313, %v4979
  %v5435 = vmul.f32 %v5315, %v4979
  %v5436 = vmul.f32 %v5317, %v4979
  %v5437 = vmul.f32 %v5319, %v4979
  %v5438 = vmul.f32 %v5321, %v4979
  %v5439 = vmul.f32 %v5323, %v4979
  %v5440 = vmul.f32 %v5325, %v4979
  %v5441 = vmul.f32 %v5327, %v4979
  %v5442 = vmul.f32 %v5329, %v4979
  %v5443 = vmul.f32 %v5331, %v4979
  %v5444 = vmul.f32 %v5333, %v4979
  %v5445 = vmul.f32 %v5335, %v4979
  %v5446 = vmul.f32 %v5337, %v4979
  %v5447 = vmul.f32 %v5339, %v4979
  %v5448 = vmul.f32 %v5341, %v4979
  %v5449 = vmul.f32 %v5343, %v4979
  %v5450 = vmul.f32 %v5345, %v4979
  %v5451 = vmul.f32 %v5347, %v4979
  %v5452 = vmul.f32 %v5349, %v4979
  %v5453 = vmul.f32 %v5351, %v4979
  %v5454 = vmul.f32 %v5353, %v4979
  %v5455 = vmul.f32 %v5355, %v4979
  %v5456 = vmul.f32 %v5357, %v4979
  %v5457 = vmul.f32 %v5359, %v4979
  %v5458 = vmul.f32 %v5361, %v4979
  %v5459 = vmul.f32 %v5363, %v4979
  %v5460 = vmul.f32 %v5365, %v4979
  %v5461 = vmul.f32 %v5367, %v4979
  %v5462 = vmul.f32 %v5369, %v4979
  %v5463 = vmul.f32 %v5371, %v4979
  %v5464 = vmul.f32 %v5373, %v4979
  %v5465 = vmul.f32 %v5375, %v4979
  %v5466 = vmul.f32 %v5377, %v4979
  %v5467 = vmul.f32 %v5379, %v4979
  %v5468 = vmul.f32 %v5381, %v4979
  %v5469 = vmul.f32 %v5383, %v4979
  %v5470 = vmul.f32 %v5385, %v4979
  %v5471 = vmul.f32 %v5387, %v4979
  %v5472 = vmul.f32 %v5389, %v4979
  %v5473 = vmul.f32 %v5391, %v4979
  %v5474 = vmul.f32 %v5393, %v4979
  %v5475 = vmul.f32 %v5395, %v4979
  %v5476 = vmul.f32 %v5397, %v4979
  %v5477 = vmul.f32 %v5399, %v4979
  %v5478 = vmul.f32 %v5401, %v4979
  %v5479 = vmul.f32 %v5403, %v4979
  %v5480 = vmul.f32 %v5405, %v4979
  %v5481 = vmul.f32 %v5407, %v4979
  %v5482 = vmul.f32 %v5409, %v4979
  %v5483 = vmul.f32 %v5411, %v4979
  %v5484 = vmul.f32 %v5413, %v4979
  %v5485 = vmul.f32 %v5415, %v4979
  %v5486 = vmul.f32 %v5417, %v4979
  %v5487 = vmul.f32 %v5419, %v4979
  %v5488 = vmul.f32 %v5421, %v4979
  %v5489 = vmul.f32 %v5423, %v4979
  %v5490 = vmul.f32 %v5425, %v4979
  %v5491 = vmul.f32 %v5427, %v4979
  %v5492 = vlaneseq
  %v5493 = vshrl.u32 %v5492, 7
  %v5494 = vsub.s32 0, %v5493
  %v5495 = vrot.slane %v2513, %v5494
  %v5496 = vmul.f32 %v5495, %v5428
  %v5497 = vmul.f32 %v5495, %v5429
  %v5498 = vmul.f32 %v5495, %v5430
  %v5499 = vmul.f32 %v5495, %v5431
  %v5500 = vmul.f32 %v5495, %v5432
  %v5501 = vmul.f32 %v5495, %v5433
  %v5502 = vmul.f32 %v5495, %v5434
  %v5503 = vmul.f32 %v5495, %v5435
  %v5504 = vmul.f32 %v5495, %v5436
  %v5505 = vmul.f32 %v5495, %v5437
  %v5506 = vmul.f32 %v5495, %v5438
  %v5507 = vmul.f32 %v5495, %v5439
  %v5508 = vmul.f32 %v5495, %v5440
  %v5509 = vmul.f32 %v5495, %v5441
  %v5510 = vmul.f32 %v5495, %v5442
  %v5511 = vmul.f32 %v5495, %v5443
  %v5512 = vmul.f32 %v5495, %v5444
  %v5513 = vmul.f32 %v5495, %v5445
  %v5514 = vmul.f32 %v5495, %v5446
  %v5515 = vmul.f32 %v5495, %v5447
  %v5516 = vmul.f32 %v5495, %v5448
  %v5517 = vmul.f32 %v5495, %v5449
  %v5518 = vmul.f32 %v5495, %v5450
  %v5519 = vmul.f32 %v5495, %v5451
  %v5520 = vmul.f32 %v5495, %v5452
  %v5521 = vmul.f32 %v5495, %v5453
  %v5522 = vmul.f32 %v5495, %v5454
  %v5523 = vmul.f32 %v5495, %v5455
  %v5524 = vmul.f32 %v5495, %v5456
  %v5525 = vmul.f32 %v5495, %v5457
  %v5526 = vmul.f32 %v5495, %v5458
  %v5527 = vmul.f32 %v5495, %v5459
  %v5528 = vmul.f32 %v5495, %v5460
  %v5529 = vmul.f32 %v5495, %v5461
  %v5530 = vmul.f32 %v5495, %v5462
  %v5531 = vmul.f32 %v5495, %v5463
  %v5532 = vmul.f32 %v5495, %v5464
  %v5533 = vmul.f32 %v5495, %v5465
  %v5534 = vmul.f32 %v5495, %v5466
  %v5535 = vmul.f32 %v5495, %v5467
  %v5536 = vmul.f32 %v5495, %v5468
  %v5537 = vmul.f32 %v5495, %v5469
  %v5538 = vmul.f32 %v5495, %v5470
  %v5539 = vmul.f32 %v5495, %v5471
  %v5540 = vmul.f32 %v5495, %v5472
  %v5541 = vmul.f32 %v5495, %v5473
  %v5542 = vmul.f32 %v5495, %v5474
  %v5543 = vmul.f32 %v5495, %v5475
  %v5544 = vmul.f32 %v5495, %v5476
  %v5545 = vmul.f32 %v5495, %v5477
  %v5546 = vmul.f32 %v5495, %v5478
  %v5547 = vmul.f32 %v5495, %v5479
  %v5548 = vmul.f32 %v5495, %v5480
  %v5549 = vmul.f32 %v5495, %v5481
  %v5550 = vmul.f32 %v5495, %v5482
  %v5551 = vmul.f32 %v5495, %v5483
  %v5552 = vmul.f32 %v5495, %v5484
  %v5553 = vmul.f32 %v5495, %v5485
  %v5554 = vmul.f32 %v5495, %v5486
  %v5555 = vmul.f32 %v5495, %v5487
  %v5556 = vmul.f32 %v5495, %v5488
  %v5557 = vmul.f32 %v5495, %v5489
  %v5558 = vmul.f32 %v5495, %v5490
  %v5559 = vmul.f32 %v5495, %v5491
  %v5560 = vadd.f32 %v5172, %v5496
  %v5561 = vadd.f32 %v5173, %v5497
  %v5562 = vadd.f32 %v5174, %v5498
  %v5563 = vadd.f32 %v5175, %v5499
  %v5564 = vadd.f32 %v5176, %v5500
  %v5565 = vadd.f32 %v5177, %v5501
  %v5566 = vadd.f32 %v5178, %v5502
  %v5567 = vadd.f32 %v5179, %v5503
  %v5568 = vadd.f32 %v5180, %v5504
  %v5569 = vadd.f32 %v5181, %v5505
  %v5570 = vadd.f32 %v5182, %v5506
  %v5571 = vadd.f32 %v5183, %v5507
  %v5572 = vadd.f32 %v5184, %v5508
  %v5573 = vadd.f32 %v5185, %v5509
  %v5574 = vadd.f32 %v5186, %v5510
  %v5575 = vadd.f32 %v5187, %v5511
  %v5576 = vadd.f32 %v5188, %v5512
  %v5577 = vadd.f32 %v5189, %v5513
  %v5578 = vadd.f32 %v5190, %v5514
  %v5579 = vadd.f32 %v5191, %v5515
  %v5580 = vadd.f32 %v5192, %v5516
  %v5581 = vadd.f32 %v5193, %v5517
  %v5582 = vadd.f32 %v5194, %v5518
  %v5583 = vadd.f32 %v5195, %v5519
  %v5584 = vadd.f32 %v5196, %v5520
  %v5585 = vadd.f32 %v5197, %v5521
  %v5586 = vadd.f32 %v5198, %v5522
  %v5587 = vadd.f32 %v5199, %v5523
  %v5588 = vadd.f32 %v5200, %v5524
  %v5589 = vadd.f32 %v5201, %v5525
  %v5590 = vadd.f32 %v5202, %v5526
  %v5591 = vadd.f32 %v5203, %v5527
  %v5592 = vadd.f32 %v5204, %v5528
  %v5593 = vadd.f32 %v5205, %v5529
  %v5594 = vadd.f32 %v5206, %v5530
  %v5595 = vadd.f32 %v5207, %v5531
  %v5596 = vadd.f32 %v5208, %v5532
  %v5597 = vadd.f32 %v5209, %v5533
  %v5598 = vadd.f32 %v5210, %v5534
  %v5599 = vadd.f32 %v5211, %v5535
  %v5600 = vadd.f32 %v5212, %v5536
  %v5601 = vadd.f32 %v5213, %v5537
  %v5602 = vadd.f32 %v5214, %v5538
  %v5603 = vadd.f32 %v5215, %v5539
  %v5604 = vadd.f32 %v5216, %v5540
  %v5605 = vadd.f32 %v5217, %v5541
  %v5606 = vadd.f32 %v5218, %v5542
  %v5607 = vadd.f32 %v5219, %v5543
  %v5608 = vadd.f32 %v5220, %v5544
  %v5609 = vadd.f32 %v5221, %v5545
  %v5610 = vadd.f32 %v5222, %v5546
  %v5611 = vadd.f32 %v5223, %v5547
  %v5612 = vadd.f32 %v5224, %v5548
  %v5613 = vadd.f32 %v5225, %v5549
  %v5614 = vadd.f32 %v5226, %v5550
  %v5615 = vadd.f32 %v5227, %v5551
  %v5616 = vadd.f32 %v5228, %v5552
  %v5617 = vadd.f32 %v5229, %v5553
  %v5618 = vadd.f32 %v5230, %v5554
  %v5619 = vadd.f32 %v5231, %v5555
  %v5620 = vadd.f32 %v5232, %v5556
  %v5621 = vadd.f32 %v5233, %v5557
  %v5622 = vadd.f32 %v5234, %v5558
  %v5623 = vadd.f32 %v5235, %v5559
  %5624 = vst.msk [vmem:[%s12] sm:$0xff] %vm2446, %v5560
  %5625 = vst.msk [vmem:[%s12 + $0x8] sm:$0xff] %vm2446, %v5561
  %5626 = vst.msk [vmem:[%s12 + $0x10] sm:$0xff] %vm2446, %v5562
  %5627 = vst.msk [vmem:[%s12 + $0x18] sm:$0xff] %vm2446, %v5563
  %5628 = vst.msk [vmem:[%s12 + $0x20] sm:$0xff] %vm2446, %v5564
  %5629 = vst.msk [vmem:[%s12 + $0x28] sm:$0xff] %vm2446, %v5565
  %5630 = vst.msk [vmem:[%s12 + $0x30] sm:$0xff] %vm2446, %v5566
  %5631 = vst.msk [vmem:[%s12 + $0x38] sm:$0xff] %vm2446, %v5567
  %5632 = vst.msk [vmem:[%s12 + $0x40] sm:$0xff] %vm2446, %v5568
  %5633 = vst.msk [vmem:[%s12 + $0x48] sm:$0xff] %vm2446, %v5569
  %5634 = vst.msk [vmem:[%s12 + $0x50] sm:$0xff] %vm2446, %v5570
  %5635 = vst.msk [vmem:[%s12 + $0x58] sm:$0xff] %vm2446, %v5571
  %5636 = vst.msk [vmem:[%s12 + $0x60] sm:$0xff] %vm2446, %v5572
  %5637 = vst.msk [vmem:[%s12 + $0x68] sm:$0xff] %vm2446, %v5573
  %5638 = vst.msk [vmem:[%s12 + $0x70] sm:$0xff] %vm2446, %v5574
  %5639 = vst.msk [vmem:[%s12 + $0x78] sm:$0xff] %vm2446, %v5575
  %5640 = vst.msk [vmem:[%s12 + $0x80] sm:$0xff] %vm2446, %v5576
  %5641 = vst.msk [vmem:[%s12 + $0x88] sm:$0xff] %vm2446, %v5577
  %5642 = vst.msk [vmem:[%s12 + $0x90] sm:$0xff] %vm2446, %v5578
  %5643 = vst.msk [vmem:[%s12 + $0x98] sm:$0xff] %vm2446, %v5579
  %5644 = vst.msk [vmem:[%s12 + $0xa0] sm:$0xff] %vm2446, %v5580
  %5645 = vst.msk [vmem:[%s12 + $0xa8] sm:$0xff] %vm2446, %v5581
  %5646 = vst.msk [vmem:[%s12 + $0xb0] sm:$0xff] %vm2446, %v5582
  %5647 = vst.msk [vmem:[%s12 + $0xb8] sm:$0xff] %vm2446, %v5583
  %5648 = vst.msk [vmem:[%s12 + $0xc0] sm:$0xff] %vm2446, %v5584
  %5649 = vst.msk [vmem:[%s12 + $0xc8] sm:$0xff] %vm2446, %v5585
  %5650 = vst.msk [vmem:[%s12 + $0xd0] sm:$0xff] %vm2446, %v5586
  %5651 = vst.msk [vmem:[%s12 + $0xd8] sm:$0xff] %vm2446, %v5587
  %5652 = vst.msk [vmem:[%s12 + $0xe0] sm:$0xff] %vm2446, %v5588
  %5653 = vst.msk [vmem:[%s12 + $0xe8] sm:$0xff] %vm2446, %v5589
  %5654 = vst.msk [vmem:[%s12 + $0xf0] sm:$0xff] %vm2446, %v5590
  %5655 = vst.msk [vmem:[%s12 + $0xf8] sm:$0xff] %vm2446, %v5591
  %5656 = vst.msk [vmem:[%s12 + $0x100] sm:$0xff] %vm2446, %v5592
  %5657 = vst.msk [vmem:[%s12 + $0x108] sm:$0xff] %vm2446, %v5593
  %5658 = vst.msk [vmem:[%s12 + $0x110] sm:$0xff] %vm2446, %v5594
  %5659 = vst.msk [vmem:[%s12 + $0x118] sm:$0xff] %vm2446, %v5595
  %5660 = vst.msk [vmem:[%s12 + $0x120] sm:$0xff] %vm2446, %v5596
  %5661 = vst.msk [vmem:[%s12 + $0x128] sm:$0xff] %vm2446, %v5597
  %5662 = vst.msk [vmem:[%s12 + $0x130] sm:$0xff] %vm2446, %v5598
  %5663 = vst.msk [vmem:[%s12 + $0x138] sm:$0xff] %vm2446, %v5599
  %5664 = vst.msk [vmem:[%s12 + $0x140] sm:$0xff] %vm2446, %v5600
  %5665 = vst.msk [vmem:[%s12 + $0x148] sm:$0xff] %vm2446, %v5601
  %5666 = vst.msk [vmem:[%s12 + $0x150] sm:$0xff] %vm2446, %v5602
  %5667 = vst.msk [vmem:[%s12 + $0x158] sm:$0xff] %vm2446, %v5603
  %5668 = vst.msk [vmem:[%s12 + $0x160] sm:$0xff] %vm2446, %v5604
  %5669 = vst.msk [vmem:[%s12 + $0x168] sm:$0xff] %vm2446, %v5605
  %5670 = vst.msk [vmem:[%s12 + $0x170] sm:$0xff] %vm2446, %v5606
  %5671 = vst.msk [vmem:[%s12 + $0x178] sm:$0xff] %vm2446, %v5607
  %5672 = vst.msk [vmem:[%s12 + $0x180] sm:$0xff] %vm2446, %v5608
  %5673 = vst.msk [vmem:[%s12 + $0x188] sm:$0xff] %vm2446, %v5609
  %5674 = vst.msk [vmem:[%s12 + $0x190] sm:$0xff] %vm2446, %v5610
  %5675 = vst.msk [vmem:[%s12 + $0x198] sm:$0xff] %vm2446, %v5611
  %5676 = vst.msk [vmem:[%s12 + $0x1a0] sm:$0xff] %vm2446, %v5612
  %5677 = vst.msk [vmem:[%s12 + $0x1a8] sm:$0xff] %vm2446, %v5613
  %5678 = vst.msk [vmem:[%s12 + $0x1b0] sm:$0xff] %vm2446, %v5614
  %5679 = vst.msk [vmem:[%s12 + $0x1b8] sm:$0xff] %vm2446, %v5615
  %5680 = vst.msk [vmem:[%s12 + $0x1c0] sm:$0xff] %vm2446, %v5616
  %5681 = vst.msk [vmem:[%s12 + $0x1c8] sm:$0xff] %vm2446, %v5617
  %5682 = vst.msk [vmem:[%s12 + $0x1d0] sm:$0xff] %vm2446, %v5618
  %5683 = vst.msk [vmem:[%s12 + $0x1d8] sm:$0xff] %vm2446, %v5619
  %5684 = vst.msk [vmem:[%s12 + $0x1e0] sm:$0xff] %vm2446, %v5620
  %5685 = vst.msk [vmem:[%s12 + $0x1e8] sm:$0xff] %vm2446, %v5621
  %5686 = vst.msk [vmem:[%s12 + $0x1f0] sm:$0xff] %vm2446, %v5622
  %5687 = vst.msk [vmem:[%s12 + $0x1f8] sm:$0xff] %vm2446, %v5623
  // Predicated region
  $region38: #{yolof_forward.1} parent=0 // pred_check
    _
  $region39: #{yolof_forward.1} parent=0 // pred_check_branch
    %5689 = sbr.rel (0) target = $region41
  $region40: #{yolof_forward.1} parent=0 // pred_region
    _
  $region41: #{yolof_forward.1} parent=0 // pred_fallthru
    _
  // Predicated region
  $region42: #{yolof_forward.1} parent=0 // pred_check
    _
  $region43: #{yolof_forward.1} parent=0 // pred_check_branch
    %5691 = sbr.rel (0) target = $region45
  $region44: #{yolof_forward.1} parent=0 // pred_region
    _
  $region45: #{yolof_forward.1} parent=0 // pred_fallthru
    _
  // Predicated region
  $region46: #{yolof_forward.1} parent=0 // pred_check
    _
  $region47: #{yolof_forward.1} parent=0 // pred_check_branch
    %5693 = sbr.rel (0) target = $region49
  $region48: #{yolof_forward.1} parent=0 // pred_region
    _
  $region49: #{yolof_forward.1} parent=0 // pred_fallthru
    _
  // Predicated region
  $region50: #{yolof_forward.1} parent=0 // pred_check
    _
  $region51: #{yolof_forward.1} parent=0 // pred_check_branch
    %5695 = sbr.rel (0) target = $region53
  $region52: #{yolof_forward.1} parent=0 // pred_region
    _
  $region53: #{yolof_forward.1} parent=0 // pred_fallthru
    _
  // Predicated region
  $region54: #{yolof_forward.1} parent=0 // pred_check
    _
  $region55: #{yolof_forward.1} parent=0 // pred_check_branch
    %5697 = sbr.rel (0) target = $region57
  $region56: #{yolof_forward.1} parent=0 // pred_region
    _
  $region57: #{yolof_forward.1} parent=0 // pred_fallthru
    _
  // Predicated region
  $region58: #{yolof_forward.1} parent=0 // pred_check
    _
  $region59: #{yolof_forward.1} parent=0 // pred_check_branch
    %5699 = sbr.rel (0) target = $region61
  $region60: #{yolof_forward.1} parent=0 // pred_region
    _
  $region61: #{yolof_forward.1} parent=0 // pred_fallthru
    _
  // Predicated region
  $region62: #{yolof_forward.1} parent=0 // pred_check
    _
  $region63: #{yolof_forward.1} parent=0 // pred_check_branch
    %5701 = sbr.rel (0) target = $region65
  $region64: #{yolof_forward.1} parent=0 // pred_region
    _
  $region65: #{yolof_forward.1} parent=0 // pred_fallthru
    _
  // Predicated region
  $region66: #{yolof_forward.1} parent=0 // pred_check
    _
  $region67: #{yolof_forward.1} parent=0 // pred_check_branch
    %5703 = sbr.rel (0) target = $region69
  $region68: #{yolof_forward.1} parent=0 // pred_region
    _
  $region69: #{yolof_forward.1} parent=0 // pred_fallthru
    _

</llo_original>
